<compile_context>
chip_gen: v6e
topology: v6e:2x2x1
jax: 0.10.0
libtpu: 0.0.40
codegen_flags: <defaults>
</compile_context>

<pallas_src>
import random

import jax
import jax.numpy as jnp
from jax.experimental import pallas as pl
from jax.experimental.pallas import tpu as pltpu


# ----------------------------- in-kernel helpers -----------------------------

def _lstm_step(x, h, c, wx, wh, b, H):
    """x:(B,E) h:(B,H) c:(B,H) wx:(E,4H) wh:(H,4H) b:(1,4H). Gate order (i,f,o,g)."""
    gates = (jnp.dot(x, wx, preferred_element_type=jnp.float32)
             + jnp.dot(h, wh, preferred_element_type=jnp.float32)
             + b)
    sig = jax.nn.sigmoid(gates[:, :3 * H])          # one EUP pass over i|f|o
    i = sig[:, 0 * H:1 * H]
    f = sig[:, 1 * H:2 * H]
    o = sig[:, 2 * H:3 * H]
    g = jnp.tanh(gates[:, 3 * H:4 * H])             # one EUP pass over g
    c_new = f * c + i * g
    h_new = o * jnp.tanh(c_new)
    return h_new, c_new


# ----------------------------- fused Pallas kernel -----------------------------

def _seq2seq_kernel(tf_ref,                                   # SMEM (tgt_len-1,) int32
                    x_src_ref, tgt_emb_ref, dec_emb_ref,      # VMEM-resident slabs
                    enc_wx_ref, enc_wh_ref, enc_b_ref,
                    dec_wx_ref, dec_wh_ref, dec_b_ref,
                    ow_ref, ob_ref,
                    out_ref,                                  # (tgt_len, B, V)
                    x_s, h_s, c_s):                           # VMEM scratch (recurrent state)
    B, H = h_s.shape
    V = ow_ref.shape[1]
    src_len = x_src_ref.shape[0]
    tgt_len = tgt_emb_ref.shape[0]

    # outputs[0] stays zero, exactly like the PyTorch reference.
    out_ref[0] = jnp.zeros((B, V), jnp.float32)
    h_s[...] = jnp.zeros_like(h_s)
    c_s[...] = jnp.zeros_like(c_s)

    # -------- encoder phase: in-kernel loop over source time --------
    def enc_body(t, carry):
        h_new, c_new = _lstm_step(x_src_ref[t], h_s[...], c_s[...],
                                  enc_wx_ref[...], enc_wh_ref[...], enc_b_ref[...], H)
        h_s[...] = h_new
        c_s[...] = c_new
        return carry

    jax.lax.fori_loop(0, src_len, enc_body, 0, unroll=True)

    # -------- decoder phase: LSTM cell + projection + argmax + TF select --------
    x_s[...] = tgt_emb_ref[0]

    def dec_body(s, carry):
        h_new, c_new = _lstm_step(x_s[...], h_s[...], c_s[...],
                                  dec_wx_ref[...], dec_wh_ref[...], dec_b_ref[...], H)
        h_s[...] = h_new
        c_s[...] = c_new

        logits = (jnp.dot(h_new, ow_ref[...], preferred_element_type=jnp.float32)
                  + ob_ref[...])                              # (B, V) f32
        out_ref[s + 1] = logits

        # Teacher forcing: just copy the ground-truth embedding; greedy path skipped.
        @pl.when(tf_ref[s] == 1)
        def _():
            x_s[...] = tgt_emb_ref[s + 1]

        # Greedy path: first-max argmax over lanes, embedding gather as one-hot matmul.
        @pl.when(tf_ref[s] == 0)
        def _():
            lane = jax.lax.broadcasted_iota(jnp.int32, logits.shape, 1)
            maxv = jnp.max(logits, axis=1, keepdims=True)
            idx = jnp.min(jnp.where(logits == maxv, lane, V), axis=1, keepdims=True)
            onehot = (lane == idx).astype(jnp.float32)        # (B, V)
            x_s[...] = jnp.dot(onehot, dec_emb_ref[...],
                               preferred_element_type=jnp.float32)
        return carry

    jax.lax.fori_loop(0, tgt_len - 1, dec_body, 0, unroll=True)


# ----------------------------- pallas_call wrapper -----------------------------

def seq2seq_pallas(params, x_src, tgt_emb, tf_mask):
    """x_src:(src_len,B,E) tgt_emb:(tgt_len,B,E) -> logits (tgt_len, B, V)."""
    src_len, B, E = x_src.shape
    tgt_len = tgt_emb.shape[0]
    H = params["out_w"].shape[0]
    V = params["out_w"].shape[1]

    vmem = lambda: pl.BlockSpec(memory_space=pltpu.MemorySpace.VMEM)
    return pl.pallas_call(
        _seq2seq_kernel,
        out_shape=jax.ShapeDtypeStruct((tgt_len, B, V), jnp.float32),
        in_specs=[pl.BlockSpec(memory_space=pltpu.MemorySpace.SMEM)]   # tf_mask
                 + [vmem() for _ in range(11)],
        out_specs=vmem(),
        scratch_shapes=[pltpu.VMEM((B, E), jnp.float32),   # x_s
                        pltpu.VMEM((B, H), jnp.float32),   # h_s
                        pltpu.VMEM((B, H), jnp.float32)],  # c_s
    )(tf_mask, x_src, tgt_emb, params["dec_emb"],
      params["enc_wx"], params["enc_wh"], params["enc_b"],
      params["dec_wx"], params["dec_wh"], params["dec_b"],
      params["out_w"], params["out_b"])


# ----------------------------- model glue -----------------------------

def init_params(key, src_vocab, tgt_vocab, emb_dim, hidden_dim):
    ks = jax.random.split(key, 10)
    s = 0.1
    E, H = emb_dim, hidden_dim
    return {
        # split weights: gates = x @ Wx + h @ Wh + b, gate column order (i, f, o, g)
        "enc_emb": s * jax.random.normal(ks[0], (src_vocab, E), jnp.float32),
        "enc_wx":  s * jax.random.normal(ks[1], (E, 4 * H), jnp.float32),
        "enc_wh":  s * jax.random.normal(ks[2], (H, 4 * H), jnp.float32),
        "enc_b":   s * jax.random.normal(ks[3], (1, 4 * H), jnp.float32),
        "dec_emb": s * jax.random.normal(ks[4], (tgt_vocab, E), jnp.float32),
        "dec_wx":  s * jax.random.normal(ks[5], (E, 4 * H), jnp.float32),
        "dec_wh":  s * jax.random.normal(ks[6], (H, 4 * H), jnp.float32),
        "dec_b":   s * jax.random.normal(ks[7], (1, 4 * H), jnp.float32),
        "out_w":   s * jax.random.normal(ks[8], (H, tgt_vocab), jnp.float32),
        "out_b":   s * jax.random.normal(ks[9], (1, tgt_vocab), jnp.float32),
    }


@jax.jit
def seq2seq_forward(params, source, target, tf_mask):
    """Mirrors Seq2Seq.forward; returns (target_len, B, target_vocab)."""
    x_src = jnp.take(params["enc_emb"], source, axis=0)      # (src_len, B, E)
    tgt_emb = jnp.take(params["dec_emb"], target, axis=0)    # (tgt_len, B, E)
    return seq2seq_pallas(params, x_src, tgt_emb, tf_mask)


# ----------------------------- pure-JAX reference (correctness check) ---------

def seq2seq_reference(params, source, target, tf_mask):
    src_len, B = source.shape
    tgt_len, _ = target.shape
    H = params["out_w"].shape[0]
    V = params["out_w"].shape[1]

    def cell(x_emb, h, c, wx, wh, b):
        gates = x_emb @ wx + h @ wh + b
        i = jax.nn.sigmoid(gates[:, :H])
        f = jax.nn.sigmoid(gates[:, H:2 * H])
        o = jax.nn.sigmoid(gates[:, 2 * H:3 * H])
        g = jnp.tanh(gates[:, 3 * H:])
        c = f * c + i * g
        return o * jnp.tanh(c), c

    h = jnp.zeros((B, H), jnp.float32)
    c = jnp.zeros((B, H), jnp.float32)
    for t in range(src_len):
        h, c = cell(params["enc_emb"][source[t]], h, c,
                    params["enc_wx"], params["enc_wh"], params["enc_b"])

    outs = [jnp.zeros((B, V), jnp.float32)]
    x = target[0]
    for t in range(1, tgt_len):
        h, c = cell(params["dec_emb"][x], h, c,
                    params["dec_wx"], params["dec_wh"], params["dec_b"])
        logits = h @ params["out_w"] + params["out_b"]
        outs.append(logits)
        guess = jnp.argmax(logits, axis=1).astype(target.dtype)
        x = jnp.where(tf_mask[t - 1] == 1, target[t], guess)
    return jnp.stack(outs, axis=0)


# ----------------------------- main -----------------------------

if __name__ == "__main__":
    # small, TPU-friendly shapes (4*HIDDEN = 128 and TGT_VOCAB = 128 are lane-aligned)
    SRC_VOCAB = 64
    TGT_VOCAB = 128
    EMB = 32
    HIDDEN = 32
    SRC_LEN = 8
    TGT_LEN = 8
    BATCH = 8
    TEACHER_RATIO = 0.5

    random.seed(0)                       # deterministic teacher-forcing coin flips
    key = jax.random.PRNGKey(0)
    kp, ks, kt = jax.random.split(key, 3)

    params = init_params(kp, SRC_VOCAB, TGT_VOCAB, EMB, HIDDEN)
    source = jax.random.randint(ks, (SRC_LEN, BATCH), 0, SRC_VOCAB, dtype=jnp.int32)
    target = jax.random.randint(kt, (TGT_LEN, BATCH), 0, TGT_VOCAB, dtype=jnp.int32)

    tf_mask = jnp.asarray([1 if random.random() < TEACHER_RATIO else 0
                           for _ in range(1, TGT_LEN)], dtype=jnp.int32)

    outputs = seq2seq_forward(params, source, target, tf_mask)
    outputs = jax.block_until_ready(outputs)

    assert outputs.shape == (TGT_LEN, BATCH, TGT_VOCAB)
    assert bool(jnp.all(jnp.isfinite(outputs)))
    assert bool(jnp.all(outputs[0] == 0.0))

    ref = seq2seq_reference(params, source, target, tf_mask)
    assert bool(jnp.allclose(outputs, ref, atol=2e-4, rtol=2e-4))

    print("KERNEL_OK")
</pallas_src>

<mosaic_0001>
module attributes {stable_mosaic.version = 11 : i64} {
  func.func @_seq2seq_kernel(%arg0: memref<7xi32, #tpu.memory_space<smem>>, %arg1: memref<8x8x32xf32, #tpu.memory_space<vmem>>, %arg2: memref<8x8x32xf32, #tpu.memory_space<vmem>>, %arg3: memref<128x32xf32, #tpu.memory_space<vmem>>, %arg4: memref<32x128xf32, #tpu.memory_space<vmem>>, %arg5: memref<32x128xf32, #tpu.memory_space<vmem>>, %arg6: memref<1x128xf32, #tpu.memory_space<vmem>>, %arg7: memref<32x128xf32, #tpu.memory_space<vmem>>, %arg8: memref<32x128xf32, #tpu.memory_space<vmem>>, %arg9: memref<1x128xf32, #tpu.memory_space<vmem>>, %arg10: memref<32x128xf32, #tpu.memory_space<vmem>>, %arg11: memref<1x128xf32, #tpu.memory_space<vmem>>, %arg12: memref<8x8x128xf32, #tpu.memory_space<vmem>>, %arg13: memref<8x32xf32, #tpu.memory_space<vmem>>, %arg14: memref<8x32xf32, #tpu.memory_space<vmem>>, %arg15: memref<8x32xf32, #tpu.memory_space<vmem>>) attributes {dimension_semantics = [], scalar_prefetch = 0 : i64, scratch_operands = 3 : i64, tpu.core_type = #tpu.core_type<tc>} {
    %cst = arith.constant 0.000000e+00 : f32
    %0 = vector.broadcast %cst : f32 to vector<8x128xf32>
    %c0 = arith.constant 0 : index
    %c0_0 = arith.constant 0 : index
    %c0_1 = arith.constant 0 : index
    %1 = vector.load %arg12[%c0, %c0_0, %c0_1] : memref<8x8x128xf32, #tpu.memory_space<vmem>>, vector<1x8x128xf32>
    %2 = vector.shape_cast %1 : vector<1x8x128xf32> to vector<8x128xf32>
    %3 = vector.shape_cast %0 : vector<8x128xf32> to vector<1x8x128xf32>
    tpu.vector_store %arg12[%c0, %c0_0, %c0_1], %3 {strides = array<i32>} : memref<8x8x128xf32, #tpu.memory_space<vmem>>, vector<1x8x128xf32>,
    %cst_2 = arith.constant 0.000000e+00 : f32
    %4 = vector.broadcast %cst_2 : f32 to vector<8x32xf32>
    %c0_3 = arith.constant 0 : index
    %c0_4 = arith.constant 0 : index
    %5 = vector.load %arg14[%c0_3, %c0_4] : memref<8x32xf32, #tpu.memory_space<vmem>>, vector<8x32xf32>
    tpu.vector_store %arg14[%c0_3, %c0_4], %4 {strides = array<i32>} : memref<8x32xf32, #tpu.memory_space<vmem>>, vector<8x32xf32>,
    %cst_5 = arith.constant 0.000000e+00 : f32
    %6 = vector.broadcast %cst_5 : f32 to vector<8x32xf32>
    %c0_6 = arith.constant 0 : index
    %c0_7 = arith.constant 0 : index
    %7 = vector.load %arg15[%c0_6, %c0_7] : memref<8x32xf32, #tpu.memory_space<vmem>>, vector<8x32xf32>
    tpu.vector_store %arg15[%c0_6, %c0_7], %6 {strides = array<i32>} : memref<8x32xf32, #tpu.memory_space<vmem>>, vector<8x32xf32>,
    %c0_i32 = arith.constant 0 : i32
    %8 = arith.index_cast %c0_i32 : i32 to index
    %c0_8 = arith.constant 0 : index
    %c0_9 = arith.constant 0 : index
    %9 = vector.load %arg1[%8, %c0_8, %c0_9] : memref<8x8x32xf32, #tpu.memory_space<vmem>>, vector<1x8x32xf32>
    %10 = vector.shape_cast %9 : vector<1x8x32xf32> to vector<8x32xf32>
    %c0_10 = arith.constant 0 : index
    %c0_11 = arith.constant 0 : index
    %11 = vector.load %arg14[%c0_10, %c0_11] : memref<8x32xf32, #tpu.memory_space<vmem>>, vector<8x32xf32>
    %c0_12 = arith.constant 0 : index
    %c0_13 = arith.constant 0 : index
    %12 = vector.load %arg15[%c0_12, %c0_13] : memref<8x32xf32, #tpu.memory_space<vmem>>, vector<8x32xf32>
    %c0_14 = arith.constant 0 : index
    %c0_15 = arith.constant 0 : index
    %13 = vector.load %arg4[%c0_14, %c0_15] : memref<32x128xf32, #tpu.memory_space<vmem>>, vector<32x128xf32>
    %c0_16 = arith.constant 0 : index
    %c0_17 = arith.constant 0 : index
    %14 = vector.load %arg5[%c0_16, %c0_17] : memref<32x128xf32, #tpu.memory_space<vmem>>, vector<32x128xf32>
    %c0_18 = arith.constant 0 : index
    %c0_19 = arith.constant 0 : index
    %15 = vector.load %arg6[%c0_18, %c0_19] : memref<1x128xf32, #tpu.memory_space<vmem>>, vector<1x128xf32>
    %cst_20 = arith.constant dense<0.000000e+00> : vector<8x128xf32>
    %16 = tpu.matmul %10, %13, %cst_20 {dimension_numbers = #tpu.dot_dimension_numbers<[1], [0], [0], [1], [0, 0, 1, 1], [], []>} : vector<8x32xf32>, vector<32x128xf32>, vector<8x128xf32> -> vector<8x128xf32>
    %cst_21 = arith.constant dense<0.000000e+00> : vector<8x128xf32>
    %17 = tpu.matmul %11, %14, %cst_21 {dimension_numbers = #tpu.dot_dimension_numbers<[1], [0], [0], [1], [0, 0, 1, 1], [], []>} : vector<8x32xf32>, vector<32x128xf32>, vector<8x128xf32> -> vector<8x128xf32>
    %18 = arith.addf %16, %17 : vector<8x128xf32>
    %19 = vector.broadcast %15 : vector<1x128xf32> to vector<8x128xf32>
    %20 = arith.addf %18, %19 : vector<8x128xf32>
    %21 = vector.extract_strided_slice %20 {offsets = [0, 0], sizes = [8, 96], strides = [1, 1]} : vector<8x128xf32> to vector<8x96xf32>
    %22 = arith.negf %21 : vector<8x96xf32>
    %23 = math.exp %22 : vector<8x96xf32>
    %cst_22 = arith.constant 1.000000e+00 : f32
    %24 = vector.broadcast %cst_22 : f32 to vector<8x96xf32>
    %25 = arith.addf %24, %23 : vector<8x96xf32>
    %26 = arith.divf %24, %25 : vector<8x96xf32>
    %27 = vector.extract_strided_slice %26 {offsets = [0, 0], sizes = [8, 32], strides = [1, 1]} : vector<8x96xf32> to vector<8x32xf32>
    %28 = vector.extract_strided_slice %26 {offsets = [0, 32], sizes = [8, 32], strides = [1, 1]} : vector<8x96xf32> to vector<8x32xf32>
    %29 = vector.extract_strided_slice %26 {offsets = [0, 64], sizes = [8, 32], strides = [1, 1]} : vector<8x96xf32> to vector<8x32xf32>
    %30 = vector.extract_strided_slice %20 {offsets = [0, 96], sizes = [8, 32], strides = [1, 1]} : vector<8x128xf32> to vector<8x32xf32>
    %31 = math.tanh %30 : vector<8x32xf32>
    %32 = arith.mulf %28, %12 : vector<8x32xf32>
    %33 = arith.mulf %27, %31 : vector<8x32xf32>
    %34 = arith.addf %32, %33 : vector<8x32xf32>
    %35 = math.tanh %34 : vector<8x32xf32>
    %36 = arith.mulf %29, %35 : vector<8x32xf32>
    %c0_23 = arith.constant 0 : index
    %c0_24 = arith.constant 0 : index
    %37 = vector.load %arg14[%c0_23, %c0_24] : memref<8x32xf32, #tpu.memory_space<vmem>>, vector<8x32xf32>
    tpu.vector_store %arg14[%c0_23, %c0_24], %36 {strides = array<i32>} : memref<8x32xf32, #tpu.memory_space<vmem>>, vector<8x32xf32>,
    %c0_25 = arith.constant 0 : index
    %c0_26 = arith.constant 0 : index
    %38 = vector.load %arg15[%c0_25, %c0_26] : memref<8x32xf32, #tpu.memory_space<vmem>>, vector<8x32xf32>
    tpu.vector_store %arg15[%c0_25, %c0_26], %34 {strides = array<i32>} : memref<8x32xf32, #tpu.memory_space<vmem>>, vector<8x32xf32>,
    %c1_i32 = arith.constant 1 : i32
    %39 = arith.index_cast %c1_i32 : i32 to index
    %c0_27 = arith.constant 0 : index
    %c0_28 = arith.constant 0 : index
    %40 = vector.load %arg1[%39, %c0_27, %c0_28] : memref<8x8x32xf32, #tpu.memory_space<vmem>>, vector<1x8x32xf32>
    %41 = vector.shape_cast %40 : vector<1x8x32xf32> to vector<8x32xf32>
    %c0_29 = arith.constant 0 : index
    %c0_30 = arith.constant 0 : index
    %42 = vector.load %arg14[%c0_29, %c0_30] : memref<8x32xf32, #tpu.memory_space<vmem>>, vector<8x32xf32>
    %c0_31 = arith.constant 0 : index
    %c0_32 = arith.constant 0 : index
    %43 = vector.load %arg15[%c0_31, %c0_32] : memref<8x32xf32, #tpu.memory_space<vmem>>, vector<8x32xf32>
    %c0_33 = arith.constant 0 : index
    %c0_34 = arith.constant 0 : index
    %44 = vector.load %arg4[%c0_33, %c0_34] : memref<32x128xf32, #tpu.memory_space<vmem>>, vector<32x128xf32>
    %c0_35 = arith.constant 0 : index
    %c0_36 = arith.constant 0 : index
    %45 = vector.load %arg5[%c0_35, %c0_36] : memref<32x128xf32, #tpu.memory_space<vmem>>, vector<32x128xf32>
    %c0_37 = arith.constant 0 : index
    %c0_38 = arith.constant 0 : index
    %46 = vector.load %arg6[%c0_37, %c0_38] : memref<1x128xf32, #tpu.memory_space<vmem>>, vector<1x128xf32>
    %cst_39 = arith.constant dense<0.000000e+00> : vector<8x128xf32>
    %47 = tpu.matmul %41, %44, %cst_39 {dimension_numbers = #tpu.dot_dimension_numbers<[1], [0], [0], [1], [0, 0, 1, 1], [], []>} : vector<8x32xf32>, vector<32x128xf32>, vector<8x128xf32> -> vector<8x128xf32>
    %cst_40 = arith.constant dense<0.000000e+00> : vector<8x128xf32>
    %48 = tpu.matmul %42, %45, %cst_40 {dimension_numbers = #tpu.dot_dimension_numbers<[1], [0], [0], [1], [0, 0, 1, 1], [], []>} : vector<8x32xf32>, vector<32x128xf32>, vector<8x128xf32> -> vector<8x128xf32>
    %49 = arith.addf %47, %48 : vector<8x128xf32>
    %50 = vector.broadcast %46 : vector<1x128xf32> to vector<8x128xf32>
    %51 = arith.addf %49, %50 : vector<8x128xf32>
    %52 = vector.extract_strided_slice %51 {offsets = [0, 0], sizes = [8, 96], strides = [1, 1]} : vector<8x128xf32> to vector<8x96xf32>
    %53 = arith.negf %52 : vector<8x96xf32>
    %54 = math.exp %53 : vector<8x96xf32>
    %cst_41 = arith.constant 1.000000e+00 : f32
    %55 = vector.broadcast %cst_41 : f32 to vector<8x96xf32>
    %56 = arith.addf %55, %54 : vector<8x96xf32>
    %57 = arith.divf %55, %56 : vector<8x96xf32>
    %58 = vector.extract_strided_slice %57 {offsets = [0, 0], sizes = [8, 32], strides = [1, 1]} : vector<8x96xf32> to vector<8x32xf32>
    %59 = vector.extract_strided_slice %57 {offsets = [0, 32], sizes = [8, 32], strides = [1, 1]} : vector<8x96xf32> to vector<8x32xf32>
    %60 = vector.extract_strided_slice %57 {offsets = [0, 64], sizes = [8, 32], strides = [1, 1]} : vector<8x96xf32> to vector<8x32xf32>
    %61 = vector.extract_strided_slice %51 {offsets = [0, 96], sizes = [8, 32], strides = [1, 1]} : vector<8x128xf32> to vector<8x32xf32>
    %62 = math.tanh %61 : vector<8x32xf32>
    %63 = arith.mulf %59, %43 : vector<8x32xf32>
    %64 = arith.mulf %58, %62 : vector<8x32xf32>
    %65 = arith.addf %63, %64 : vector<8x32xf32>
    %66 = math.tanh %65 : vector<8x32xf32>
    %67 = arith.mulf %60, %66 : vector<8x32xf32>
    %c0_42 = arith.constant 0 : index
    %c0_43 = arith.constant 0 : index
    %68 = vector.load %arg14[%c0_42, %c0_43] : memref<8x32xf32, #tpu.memory_space<vmem>>, vector<8x32xf32>
    tpu.vector_store %arg14[%c0_42, %c0_43], %67 {strides = array<i32>} : memref<8x32xf32, #tpu.memory_space<vmem>>, vector<8x32xf32>,
    %c0_44 = arith.constant 0 : index
    %c0_45 = arith.constant 0 : index
    %69 = vector.load %arg15[%c0_44, %c0_45] : memref<8x32xf32, #tpu.memory_space<vmem>>, vector<8x32xf32>
    tpu.vector_store %arg15[%c0_44, %c0_45], %65 {strides = array<i32>} : memref<8x32xf32, #tpu.memory_space<vmem>>, vector<8x32xf32>,
    %c2_i32 = arith.constant 2 : i32
    %70 = arith.index_cast %c2_i32 : i32 to index
    %c0_46 = arith.constant 0 : index
    %c0_47 = arith.constant 0 : index
    %71 = vector.load %arg1[%70, %c0_46, %c0_47] : memref<8x8x32xf32, #tpu.memory_space<vmem>>, vector<1x8x32xf32>
    %72 = vector.shape_cast %71 : vector<1x8x32xf32> to vector<8x32xf32>
    %c0_48 = arith.constant 0 : index
    %c0_49 = arith.constant 0 : index
    %73 = vector.load %arg14[%c0_48, %c0_49] : memref<8x32xf32, #tpu.memory_space<vmem>>, vector<8x32xf32>
    %c0_50 = arith.constant 0 : index
    %c0_51 = arith.constant 0 : index
    %74 = vector.load %arg15[%c0_50, %c0_51] : memref<8x32xf32, #tpu.memory_space<vmem>>, vector<8x32xf32>
    %c0_52 = arith.constant 0 : index
    %c0_53 = arith.constant 0 : index
    %75 = vector.load %arg4[%c0_52, %c0_53] : memref<32x128xf32, #tpu.memory_space<vmem>>, vector<32x128xf32>
    %c0_54 = arith.constant 0 : index
    %c0_55 = arith.constant 0 : index
    %76 = vector.load %arg5[%c0_54, %c0_55] : memref<32x128xf32, #tpu.memory_space<vmem>>, vector<32x128xf32>
    %c0_56 = arith.constant 0 : index
    %c0_57 = arith.constant 0 : index
    %77 = vector.load %arg6[%c0_56, %c0_57] : memref<1x128xf32, #tpu.memory_space<vmem>>, vector<1x128xf32>
    %cst_58 = arith.constant dense<0.000000e+00> : vector<8x128xf32>
    %78 = tpu.matmul %72, %75, %cst_58 {dimension_numbers = #tpu.dot_dimension_numbers<[1], [0], [0], [1], [0, 0, 1, 1], [], []>} : vector<8x32xf32>, vector<32x128xf32>, vector<8x128xf32> -> vector<8x128xf32>
    %cst_59 = arith.constant dense<0.000000e+00> : vector<8x128xf32>
    %79 = tpu.matmul %73, %76, %cst_59 {dimension_numbers = #tpu.dot_dimension_numbers<[1], [0], [0], [1], [0, 0, 1, 1], [], []>} : vector<8x32xf32>, vector<32x128xf32>, vector<8x128xf32> -> vector<8x128xf32>
    %80 = arith.addf %78, %79 : vector<8x128xf32>
    %81 = vector.broadcast %77 : vector<1x128xf32> to vector<8x128xf32>
    %82 = arith.addf %80, %81 : vector<8x128xf32>
    %83 = vector.extract_strided_slice %82 {offsets = [0, 0], sizes = [8, 96], strides = [1, 1]} : vector<8x128xf32> to vector<8x96xf32>
    %84 = arith.negf %83 : vector<8x96xf32>
    %85 = math.exp %84 : vector<8x96xf32>
    %cst_60 = arith.constant 1.000000e+00 : f32
    %86 = vector.broadcast %cst_60 : f32 to vector<8x96xf32>
    %87 = arith.addf %86, %85 : vector<8x96xf32>
    %88 = arith.divf %86, %87 : vector<8x96xf32>
    %89 = vector.extract_strided_slice %88 {offsets = [0, 0], sizes = [8, 32], strides = [1, 1]} : vector<8x96xf32> to vector<8x32xf32>
    %90 = vector.extract_strided_slice %88 {offsets = [0, 32], sizes = [8, 32], strides = [1, 1]} : vector<8x96xf32> to vector<8x32xf32>
    %91 = vector.extract_strided_slice %88 {offsets = [0, 64], sizes = [8, 32], strides = [1, 1]} : vector<8x96xf32> to vector<8x32xf32>
    %92 = vector.extract_strided_slice %82 {offsets = [0, 96], sizes = [8, 32], strides = [1, 1]} : vector<8x128xf32> to vector<8x32xf32>
    %93 = math.tanh %92 : vector<8x32xf32>
    %94 = arith.mulf %90, %74 : vector<8x32xf32>
    %95 = arith.mulf %89, %93 : vector<8x32xf32>
    %96 = arith.addf %94, %95 : vector<8x32xf32>
    %97 = math.tanh %96 : vector<8x32xf32>
    %98 = arith.mulf %91, %97 : vector<8x32xf32>
    %c0_61 = arith.constant 0 : index
    %c0_62 = arith.constant 0 : index
    %99 = vector.load %arg14[%c0_61, %c0_62] : memref<8x32xf32, #tpu.memory_space<vmem>>, vector<8x32xf32>
    tpu.vector_store %arg14[%c0_61, %c0_62], %98 {strides = array<i32>} : memref<8x32xf32, #tpu.memory_space<vmem>>, vector<8x32xf32>,
    %c0_63 = arith.constant 0 : index
    %c0_64 = arith.constant 0 : index
    %100 = vector.load %arg15[%c0_63, %c0_64] : memref<8x32xf32, #tpu.memory_space<vmem>>, vector<8x32xf32>
    tpu.vector_store %arg15[%c0_63, %c0_64], %96 {strides = array<i32>} : memref<8x32xf32, #tpu.memory_space<vmem>>, vector<8x32xf32>,
    %c3_i32 = arith.constant 3 : i32
    %101 = arith.index_cast %c3_i32 : i32 to index
    %c0_65 = arith.constant 0 : index
    %c0_66 = arith.constant 0 : index
    %102 = vector.load %arg1[%101, %c0_65, %c0_66] : memref<8x8x32xf32, #tpu.memory_space<vmem>>, vector<1x8x32xf32>
    %103 = vector.shape_cast %102 : vector<1x8x32xf32> to vector<8x32xf32>
    %c0_67 = arith.constant 0 : index
    %c0_68 = arith.constant 0 : index
    %104 = vector.load %arg14[%c0_67, %c0_68] : memref<8x32xf32, #tpu.memory_space<vmem>>, vector<8x32xf32>
    %c0_69 = arith.constant 0 : index
    %c0_70 = arith.constant 0 : index
    %105 = vector.load %arg15[%c0_69, %c0_70] : memref<8x32xf32, #tpu.memory_space<vmem>>, vector<8x32xf32>
    %c0_71 = arith.constant 0 : index
    %c0_72 = arith.constant 0 : index
    %106 = vector.load %arg4[%c0_71, %c0_72] : memref<32x128xf32, #tpu.memory_space<vmem>>, vector<32x128xf32>
    %c0_73 = arith.constant 0 : index
    %c0_74 = arith.constant 0 : index
    %107 = vector.load %arg5[%c0_73, %c0_74] : memref<32x128xf32, #tpu.memory_space<vmem>>, vector<32x128xf32>
    %c0_75 = arith.constant 0 : index
    %c0_76 = arith.constant 0 : index
    %108 = vector.load %arg6[%c0_75, %c0_76] : memref<1x128xf32, #tpu.memory_space<vmem>>, vector<1x128xf32>
    %cst_77 = arith.constant dense<0.000000e+00> : vector<8x128xf32>
    %109 = tpu.matmul %103, %106, %cst_77 {dimension_numbers = #tpu.dot_dimension_numbers<[1], [0], [0], [1], [0, 0, 1, 1], [], []>} : vector<8x32xf32>, vector<32x128xf32>, vector<8x128xf32> -> vector<8x128xf32>
    %cst_78 = arith.constant dense<0.000000e+00> : vector<8x128xf32>
    %110 = tpu.matmul %104, %107, %cst_78 {dimension_numbers = #tpu.dot_dimension_numbers<[1], [0], [0], [1], [0, 0, 1, 1], [], []>} : vector<8x32xf32>, vector<32x128xf32>, vector<8x128xf32> -> vector<8x128xf32>
    %111 = arith.addf %109, %110 : vector<8x128xf32>
    %112 = vector.broadcast %108 : vector<1x128xf32> to vector<8x128xf32>
    %113 = arith.addf %111, %112 : vector<8x128xf32>
    %114 = vector.extract_strided_slice %113 {offsets = [0, 0], sizes = [8, 96], strides = [1, 1]} : vector<8x128xf32> to vector<8x96xf32>
    %115 = arith.negf %114 : vector<8x96xf32>
    %116 = math.exp %115 : vector<8x96xf32>
    %cst_79 = arith.constant 1.000000e+00 : f32
    %117 = vector.broadcast %cst_79 : f32 to vector<8x96xf32>
    %118 = arith.addf %117, %116 : vector<8x96xf32>
    %119 = arith.divf %117, %118 : vector<8x96xf32>
    %120 = vector.extract_strided_slice %119 {offsets = [0, 0], sizes = [8, 32], strides = [1, 1]} : vector<8x96xf32> to vector<8x32xf32>
    %121 = vector.extract_strided_slice %119 {offsets = [0, 32], sizes = [8, 32], strides = [1, 1]} : vector<8x96xf32> to vector<8x32xf32>
    %122 = vector.extract_strided_slice %119 {offsets = [0, 64], sizes = [8, 32], strides = [1, 1]} : vector<8x96xf32> to vector<8x32xf32>
    %123 = vector.extract_strided_slice %113 {offsets = [0, 96], sizes = [8, 32], strides = [1, 1]} : vector<8x128xf32> to vector<8x32xf32>
    %124 = math.tanh %123 : vector<8x32xf32>
    %125 = arith.mulf %121, %105 : vector<8x32xf32>
    %126 = arith.mulf %120, %124 : vector<8x32xf32>
    %127 = arith.addf %125, %126 : vector<8x32xf32>
    %128 = math.tanh %127 : vector<8x32xf32>
    %129 = arith.mulf %122, %128 : vector<8x32xf32>
    %c0_80 = arith.constant 0 : index
    %c0_81 = arith.constant 0 : index
    %130 = vector.load %arg14[%c0_80, %c0_81] : memref<8x32xf32, #tpu.memory_space<vmem>>, vector<8x32xf32>
    tpu.vector_store %arg14[%c0_80, %c0_81], %129 {strides = array<i32>} : memref<8x32xf32, #tpu.memory_space<vmem>>, vector<8x32xf32>,
    %c0_82 = arith.constant 0 : index
    %c0_83 = arith.constant 0 : index
    %131 = vector.load %arg15[%c0_82, %c0_83] : memref<8x32xf32, #tpu.memory_space<vmem>>, vector<8x32xf32>
    tpu.vector_store %arg15[%c0_82, %c0_83], %127 {strides = array<i32>} : memref<8x32xf32, #tpu.memory_space<vmem>>, vector<8x32xf32>,
    %c4_i32 = arith.constant 4 : i32
    %132 = arith.index_cast %c4_i32 : i32 to index
    %c0_84 = arith.constant 0 : index
    %c0_85 = arith.constant 0 : index
    %133 = vector.load %arg1[%132, %c0_84, %c0_85] : memref<8x8x32xf32, #tpu.memory_space<vmem>>, vector<1x8x32xf32>
    %134 = vector.shape_cast %133 : vector<1x8x32xf32> to vector<8x32xf32>
    %c0_86 = arith.constant 0 : index
    %c0_87 = arith.constant 0 : index
    %135 = vector.load %arg14[%c0_86, %c0_87] : memref<8x32xf32, #tpu.memory_space<vmem>>, vector<8x32xf32>
    %c0_88 = arith.constant 0 : index
    %c0_89 = arith.constant 0 : index
    %136 = vector.load %arg15[%c0_88, %c0_89] : memref<8x32xf32, #tpu.memory_space<vmem>>, vector<8x32xf32>
    %c0_90 = arith.constant 0 : index
    %c0_91 = arith.constant 0 : index
    %137 = vector.load %arg4[%c0_90, %c0_91] : memref<32x128xf32, #tpu.memory_space<vmem>>, vector<32x128xf32>
    %c0_92 = arith.constant 0 : index
    %c0_93 = arith.constant 0 : index
    %138 = vector.load %arg5[%c0_92, %c0_93] : memref<32x128xf32, #tpu.memory_space<vmem>>, vector<32x128xf32>
    %c0_94 = arith.constant 0 : index
    %c0_95 = arith.constant 0 : index
    %139 = vector.load %arg6[%c0_94, %c0_95] : memref<1x128xf32, #tpu.memory_space<vmem>>, vector<1x128xf32>
    %cst_96 = arith.constant dense<0.000000e+00> : vector<8x128xf32>
    %140 = tpu.matmul %134, %137, %cst_96 {dimension_numbers = #tpu.dot_dimension_numbers<[1], [0], [0], [1], [0, 0, 1, 1], [], []>} : vector<8x32xf32>, vector<32x128xf32>, vector<8x128xf32> -> vector<8x128xf32>
    %cst_97 = arith.constant dense<0.000000e+00> : vector<8x128xf32>
    %141 = tpu.matmul %135, %138, %cst_97 {dimension_numbers = #tpu.dot_dimension_numbers<[1], [0], [0], [1], [0, 0, 1, 1], [], []>} : vector<8x32xf32>, vector<32x128xf32>, vector<8x128xf32> -> vector<8x128xf32>
    %142 = arith.addf %140, %141 : vector<8x128xf32>
    %143 = vector.broadcast %139 : vector<1x128xf32> to vector<8x128xf32>
    %144 = arith.addf %142, %143 : vector<8x128xf32>
    %145 = vector.extract_strided_slice %144 {offsets = [0, 0], sizes = [8, 96], strides = [1, 1]} : vector<8x128xf32> to vector<8x96xf32>
    %146 = arith.negf %145 : vector<8x96xf32>
    %147 = math.exp %146 : vector<8x96xf32>
    %cst_98 = arith.constant 1.000000e+00 : f32
    %148 = vector.broadcast %cst_98 : f32 to vector<8x96xf32>
    %149 = arith.addf %148, %147 : vector<8x96xf32>
    %150 = arith.divf %148, %149 : vector<8x96xf32>
    %151 = vector.extract_strided_slice %150 {offsets = [0, 0], sizes = [8, 32], strides = [1, 1]} : vector<8x96xf32> to vector<8x32xf32>
    %152 = vector.extract_strided_slice %150 {offsets = [0, 32], sizes = [8, 32], strides = [1, 1]} : vector<8x96xf32> to vector<8x32xf32>
    %153 = vector.extract_strided_slice %150 {offsets = [0, 64], sizes = [8, 32], strides = [1, 1]} : vector<8x96xf32> to vector<8x32xf32>
    %154 = vector.extract_strided_slice %144 {offsets = [0, 96], sizes = [8, 32], strides = [1, 1]} : vector<8x128xf32> to vector<8x32xf32>
    %155 = math.tanh %154 : vector<8x32xf32>
    %156 = arith.mulf %152, %136 : vector<8x32xf32>
    %157 = arith.mulf %151, %155 : vector<8x32xf32>
    %158 = arith.addf %156, %157 : vector<8x32xf32>
    %159 = math.tanh %158 : vector<8x32xf32>
    %160 = arith.mulf %153, %159 : vector<8x32xf32>
    %c0_99 = arith.constant 0 : index
    %c0_100 = arith.constant 0 : index
    %161 = vector.load %arg14[%c0_99, %c0_100] : memref<8x32xf32, #tpu.memory_space<vmem>>, vector<8x32xf32>
    tpu.vector_store %arg14[%c0_99, %c0_100], %160 {strides = array<i32>} : memref<8x32xf32, #tpu.memory_space<vmem>>, vector<8x32xf32>,
    %c0_101 = arith.constant 0 : index
    %c0_102 = arith.constant 0 : index
    %162 = vector.load %arg15[%c0_101, %c0_102] : memref<8x32xf32, #tpu.memory_space<vmem>>, vector<8x32xf32>
    tpu.vector_store %arg15[%c0_101, %c0_102], %158 {strides = array<i32>} : memref<8x32xf32, #tpu.memory_space<vmem>>, vector<8x32xf32>,
    %c5_i32 = arith.constant 5 : i32
    %163 = arith.index_cast %c5_i32 : i32 to index
    %c0_103 = arith.constant 0 : index
    %c0_104 = arith.constant 0 : index
    %164 = vector.load %arg1[%163, %c0_103, %c0_104] : memref<8x8x32xf32, #tpu.memory_space<vmem>>, vector<1x8x32xf32>
    %165 = vector.shape_cast %164 : vector<1x8x32xf32> to vector<8x32xf32>
    %c0_105 = arith.constant 0 : index
    %c0_106 = arith.constant 0 : index
    %166 = vector.load %arg14[%c0_105, %c0_106] : memref<8x32xf32, #tpu.memory_space<vmem>>, vector<8x32xf32>
    %c0_107 = arith.constant 0 : index
    %c0_108 = arith.constant 0 : index
    %167 = vector.load %arg15[%c0_107, %c0_108] : memref<8x32xf32, #tpu.memory_space<vmem>>, vector<8x32xf32>
    %c0_109 = arith.constant 0 : index
    %c0_110 = arith.constant 0 : index
    %168 = vector.load %arg4[%c0_109, %c0_110] : memref<32x128xf32, #tpu.memory_space<vmem>>, vector<32x128xf32>
    %c0_111 = arith.constant 0 : index
    %c0_112 = arith.constant 0 : index
    %169 = vector.load %arg5[%c0_111, %c0_112] : memref<32x128xf32, #tpu.memory_space<vmem>>, vector<32x128xf32>
    %c0_113 = arith.constant 0 : index
    %c0_114 = arith.constant 0 : index
    %170 = vector.load %arg6[%c0_113, %c0_114] : memref<1x128xf32, #tpu.memory_space<vmem>>, vector<1x128xf32>
    %cst_115 = arith.constant dense<0.000000e+00> : vector<8x128xf32>
    %171 = tpu.matmul %165, %168, %cst_115 {dimension_numbers = #tpu.dot_dimension_numbers<[1], [0], [0], [1], [0, 0, 1, 1], [], []>} : vector<8x32xf32>, vector<32x128xf32>, vector<8x128xf32> -> vector<8x128xf32>
    %cst_116 = arith.constant dense<0.000000e+00> : vector<8x128xf32>
    %172 = tpu.matmul %166, %169, %cst_116 {dimension_numbers = #tpu.dot_dimension_numbers<[1], [0], [0], [1], [0, 0, 1, 1], [], []>} : vector<8x32xf32>, vector<32x128xf32>, vector<8x128xf32> -> vector<8x128xf32>
    %173 = arith.addf %171, %172 : vector<8x128xf32>
    %174 = vector.broadcast %170 : vector<1x128xf32> to vector<8x128xf32>
    %175 = arith.addf %173, %174 : vector<8x128xf32>
    %176 = vector.extract_strided_slice %175 {offsets = [0, 0], sizes = [8, 96], strides = [1, 1]} : vector<8x128xf32> to vector<8x96xf32>
    %177 = arith.negf %176 : vector<8x96xf32>
    %178 = math.exp %177 : vector<8x96xf32>
    %cst_117 = arith.constant 1.000000e+00 : f32
    %179 = vector.broadcast %cst_117 : f32 to vector<8x96xf32>
    %180 = arith.addf %179, %178 : vector<8x96xf32>
    %181 = arith.divf %179, %180 : vector<8x96xf32>
    %182 = vector.extract_strided_slice %181 {offsets = [0, 0], sizes = [8, 32], strides = [1, 1]} : vector<8x96xf32> to vector<8x32xf32>
    %183 = vector.extract_strided_slice %181 {offsets = [0, 32], sizes = [8, 32], strides = [1, 1]} : vector<8x96xf32> to vector<8x32xf32>
    %184 = vector.extract_strided_slice %181 {offsets = [0, 64], sizes = [8, 32], strides = [1, 1]} : vector<8x96xf32> to vector<8x32xf32>
    %185 = vector.extract_strided_slice %175 {offsets = [0, 96], sizes = [8, 32], strides = [1, 1]} : vector<8x128xf32> to vector<8x32xf32>
    %186 = math.tanh %185 : vector<8x32xf32>
    %187 = arith.mulf %183, %167 : vector<8x32xf32>
    %188 = arith.mulf %182, %186 : vector<8x32xf32>
    %189 = arith.addf %187, %188 : vector<8x32xf32>
    %190 = math.tanh %189 : vector<8x32xf32>
    %191 = arith.mulf %184, %190 : vector<8x32xf32>
    %c0_118 = arith.constant 0 : index
    %c0_119 = arith.constant 0 : index
    %192 = vector.load %arg14[%c0_118, %c0_119] : memref<8x32xf32, #tpu.memory_space<vmem>>, vector<8x32xf32>
    tpu.vector_store %arg14[%c0_118, %c0_119], %191 {strides = array<i32>} : memref<8x32xf32, #tpu.memory_space<vmem>>, vector<8x32xf32>,
    %c0_120 = arith.constant 0 : index
    %c0_121 = arith.constant 0 : index
    %193 = vector.load %arg15[%c0_120, %c0_121] : memref<8x32xf32, #tpu.memory_space<vmem>>, vector<8x32xf32>
    tpu.vector_store %arg15[%c0_120, %c0_121], %189 {strides = array<i32>} : memref<8x32xf32, #tpu.memory_space<vmem>>, vector<8x32xf32>,
    %c6_i32 = arith.constant 6 : i32
    %194 = arith.index_cast %c6_i32 : i32 to index
    %c0_122 = arith.constant 0 : index
    %c0_123 = arith.constant 0 : index
    %195 = vector.load %arg1[%194, %c0_122, %c0_123] : memref<8x8x32xf32, #tpu.memory_space<vmem>>, vector<1x8x32xf32>
    %196 = vector.shape_cast %195 : vector<1x8x32xf32> to vector<8x32xf32>
    %c0_124 = arith.constant 0 : index
    %c0_125 = arith.constant 0 : index
    %197 = vector.load %arg14[%c0_124, %c0_125] : memref<8x32xf32, #tpu.memory_space<vmem>>, vector<8x32xf32>
    %c0_126 = arith.constant 0 : index
    %c0_127 = arith.constant 0 : index
    %198 = vector.load %arg15[%c0_126, %c0_127] : memref<8x32xf32, #tpu.memory_space<vmem>>, vector<8x32xf32>
    %c0_128 = arith.constant 0 : index
    %c0_129 = arith.constant 0 : index
    %199 = vector.load %arg4[%c0_128, %c0_129] : memref<32x128xf32, #tpu.memory_space<vmem>>, vector<32x128xf32>
    %c0_130 = arith.constant 0 : index
    %c0_131 = arith.constant 0 : index
    %200 = vector.load %arg5[%c0_130, %c0_131] : memref<32x128xf32, #tpu.memory_space<vmem>>, vector<32x128xf32>
    %c0_132 = arith.constant 0 : index
    %c0_133 = arith.constant 0 : index
    %201 = vector.load %arg6[%c0_132, %c0_133] : memref<1x128xf32, #tpu.memory_space<vmem>>, vector<1x128xf32>
    %cst_134 = arith.constant dense<0.000000e+00> : vector<8x128xf32>
    %202 = tpu.matmul %196, %199, %cst_134 {dimension_numbers = #tpu.dot_dimension_numbers<[1], [0], [0], [1], [0, 0, 1, 1], [], []>} : vector<8x32xf32>, vector<32x128xf32>, vector<8x128xf32> -> vector<8x128xf32>
    %cst_135 = arith.constant dense<0.000000e+00> : vector<8x128xf32>
    %203 = tpu.matmul %197, %200, %cst_135 {dimension_numbers = #tpu.dot_dimension_numbers<[1], [0], [0], [1], [0, 0, 1, 1], [], []>} : vector<8x32xf32>, vector<32x128xf32>, vector<8x128xf32> -> vector<8x128xf32>
    %204 = arith.addf %202, %203 : vector<8x128xf32>
    %205 = vector.broadcast %201 : vector<1x128xf32> to vector<8x128xf32>
    %206 = arith.addf %204, %205 : vector<8x128xf32>
    %207 = vector.extract_strided_slice %206 {offsets = [0, 0], sizes = [8, 96], strides = [1, 1]} : vector<8x128xf32> to vector<8x96xf32>
    %208 = arith.negf %207 : vector<8x96xf32>
    %209 = math.exp %208 : vector<8x96xf32>
    %cst_136 = arith.constant 1.000000e+00 : f32
    %210 = vector.broadcast %cst_136 : f32 to vector<8x96xf32>
    %211 = arith.addf %210, %209 : vector<8x96xf32>
    %212 = arith.divf %210, %211 : vector<8x96xf32>
    %213 = vector.extract_strided_slice %212 {offsets = [0, 0], sizes = [8, 32], strides = [1, 1]} : vector<8x96xf32> to vector<8x32xf32>
    %214 = vector.extract_strided_slice %212 {offsets = [0, 32], sizes = [8, 32], strides = [1, 1]} : vector<8x96xf32> to vector<8x32xf32>
    %215 = vector.extract_strided_slice %212 {offsets = [0, 64], sizes = [8, 32], strides = [1, 1]} : vector<8x96xf32> to vector<8x32xf32>
    %216 = vector.extract_strided_slice %206 {offsets = [0, 96], sizes = [8, 32], strides = [1, 1]} : vector<8x128xf32> to vector<8x32xf32>
    %217 = math.tanh %216 : vector<8x32xf32>
    %218 = arith.mulf %214, %198 : vector<8x32xf32>
    %219 = arith.mulf %213, %217 : vector<8x32xf32>
    %220 = arith.addf %218, %219 : vector<8x32xf32>
    %221 = math.tanh %220 : vector<8x32xf32>
    %222 = arith.mulf %215, %221 : vector<8x32xf32>
    %c0_137 = arith.constant 0 : index
    %c0_138 = arith.constant 0 : index
    %223 = vector.load %arg14[%c0_137, %c0_138] : memref<8x32xf32, #tpu.memory_space<vmem>>, vector<8x32xf32>
    tpu.vector_store %arg14[%c0_137, %c0_138], %222 {strides = array<i32>} : memref<8x32xf32, #tpu.memory_space<vmem>>, vector<8x32xf32>,
    %c0_139 = arith.constant 0 : index
    %c0_140 = arith.constant 0 : index
    %224 = vector.load %arg15[%c0_139, %c0_140] : memref<8x32xf32, #tpu.memory_space<vmem>>, vector<8x32xf32>
    tpu.vector_store %arg15[%c0_139, %c0_140], %220 {strides = array<i32>} : memref<8x32xf32, #tpu.memory_space<vmem>>, vector<8x32xf32>,
    %c7_i32 = arith.constant 7 : i32
    %225 = arith.index_cast %c7_i32 : i32 to index
    %c0_141 = arith.constant 0 : index
    %c0_142 = arith.constant 0 : index
    %226 = vector.load %arg1[%225, %c0_141, %c0_142] : memref<8x8x32xf32, #tpu.memory_space<vmem>>, vector<1x8x32xf32>
    %227 = vector.shape_cast %226 : vector<1x8x32xf32> to vector<8x32xf32>
    %c0_143 = arith.constant 0 : index
    %c0_144 = arith.constant 0 : index
    %228 = vector.load %arg14[%c0_143, %c0_144] : memref<8x32xf32, #tpu.memory_space<vmem>>, vector<8x32xf32>
    %c0_145 = arith.constant 0 : index
    %c0_146 = arith.constant 0 : index
    %229 = vector.load %arg15[%c0_145, %c0_146] : memref<8x32xf32, #tpu.memory_space<vmem>>, vector<8x32xf32>
    %c0_147 = arith.constant 0 : index
    %c0_148 = arith.constant 0 : index
    %230 = vector.load %arg4[%c0_147, %c0_148] : memref<32x128xf32, #tpu.memory_space<vmem>>, vector<32x128xf32>
    %c0_149 = arith.constant 0 : index
    %c0_150 = arith.constant 0 : index
    %231 = vector.load %arg5[%c0_149, %c0_150] : memref<32x128xf32, #tpu.memory_space<vmem>>, vector<32x128xf32>
    %c0_151 = arith.constant 0 : index
    %c0_152 = arith.constant 0 : index
    %232 = vector.load %arg6[%c0_151, %c0_152] : memref<1x128xf32, #tpu.memory_space<vmem>>, vector<1x128xf32>
    %cst_153 = arith.constant dense<0.000000e+00> : vector<8x128xf32>
    %233 = tpu.matmul %227, %230, %cst_153 {dimension_numbers = #tpu.dot_dimension_numbers<[1], [0], [0], [1], [0, 0, 1, 1], [], []>} : vector<8x32xf32>, vector<32x128xf32>, vector<8x128xf32> -> vector<8x128xf32>
    %cst_154 = arith.constant dense<0.000000e+00> : vector<8x128xf32>
    %234 = tpu.matmul %228, %231, %cst_154 {dimension_numbers = #tpu.dot_dimension_numbers<[1], [0], [0], [1], [0, 0, 1, 1], [], []>} : vector<8x32xf32>, vector<32x128xf32>, vector<8x128xf32> -> vector<8x128xf32>
    %235 = arith.addf %233, %234 : vector<8x128xf32>
    %236 = vector.broadcast %232 : vector<1x128xf32> to vector<8x128xf32>
    %237 = arith.addf %235, %236 : vector<8x128xf32>
    %238 = vector.extract_strided_slice %237 {offsets = [0, 0], sizes = [8, 96], strides = [1, 1]} : vector<8x128xf32> to vector<8x96xf32>
    %239 = arith.negf %238 : vector<8x96xf32>
    %240 = math.exp %239 : vector<8x96xf32>
    %cst_155 = arith.constant 1.000000e+00 : f32
    %241 = vector.broadcast %cst_155 : f32 to vector<8x96xf32>
    %242 = arith.addf %241, %240 : vector<8x96xf32>
    %243 = arith.divf %241, %242 : vector<8x96xf32>
    %244 = vector.extract_strided_slice %243 {offsets = [0, 0], sizes = [8, 32], strides = [1, 1]} : vector<8x96xf32> to vector<8x32xf32>
    %245 = vector.extract_strided_slice %243 {offsets = [0, 32], sizes = [8, 32], strides = [1, 1]} : vector<8x96xf32> to vector<8x32xf32>
    %246 = vector.extract_strided_slice %243 {offsets = [0, 64], sizes = [8, 32], strides = [1, 1]} : vector<8x96xf32> to vector<8x32xf32>
    %247 = vector.extract_strided_slice %237 {offsets = [0, 96], sizes = [8, 32], strides = [1, 1]} : vector<8x128xf32> to vector<8x32xf32>
    %248 = math.tanh %247 : vector<8x32xf32>
    %249 = arith.mulf %245, %229 : vector<8x32xf32>
    %250 = arith.mulf %244, %248 : vector<8x32xf32>
    %251 = arith.addf %249, %250 : vector<8x32xf32>
    %252 = math.tanh %251 : vector<8x32xf32>
    %253 = arith.mulf %246, %252 : vector<8x32xf32>
    %c0_156 = arith.constant 0 : index
    %c0_157 = arith.constant 0 : index
    %254 = vector.load %arg14[%c0_156, %c0_157] : memref<8x32xf32, #tpu.memory_space<vmem>>, vector<8x32xf32>
    tpu.vector_store %arg14[%c0_156, %c0_157], %253 {strides = array<i32>} : memref<8x32xf32, #tpu.memory_space<vmem>>, vector<8x32xf32>,
    %c0_158 = arith.constant 0 : index
    %c0_159 = arith.constant 0 : index
    %255 = vector.load %arg15[%c0_158, %c0_159] : memref<8x32xf32, #tpu.memory_space<vmem>>, vector<8x32xf32>
    tpu.vector_store %arg15[%c0_158, %c0_159], %251 {strides = array<i32>} : memref<8x32xf32, #tpu.memory_space<vmem>>, vector<8x32xf32>,
    %c8_i32 = arith.constant 8 : i32
    %c0_160 = arith.constant 0 : index
    %c0_161 = arith.constant 0 : index
    %c0_162 = arith.constant 0 : index
    %256 = vector.load %arg2[%c0_160, %c0_161, %c0_162] : memref<8x8x32xf32, #tpu.memory_space<vmem>>, vector<1x8x32xf32>
    %257 = vector.shape_cast %256 : vector<1x8x32xf32> to vector<8x32xf32>
    %c0_163 = arith.constant 0 : index
    %c0_164 = arith.constant 0 : index
    %258 = vector.load %arg13[%c0_163, %c0_164] : memref<8x32xf32, #tpu.memory_space<vmem>>, vector<8x32xf32>
    tpu.vector_store %arg13[%c0_163, %c0_164], %257 {strides = array<i32>} : memref<8x32xf32, #tpu.memory_space<vmem>>, vector<8x32xf32>,
    %c0_i32_165 = arith.constant 0 : i32
    %c0_166 = arith.constant 0 : index
    %c0_167 = arith.constant 0 : index
    %259 = vector.load %arg13[%c0_166, %c0_167] : memref<8x32xf32, #tpu.memory_space<vmem>>, vector<8x32xf32>
    %c0_168 = arith.constant 0 : index
    %c0_169 = arith.constant 0 : index
    %260 = vector.load %arg14[%c0_168, %c0_169] : memref<8x32xf32, #tpu.memory_space<vmem>>, vector<8x32xf32>
    %c0_170 = arith.constant 0 : index
    %c0_171 = arith.constant 0 : index
    %261 = vector.load %arg15[%c0_170, %c0_171] : memref<8x32xf32, #tpu.memory_space<vmem>>, vector<8x32xf32>
    %c0_172 = arith.constant 0 : index
    %c0_173 = arith.constant 0 : index
    %262 = vector.load %arg7[%c0_172, %c0_173] : memref<32x128xf32, #tpu.memory_space<vmem>>, vector<32x128xf32>
    %c0_174 = arith.constant 0 : index
    %c0_175 = arith.constant 0 : index
    %263 = vector.load %arg8[%c0_174, %c0_175] : memref<32x128xf32, #tpu.memory_space<vmem>>, vector<32x128xf32>
    %c0_176 = arith.constant 0 : index
    %c0_177 = arith.constant 0 : index
    %264 = vector.load %arg9[%c0_176, %c0_177] : memref<1x128xf32, #tpu.memory_space<vmem>>, vector<1x128xf32>
    %cst_178 = arith.constant dense<0.000000e+00> : vector<8x128xf32>
    %265 = tpu.matmul %259, %262, %cst_178 {dimension_numbers = #tpu.dot_dimension_numbers<[1], [0], [0], [1], [0, 0, 1, 1], [], []>} : vector<8x32xf32>, vector<32x128xf32>, vector<8x128xf32> -> vector<8x128xf32>
    %cst_179 = arith.constant dense<0.000000e+00> : vector<8x128xf32>
    %266 = tpu.matmul %260, %263, %cst_179 {dimension_numbers = #tpu.dot_dimension_numbers<[1], [0], [0], [1], [0, 0, 1, 1], [], []>} : vector<8x32xf32>, vector<32x128xf32>, vector<8x128xf32> -> vector<8x128xf32>
    %267 = arith.addf %265, %266 : vector<8x128xf32>
    %268 = vector.broadcast %264 : vector<1x128xf32> to vector<8x128xf32>
    %269 = arith.addf %267, %268 : vector<8x128xf32>
    %270 = vector.extract_strided_slice %269 {offsets = [0, 0], sizes = [8, 96], strides = [1, 1]} : vector<8x128xf32> to vector<8x96xf32>
    %271 = arith.negf %270 : vector<8x96xf32>
    %272 = math.exp %271 : vector<8x96xf32>
    %cst_180 = arith.constant 1.000000e+00 : f32
    %273 = vector.broadcast %cst_180 : f32 to vector<8x96xf32>
    %274 = arith.addf %273, %272 : vector<8x96xf32>
    %275 = arith.divf %273, %274 : vector<8x96xf32>
    %276 = vector.extract_strided_slice %275 {offsets = [0, 0], sizes = [8, 32], strides = [1, 1]} : vector<8x96xf32> to vector<8x32xf32>
    %277 = vector.extract_strided_slice %275 {offsets = [0, 32], sizes = [8, 32], strides = [1, 1]} : vector<8x96xf32> to vector<8x32xf32>
    %278 = vector.extract_strided_slice %275 {offsets = [0, 64], sizes = [8, 32], strides = [1, 1]} : vector<8x96xf32> to vector<8x32xf32>
    %279 = vector.extract_strided_slice %269 {offsets = [0, 96], sizes = [8, 32], strides = [1, 1]} : vector<8x128xf32> to vector<8x32xf32>
    %280 = math.tanh %279 : vector<8x32xf32>
    %281 = arith.mulf %277, %261 : vector<8x32xf32>
    %282 = arith.mulf %276, %280 : vector<8x32xf32>
    %283 = arith.addf %281, %282 : vector<8x32xf32>
    %284 = math.tanh %283 : vector<8x32xf32>
    %285 = arith.mulf %278, %284 : vector<8x32xf32>
    %c0_181 = arith.constant 0 : index
    %c0_182 = arith.constant 0 : index
    %286 = vector.load %arg14[%c0_181, %c0_182] : memref<8x32xf32, #tpu.memory_space<vmem>>, vector<8x32xf32>
    tpu.vector_store %arg14[%c0_181, %c0_182], %285 {strides = array<i32>} : memref<8x32xf32, #tpu.memory_space<vmem>>, vector<8x32xf32>,
    %c0_183 = arith.constant 0 : index
    %c0_184 = arith.constant 0 : index
    %287 = vector.load %arg15[%c0_183, %c0_184] : memref<8x32xf32, #tpu.memory_space<vmem>>, vector<8x32xf32>
    tpu.vector_store %arg15[%c0_183, %c0_184], %283 {strides = array<i32>} : memref<8x32xf32, #tpu.memory_space<vmem>>, vector<8x32xf32>,
    %c0_185 = arith.constant 0 : index
    %c0_186 = arith.constant 0 : index
    %288 = vector.load %arg10[%c0_185, %c0_186] : memref<32x128xf32, #tpu.memory_space<vmem>>, vector<32x128xf32>
    %cst_187 = arith.constant dense<0.000000e+00> : vector<8x128xf32>
    %289 = tpu.matmul %285, %288, %cst_187 {dimension_numbers = #tpu.dot_dimension_numbers<[1], [0], [0], [1], [0, 0, 1, 1], [], []>} : vector<8x32xf32>, vector<32x128xf32>, vector<8x128xf32> -> vector<8x128xf32>
    %c0_188 = arith.constant 0 : index
    %c0_189 = arith.constant 0 : index
    %290 = vector.load %arg11[%c0_188, %c0_189] : memref<1x128xf32, #tpu.memory_space<vmem>>, vector<1x128xf32>
    %291 = vector.broadcast %290 : vector<1x128xf32> to vector<8x128xf32>
    %292 = arith.addf %289, %291 : vector<8x128xf32>
    %c1_i32_190 = arith.constant 1 : i32
    %293 = arith.addi %c0_i32_165, %c1_i32_190 : i32
    %294 = arith.index_cast %293 : i32 to index
    %c0_191 = arith.constant 0 : index
    %c0_192 = arith.constant 0 : index
    %295 = vector.load %arg12[%294, %c0_191, %c0_192] : memref<8x8x128xf32, #tpu.memory_space<vmem>>, vector<1x8x128xf32>
    %296 = vector.shape_cast %295 : vector<1x8x128xf32> to vector<8x128xf32>
    %297 = vector.shape_cast %292 : vector<8x128xf32> to vector<1x8x128xf32>
    tpu.vector_store %arg12[%294, %c0_191, %c0_192], %297 {strides = array<i32>} : memref<8x8x128xf32, #tpu.memory_space<vmem>>, vector<1x8x128xf32>,
    %298 = arith.index_cast %c0_i32_165 : i32 to index
    %299 = memref.load %arg0[%298] : memref<7xi32, #tpu.memory_space<smem>>
    %c1_i32_193 = arith.constant 1 : i32
    %300 = arith.cmpi eq, %299, %c1_i32_193 : i32
    %301 = arith.extui %300 : i1 to i32
    %c0_i32_194 = arith.constant 0 : i32
    %302 = arith.cmpi ne, %301, %c0_i32_194 : i32
    scf.if %302 {
      %c1_i32_390 = arith.constant 1 : i32
      %602 = arith.addi %c0_i32_165, %c1_i32_390 : i32
      %603 = arith.index_cast %602 : i32 to index
      %c0_391 = arith.constant 0 : index
      %c0_392 = arith.constant 0 : index
      %604 = vector.load %arg2[%603, %c0_391, %c0_392] : memref<8x8x32xf32, #tpu.memory_space<vmem>>, vector<1x8x32xf32>
      %605 = vector.shape_cast %604 : vector<1x8x32xf32> to vector<8x32xf32>
      %c0_393 = arith.constant 0 : index
      %c0_394 = arith.constant 0 : index
      %606 = vector.load %arg13[%c0_393, %c0_394] : memref<8x32xf32, #tpu.memory_space<vmem>>, vector<8x32xf32>
      tpu.vector_store %arg13[%c0_393, %c0_394], %605 {strides = array<i32>} : memref<8x32xf32, #tpu.memory_space<vmem>>, vector<8x32xf32>,
    } else {
    }
    %303 = arith.index_cast %c0_i32_165 : i32 to index
    %304 = memref.load %arg0[%303] : memref<7xi32, #tpu.memory_space<smem>>
    %c0_i32_195 = arith.constant 0 : i32
    %305 = arith.cmpi eq, %304, %c0_i32_195 : i32
    %306 = arith.extui %305 : i1 to i32
    %c0_i32_196 = arith.constant 0 : i32
    %307 = arith.cmpi ne, %306, %c0_i32_196 : i32
    scf.if %307 {
      %602 = tpu.iota {dimensions = array<i32: 1>} : vector<8x128xi32>
      %cst_390 = arith.constant dense<0xFF800000> : vector<8xf32>
      %603 = vector.multi_reduction <maximumf>, %292, %cst_390 [1] : vector<8x128xf32> to vector<8xf32>
      %604 = vector.shape_cast %603 : vector<8xf32> to vector<8x1xf32>
      %605 = vector.broadcast %604 : vector<8x1xf32> to vector<8x128xf32>
      %606 = arith.cmpf oeq, %292, %605 : vector<8x128xf32>
      %c128_i32 = arith.constant 128 : i32
      %607 = vector.broadcast %c128_i32 : i32 to vector<8x128xi32>
      %608 = arith.select %606, %602, %607 : vector<8x128xi1>, vector<8x128xi32>
      %cst_391 = arith.constant dense<2147483647> : vector<8xi32>
      %609 = vector.multi_reduction <minsi>, %608, %cst_391 [1] : vector<8x128xi32> to vector<8xi32>
      %610 = vector.shape_cast %609 : vector<8xi32> to vector<8x1xi32>
      %611 = vector.broadcast %610 : vector<8x1xi32> to vector<8x128xi32>
      %612 = arith.cmpi eq, %602, %611 : vector<8x128xi32>
      %613 = arith.extui %612 : vector<8x128xi1> to vector<8x128xi32>
      %614 = arith.sitofp %613 : vector<8x128xi32> to vector<8x128xf32>
      %c0_392 = arith.constant 0 : index
      %c0_393 = arith.constant 0 : index
      %615 = vector.load %arg3[%c0_392, %c0_393] : memref<128x32xf32, #tpu.memory_space<vmem>>, vector<128x32xf32>
      %cst_394 = arith.constant dense<0.000000e+00> : vector<8x32xf32>
      %616 = tpu.matmul %614, %615, %cst_394 {dimension_numbers = #tpu.dot_dimension_numbers<[1], [0], [0], [1], [0, 0, 1, 1], [], []>} : vector<8x128xf32>, vector<128x32xf32>, vector<8x32xf32> -> vector<8x32xf32>
      %c0_395 = arith.constant 0 : index
      %c0_396 = arith.constant 0 : index
      %617 = vector.load %arg13[%c0_395, %c0_396] : memref<8x32xf32, #tpu.memory_space<vmem>>, vector<8x32xf32>
      tpu.vector_store %arg13[%c0_395, %c0_396], %616 {strides = array<i32>} : memref<8x32xf32, #tpu.memory_space<vmem>>, vector<8x32xf32>,
    } else {
    }
    %c1_i32_197 = arith.constant 1 : i32
    %c0_198 = arith.constant 0 : index
    %c0_199 = arith.constant 0 : index
    %308 = vector.load %arg13[%c0_198, %c0_199] : memref<8x32xf32, #tpu.memory_space<vmem>>, vector<8x32xf32>
    %c0_200 = arith.constant 0 : index
    %c0_201 = arith.constant 0 : index
    %309 = vector.load %arg14[%c0_200, %c0_201] : memref<8x32xf32, #tpu.memory_space<vmem>>, vector<8x32xf32>
    %c0_202 = arith.constant 0 : index
    %c0_203 = arith.constant 0 : index
    %310 = vector.load %arg15[%c0_202, %c0_203] : memref<8x32xf32, #tpu.memory_space<vmem>>, vector<8x32xf32>
    %c0_204 = arith.constant 0 : index
    %c0_205 = arith.constant 0 : index
    %311 = vector.load %arg7[%c0_204, %c0_205] : memref<32x128xf32, #tpu.memory_space<vmem>>, vector<32x128xf32>
    %c0_206 = arith.constant 0 : index
    %c0_207 = arith.constant 0 : index
    %312 = vector.load %arg8[%c0_206, %c0_207] : memref<32x128xf32, #tpu.memory_space<vmem>>, vector<32x128xf32>
    %c0_208 = arith.constant 0 : index
    %c0_209 = arith.constant 0 : index
    %313 = vector.load %arg9[%c0_208, %c0_209] : memref<1x128xf32, #tpu.memory_space<vmem>>, vector<1x128xf32>
    %cst_210 = arith.constant dense<0.000000e+00> : vector<8x128xf32>
    %314 = tpu.matmul %308, %311, %cst_210 {dimension_numbers = #tpu.dot_dimension_numbers<[1], [0], [0], [1], [0, 0, 1, 1], [], []>} : vector<8x32xf32>, vector<32x128xf32>, vector<8x128xf32> -> vector<8x128xf32>
    %cst_211 = arith.constant dense<0.000000e+00> : vector<8x128xf32>
    %315 = tpu.matmul %309, %312, %cst_211 {dimension_numbers = #tpu.dot_dimension_numbers<[1], [0], [0], [1], [0, 0, 1, 1], [], []>} : vector<8x32xf32>, vector<32x128xf32>, vector<8x128xf32> -> vector<8x128xf32>
    %316 = arith.addf %314, %315 : vector<8x128xf32>
    %317 = vector.broadcast %313 : vector<1x128xf32> to vector<8x128xf32>
    %318 = arith.addf %316, %317 : vector<8x128xf32>
    %319 = vector.extract_strided_slice %318 {offsets = [0, 0], sizes = [8, 96], strides = [1, 1]} : vector<8x128xf32> to vector<8x96xf32>
    %320 = arith.negf %319 : vector<8x96xf32>
    %321 = math.exp %320 : vector<8x96xf32>
    %cst_212 = arith.constant 1.000000e+00 : f32
    %322 = vector.broadcast %cst_212 : f32 to vector<8x96xf32>
    %323 = arith.addf %322, %321 : vector<8x96xf32>
    %324 = arith.divf %322, %323 : vector<8x96xf32>
    %325 = vector.extract_strided_slice %324 {offsets = [0, 0], sizes = [8, 32], strides = [1, 1]} : vector<8x96xf32> to vector<8x32xf32>
    %326 = vector.extract_strided_slice %324 {offsets = [0, 32], sizes = [8, 32], strides = [1, 1]} : vector<8x96xf32> to vector<8x32xf32>
    %327 = vector.extract_strided_slice %324 {offsets = [0, 64], sizes = [8, 32], strides = [1, 1]} : vector<8x96xf32> to vector<8x32xf32>
    %328 = vector.extract_strided_slice %318 {offsets = [0, 96], sizes = [8, 32], strides = [1, 1]} : vector<8x128xf32> to vector<8x32xf32>
    %329 = math.tanh %328 : vector<8x32xf32>
    %330 = arith.mulf %326, %310 : vector<8x32xf32>
    %331 = arith.mulf %325, %329 : vector<8x32xf32>
    %332 = arith.addf %330, %331 : vector<8x32xf32>
    %333 = math.tanh %332 : vector<8x32xf32>
    %334 = arith.mulf %327, %333 : vector<8x32xf32>
    %c0_213 = arith.constant 0 : index
    %c0_214 = arith.constant 0 : index
    %335 = vector.load %arg14[%c0_213, %c0_214] : memref<8x32xf32, #tpu.memory_space<vmem>>, vector<8x32xf32>
    tpu.vector_store %arg14[%c0_213, %c0_214], %334 {strides = array<i32>} : memref<8x32xf32, #tpu.memory_space<vmem>>, vector<8x32xf32>,
    %c0_215 = arith.constant 0 : index
    %c0_216 = arith.constant 0 : index
    %336 = vector.load %arg15[%c0_215, %c0_216] : memref<8x32xf32, #tpu.memory_space<vmem>>, vector<8x32xf32>
    tpu.vector_store %arg15[%c0_215, %c0_216], %332 {strides = array<i32>} : memref<8x32xf32, #tpu.memory_space<vmem>>, vector<8x32xf32>,
    %c0_217 = arith.constant 0 : index
    %c0_218 = arith.constant 0 : index
    %337 = vector.load %arg10[%c0_217, %c0_218] : memref<32x128xf32, #tpu.memory_space<vmem>>, vector<32x128xf32>
    %cst_219 = arith.constant dense<0.000000e+00> : vector<8x128xf32>
    %338 = tpu.matmul %334, %337, %cst_219 {dimension_numbers = #tpu.dot_dimension_numbers<[1], [0], [0], [1], [0, 0, 1, 1], [], []>} : vector<8x32xf32>, vector<32x128xf32>, vector<8x128xf32> -> vector<8x128xf32>
    %c0_220 = arith.constant 0 : index
    %c0_221 = arith.constant 0 : index
    %339 = vector.load %arg11[%c0_220, %c0_221] : memref<1x128xf32, #tpu.memory_space<vmem>>, vector<1x128xf32>
    %340 = vector.broadcast %339 : vector<1x128xf32> to vector<8x128xf32>
    %341 = arith.addf %338, %340 : vector<8x128xf32>
    %c1_i32_222 = arith.constant 1 : i32
    %342 = arith.addi %c1_i32_197, %c1_i32_222 : i32
    %343 = arith.index_cast %342 : i32 to index
    %c0_223 = arith.constant 0 : index
    %c0_224 = arith.constant 0 : index
    %344 = vector.load %arg12[%343, %c0_223, %c0_224] : memref<8x8x128xf32, #tpu.memory_space<vmem>>, vector<1x8x128xf32>
    %345 = vector.shape_cast %344 : vector<1x8x128xf32> to vector<8x128xf32>
    %346 = vector.shape_cast %341 : vector<8x128xf32> to vector<1x8x128xf32>
    tpu.vector_store %arg12[%343, %c0_223, %c0_224], %346 {strides = array<i32>} : memref<8x8x128xf32, #tpu.memory_space<vmem>>, vector<1x8x128xf32>,
    %347 = arith.index_cast %c1_i32_197 : i32 to index
    %348 = memref.load %arg0[%347] : memref<7xi32, #tpu.memory_space<smem>>
    %c1_i32_225 = arith.constant 1 : i32
    %349 = arith.cmpi eq, %348, %c1_i32_225 : i32
    %350 = arith.extui %349 : i1 to i32
    %c0_i32_226 = arith.constant 0 : i32
    %351 = arith.cmpi ne, %350, %c0_i32_226 : i32
    scf.if %351 {
      %c1_i32_390 = arith.constant 1 : i32
      %602 = arith.addi %c1_i32_197, %c1_i32_390 : i32
      %603 = arith.index_cast %602 : i32 to index
      %c0_391 = arith.constant 0 : index
      %c0_392 = arith.constant 0 : index
      %604 = vector.load %arg2[%603, %c0_391, %c0_392] : memref<8x8x32xf32, #tpu.memory_space<vmem>>, vector<1x8x32xf32>
      %605 = vector.shape_cast %604 : vector<1x8x32xf32> to vector<8x32xf32>
      %c0_393 = arith.constant 0 : index
      %c0_394 = arith.constant 0 : index
      %606 = vector.load %arg13[%c0_393, %c0_394] : memref<8x32xf32, #tpu.memory_space<vmem>>, vector<8x32xf32>
      tpu.vector_store %arg13[%c0_393, %c0_394], %605 {strides = array<i32>} : memref<8x32xf32, #tpu.memory_space<vmem>>, vector<8x32xf32>,
    } else {
    }
    %352 = arith.index_cast %c1_i32_197 : i32 to index
    %353 = memref.load %arg0[%352] : memref<7xi32, #tpu.memory_space<smem>>
    %c0_i32_227 = arith.constant 0 : i32
    %354 = arith.cmpi eq, %353, %c0_i32_227 : i32
    %355 = arith.extui %354 : i1 to i32
    %c0_i32_228 = arith.constant 0 : i32
    %356 = arith.cmpi ne, %355, %c0_i32_228 : i32
    scf.if %356 {
      %602 = tpu.iota {dimensions = array<i32: 1>} : vector<8x128xi32>
      %cst_390 = arith.constant dense<0xFF800000> : vector<8xf32>
      %603 = vector.multi_reduction <maximumf>, %341, %cst_390 [1] : vector<8x128xf32> to vector<8xf32>
      %604 = vector.shape_cast %603 : vector<8xf32> to vector<8x1xf32>
      %605 = vector.broadcast %604 : vector<8x1xf32> to vector<8x128xf32>
      %606 = arith.cmpf oeq, %341, %605 : vector<8x128xf32>
      %c128_i32 = arith.constant 128 : i32
      %607 = vector.broadcast %c128_i32 : i32 to vector<8x128xi32>
      %608 = arith.select %606, %602, %607 : vector<8x128xi1>, vector<8x128xi32>
      %cst_391 = arith.constant dense<2147483647> : vector<8xi32>
      %609 = vector.multi_reduction <minsi>, %608, %cst_391 [1] : vector<8x128xi32> to vector<8xi32>
      %610 = vector.shape_cast %609 : vector<8xi32> to vector<8x1xi32>
      %611 = vector.broadcast %610 : vector<8x1xi32> to vector<8x128xi32>
      %612 = arith.cmpi eq, %602, %611 : vector<8x128xi32>
      %613 = arith.extui %612 : vector<8x128xi1> to vector<8x128xi32>
      %614 = arith.sitofp %613 : vector<8x128xi32> to vector<8x128xf32>
      %c0_392 = arith.constant 0 : index
      %c0_393 = arith.constant 0 : index
      %615 = vector.load %arg3[%c0_392, %c0_393] : memref<128x32xf32, #tpu.memory_space<vmem>>, vector<128x32xf32>
      %cst_394 = arith.constant dense<0.000000e+00> : vector<8x32xf32>
      %616 = tpu.matmul %614, %615, %cst_394 {dimension_numbers = #tpu.dot_dimension_numbers<[1], [0], [0], [1], [0, 0, 1, 1], [], []>} : vector<8x128xf32>, vector<128x32xf32>, vector<8x32xf32> -> vector<8x32xf32>
      %c0_395 = arith.constant 0 : index
      %c0_396 = arith.constant 0 : index
      %617 = vector.load %arg13[%c0_395, %c0_396] : memref<8x32xf32, #tpu.memory_space<vmem>>, vector<8x32xf32>
      tpu.vector_store %arg13[%c0_395, %c0_396], %616 {strides = array<i32>} : memref<8x32xf32, #tpu.memory_space<vmem>>, vector<8x32xf32>,
    } else {
    }
    %c2_i32_229 = arith.constant 2 : i32
    %c0_230 = arith.constant 0 : index
    %c0_231 = arith.constant 0 : index
    %357 = vector.load %arg13[%c0_230, %c0_231] : memref<8x32xf32, #tpu.memory_space<vmem>>, vector<8x32xf32>
    %c0_232 = arith.constant 0 : index
    %c0_233 = arith.constant 0 : index
    %358 = vector.load %arg14[%c0_232, %c0_233] : memref<8x32xf32, #tpu.memory_space<vmem>>, vector<8x32xf32>
    %c0_234 = arith.constant 0 : index
    %c0_235 = arith.constant 0 : index
    %359 = vector.load %arg15[%c0_234, %c0_235] : memref<8x32xf32, #tpu.memory_space<vmem>>, vector<8x32xf32>
    %c0_236 = arith.constant 0 : index
    %c0_237 = arith.constant 0 : index
    %360 = vector.load %arg7[%c0_236, %c0_237] : memref<32x128xf32, #tpu.memory_space<vmem>>, vector<32x128xf32>
    %c0_238 = arith.constant 0 : index
    %c0_239 = arith.constant 0 : index
    %361 = vector.load %arg8[%c0_238, %c0_239] : memref<32x128xf32, #tpu.memory_space<vmem>>, vector<32x128xf32>
    %c0_240 = arith.constant 0 : index
    %c0_241 = arith.constant 0 : index
    %362 = vector.load %arg9[%c0_240, %c0_241] : memref<1x128xf32, #tpu.memory_space<vmem>>, vector<1x128xf32>
    %cst_242 = arith.constant dense<0.000000e+00> : vector<8x128xf32>
    %363 = tpu.matmul %357, %360, %cst_242 {dimension_numbers = #tpu.dot_dimension_numbers<[1], [0], [0], [1], [0, 0, 1, 1], [], []>} : vector<8x32xf32>, vector<32x128xf32>, vector<8x128xf32> -> vector<8x128xf32>
    %cst_243 = arith.constant dense<0.000000e+00> : vector<8x128xf32>
    %364 = tpu.matmul %358, %361, %cst_243 {dimension_numbers = #tpu.dot_dimension_numbers<[1], [0], [0], [1], [0, 0, 1, 1], [], []>} : vector<8x32xf32>, vector<32x128xf32>, vector<8x128xf32> -> vector<8x128xf32>
    %365 = arith.addf %363, %364 : vector<8x128xf32>
    %366 = vector.broadcast %362 : vector<1x128xf32> to vector<8x128xf32>
    %367 = arith.addf %365, %366 : vector<8x128xf32>
    %368 = vector.extract_strided_slice %367 {offsets = [0, 0], sizes = [8, 96], strides = [1, 1]} : vector<8x128xf32> to vector<8x96xf32>
    %369 = arith.negf %368 : vector<8x96xf32>
    %370 = math.exp %369 : vector<8x96xf32>
    %cst_244 = arith.constant 1.000000e+00 : f32
    %371 = vector.broadcast %cst_244 : f32 to vector<8x96xf32>
    %372 = arith.addf %371, %370 : vector<8x96xf32>
    %373 = arith.divf %371, %372 : vector<8x96xf32>
    %374 = vector.extract_strided_slice %373 {offsets = [0, 0], sizes = [8, 32], strides = [1, 1]} : vector<8x96xf32> to vector<8x32xf32>
    %375 = vector.extract_strided_slice %373 {offsets = [0, 32], sizes = [8, 32], strides = [1, 1]} : vector<8x96xf32> to vector<8x32xf32>
    %376 = vector.extract_strided_slice %373 {offsets = [0, 64], sizes = [8, 32], strides = [1, 1]} : vector<8x96xf32> to vector<8x32xf32>
    %377 = vector.extract_strided_slice %367 {offsets = [0, 96], sizes = [8, 32], strides = [1, 1]} : vector<8x128xf32> to vector<8x32xf32>
    %378 = math.tanh %377 : vector<8x32xf32>
    %379 = arith.mulf %375, %359 : vector<8x32xf32>
    %380 = arith.mulf %374, %378 : vector<8x32xf32>
    %381 = arith.addf %379, %380 : vector<8x32xf32>
    %382 = math.tanh %381 : vector<8x32xf32>
    %383 = arith.mulf %376, %382 : vector<8x32xf32>
    %c0_245 = arith.constant 0 : index
    %c0_246 = arith.constant 0 : index
    %384 = vector.load %arg14[%c0_245, %c0_246] : memref<8x32xf32, #tpu.memory_space<vmem>>, vector<8x32xf32>
    tpu.vector_store %arg14[%c0_245, %c0_246], %383 {strides = array<i32>} : memref<8x32xf32, #tpu.memory_space<vmem>>, vector<8x32xf32>,
    %c0_247 = arith.constant 0 : index
    %c0_248 = arith.constant 0 : index
    %385 = vector.load %arg15[%c0_247, %c0_248] : memref<8x32xf32, #tpu.memory_space<vmem>>, vector<8x32xf32>
    tpu.vector_store %arg15[%c0_247, %c0_248], %381 {strides = array<i32>} : memref<8x32xf32, #tpu.memory_space<vmem>>, vector<8x32xf32>,
    %c0_249 = arith.constant 0 : index
    %c0_250 = arith.constant 0 : index
    %386 = vector.load %arg10[%c0_249, %c0_250] : memref<32x128xf32, #tpu.memory_space<vmem>>, vector<32x128xf32>
    %cst_251 = arith.constant dense<0.000000e+00> : vector<8x128xf32>
    %387 = tpu.matmul %383, %386, %cst_251 {dimension_numbers = #tpu.dot_dimension_numbers<[1], [0], [0], [1], [0, 0, 1, 1], [], []>} : vector<8x32xf32>, vector<32x128xf32>, vector<8x128xf32> -> vector<8x128xf32>
    %c0_252 = arith.constant 0 : index
    %c0_253 = arith.constant 0 : index
    %388 = vector.load %arg11[%c0_252, %c0_253] : memref<1x128xf32, #tpu.memory_space<vmem>>, vector<1x128xf32>
    %389 = vector.broadcast %388 : vector<1x128xf32> to vector<8x128xf32>
    %390 = arith.addf %387, %389 : vector<8x128xf32>
    %c1_i32_254 = arith.constant 1 : i32
    %391 = arith.addi %c2_i32_229, %c1_i32_254 : i32
    %392 = arith.index_cast %391 : i32 to index
    %c0_255 = arith.constant 0 : index
    %c0_256 = arith.constant 0 : index
    %393 = vector.load %arg12[%392, %c0_255, %c0_256] : memref<8x8x128xf32, #tpu.memory_space<vmem>>, vector<1x8x128xf32>
    %394 = vector.shape_cast %393 : vector<1x8x128xf32> to vector<8x128xf32>
    %395 = vector.shape_cast %390 : vector<8x128xf32> to vector<1x8x128xf32>
    tpu.vector_store %arg12[%392, %c0_255, %c0_256], %395 {strides = array<i32>} : memref<8x8x128xf32, #tpu.memory_space<vmem>>, vector<1x8x128xf32>,
    %396 = arith.index_cast %c2_i32_229 : i32 to index
    %397 = memref.load %arg0[%396] : memref<7xi32, #tpu.memory_space<smem>>
    %c1_i32_257 = arith.constant 1 : i32
    %398 = arith.cmpi eq, %397, %c1_i32_257 : i32
    %399 = arith.extui %398 : i1 to i32
    %c0_i32_258 = arith.constant 0 : i32
    %400 = arith.cmpi ne, %399, %c0_i32_258 : i32
    scf.if %400 {
      %c1_i32_390 = arith.constant 1 : i32
      %602 = arith.addi %c2_i32_229, %c1_i32_390 : i32
      %603 = arith.index_cast %602 : i32 to index
      %c0_391 = arith.constant 0 : index
      %c0_392 = arith.constant 0 : index
      %604 = vector.load %arg2[%603, %c0_391, %c0_392] : memref<8x8x32xf32, #tpu.memory_space<vmem>>, vector<1x8x32xf32>
      %605 = vector.shape_cast %604 : vector<1x8x32xf32> to vector<8x32xf32>
      %c0_393 = arith.constant 0 : index
      %c0_394 = arith.constant 0 : index
      %606 = vector.load %arg13[%c0_393, %c0_394] : memref<8x32xf32, #tpu.memory_space<vmem>>, vector<8x32xf32>
      tpu.vector_store %arg13[%c0_393, %c0_394], %605 {strides = array<i32>} : memref<8x32xf32, #tpu.memory_space<vmem>>, vector<8x32xf32>,
    } else {
    }
    %401 = arith.index_cast %c2_i32_229 : i32 to index
    %402 = memref.load %arg0[%401] : memref<7xi32, #tpu.memory_space<smem>>
    %c0_i32_259 = arith.constant 0 : i32
    %403 = arith.cmpi eq, %402, %c0_i32_259 : i32
    %404 = arith.extui %403 : i1 to i32
    %c0_i32_260 = arith.constant 0 : i32
    %405 = arith.cmpi ne, %404, %c0_i32_260 : i32
    scf.if %405 {
      %602 = tpu.iota {dimensions = array<i32: 1>} : vector<8x128xi32>
      %cst_390 = arith.constant dense<0xFF800000> : vector<8xf32>
      %603 = vector.multi_reduction <maximumf>, %390, %cst_390 [1] : vector<8x128xf32> to vector<8xf32>
      %604 = vector.shape_cast %603 : vector<8xf32> to vector<8x1xf32>
      %605 = vector.broadcast %604 : vector<8x1xf32> to vector<8x128xf32>
      %606 = arith.cmpf oeq, %390, %605 : vector<8x128xf32>
      %c128_i32 = arith.constant 128 : i32
      %607 = vector.broadcast %c128_i32 : i32 to vector<8x128xi32>
      %608 = arith.select %606, %602, %607 : vector<8x128xi1>, vector<8x128xi32>
      %cst_391 = arith.constant dense<2147483647> : vector<8xi32>
      %609 = vector.multi_reduction <minsi>, %608, %cst_391 [1] : vector<8x128xi32> to vector<8xi32>
      %610 = vector.shape_cast %609 : vector<8xi32> to vector<8x1xi32>
      %611 = vector.broadcast %610 : vector<8x1xi32> to vector<8x128xi32>
      %612 = arith.cmpi eq, %602, %611 : vector<8x128xi32>
      %613 = arith.extui %612 : vector<8x128xi1> to vector<8x128xi32>
      %614 = arith.sitofp %613 : vector<8x128xi32> to vector<8x128xf32>
      %c0_392 = arith.constant 0 : index
      %c0_393 = arith.constant 0 : index
      %615 = vector.load %arg3[%c0_392, %c0_393] : memref<128x32xf32, #tpu.memory_space<vmem>>, vector<128x32xf32>
      %cst_394 = arith.constant dense<0.000000e+00> : vector<8x32xf32>
      %616 = tpu.matmul %614, %615, %cst_394 {dimension_numbers = #tpu.dot_dimension_numbers<[1], [0], [0], [1], [0, 0, 1, 1], [], []>} : vector<8x128xf32>, vector<128x32xf32>, vector<8x32xf32> -> vector<8x32xf32>
      %c0_395 = arith.constant 0 : index
      %c0_396 = arith.constant 0 : index
      %617 = vector.load %arg13[%c0_395, %c0_396] : memref<8x32xf32, #tpu.memory_space<vmem>>, vector<8x32xf32>
      tpu.vector_store %arg13[%c0_395, %c0_396], %616 {strides = array<i32>} : memref<8x32xf32, #tpu.memory_space<vmem>>, vector<8x32xf32>,
    } else {
    }
    %c3_i32_261 = arith.constant 3 : i32
    %c0_262 = arith.constant 0 : index
    %c0_263 = arith.constant 0 : index
    %406 = vector.load %arg13[%c0_262, %c0_263] : memref<8x32xf32, #tpu.memory_space<vmem>>, vector<8x32xf32>
    %c0_264 = arith.constant 0 : index
    %c0_265 = arith.constant 0 : index
    %407 = vector.load %arg14[%c0_264, %c0_265] : memref<8x32xf32, #tpu.memory_space<vmem>>, vector<8x32xf32>
    %c0_266 = arith.constant 0 : index
    %c0_267 = arith.constant 0 : index
    %408 = vector.load %arg15[%c0_266, %c0_267] : memref<8x32xf32, #tpu.memory_space<vmem>>, vector<8x32xf32>
    %c0_268 = arith.constant 0 : index
    %c0_269 = arith.constant 0 : index
    %409 = vector.load %arg7[%c0_268, %c0_269] : memref<32x128xf32, #tpu.memory_space<vmem>>, vector<32x128xf32>
    %c0_270 = arith.constant 0 : index
    %c0_271 = arith.constant 0 : index
    %410 = vector.load %arg8[%c0_270, %c0_271] : memref<32x128xf32, #tpu.memory_space<vmem>>, vector<32x128xf32>
    %c0_272 = arith.constant 0 : index
    %c0_273 = arith.constant 0 : index
    %411 = vector.load %arg9[%c0_272, %c0_273] : memref<1x128xf32, #tpu.memory_space<vmem>>, vector<1x128xf32>
    %cst_274 = arith.constant dense<0.000000e+00> : vector<8x128xf32>
    %412 = tpu.matmul %406, %409, %cst_274 {dimension_numbers = #tpu.dot_dimension_numbers<[1], [0], [0], [1], [0, 0, 1, 1], [], []>} : vector<8x32xf32>, vector<32x128xf32>, vector<8x128xf32> -> vector<8x128xf32>
    %cst_275 = arith.constant dense<0.000000e+00> : vector<8x128xf32>
    %413 = tpu.matmul %407, %410, %cst_275 {dimension_numbers = #tpu.dot_dimension_numbers<[1], [0], [0], [1], [0, 0, 1, 1], [], []>} : vector<8x32xf32>, vector<32x128xf32>, vector<8x128xf32> -> vector<8x128xf32>
    %414 = arith.addf %412, %413 : vector<8x128xf32>
    %415 = vector.broadcast %411 : vector<1x128xf32> to vector<8x128xf32>
    %416 = arith.addf %414, %415 : vector<8x128xf32>
    %417 = vector.extract_strided_slice %416 {offsets = [0, 0], sizes = [8, 96], strides = [1, 1]} : vector<8x128xf32> to vector<8x96xf32>
    %418 = arith.negf %417 : vector<8x96xf32>
    %419 = math.exp %418 : vector<8x96xf32>
    %cst_276 = arith.constant 1.000000e+00 : f32
    %420 = vector.broadcast %cst_276 : f32 to vector<8x96xf32>
    %421 = arith.addf %420, %419 : vector<8x96xf32>
    %422 = arith.divf %420, %421 : vector<8x96xf32>
    %423 = vector.extract_strided_slice %422 {offsets = [0, 0], sizes = [8, 32], strides = [1, 1]} : vector<8x96xf32> to vector<8x32xf32>
    %424 = vector.extract_strided_slice %422 {offsets = [0, 32], sizes = [8, 32], strides = [1, 1]} : vector<8x96xf32> to vector<8x32xf32>
    %425 = vector.extract_strided_slice %422 {offsets = [0, 64], sizes = [8, 32], strides = [1, 1]} : vector<8x96xf32> to vector<8x32xf32>
    %426 = vector.extract_strided_slice %416 {offsets = [0, 96], sizes = [8, 32], strides = [1, 1]} : vector<8x128xf32> to vector<8x32xf32>
    %427 = math.tanh %426 : vector<8x32xf32>
    %428 = arith.mulf %424, %408 : vector<8x32xf32>
    %429 = arith.mulf %423, %427 : vector<8x32xf32>
    %430 = arith.addf %428, %429 : vector<8x32xf32>
    %431 = math.tanh %430 : vector<8x32xf32>
    %432 = arith.mulf %425, %431 : vector<8x32xf32>
    %c0_277 = arith.constant 0 : index
    %c0_278 = arith.constant 0 : index
    %433 = vector.load %arg14[%c0_277, %c0_278] : memref<8x32xf32, #tpu.memory_space<vmem>>, vector<8x32xf32>
    tpu.vector_store %arg14[%c0_277, %c0_278], %432 {strides = array<i32>} : memref<8x32xf32, #tpu.memory_space<vmem>>, vector<8x32xf32>,
    %c0_279 = arith.constant 0 : index
    %c0_280 = arith.constant 0 : index
    %434 = vector.load %arg15[%c0_279, %c0_280] : memref<8x32xf32, #tpu.memory_space<vmem>>, vector<8x32xf32>
    tpu.vector_store %arg15[%c0_279, %c0_280], %430 {strides = array<i32>} : memref<8x32xf32, #tpu.memory_space<vmem>>, vector<8x32xf32>,
    %c0_281 = arith.constant 0 : index
    %c0_282 = arith.constant 0 : index
    %435 = vector.load %arg10[%c0_281, %c0_282] : memref<32x128xf32, #tpu.memory_space<vmem>>, vector<32x128xf32>
    %cst_283 = arith.constant dense<0.000000e+00> : vector<8x128xf32>
    %436 = tpu.matmul %432, %435, %cst_283 {dimension_numbers = #tpu.dot_dimension_numbers<[1], [0], [0], [1], [0, 0, 1, 1], [], []>} : vector<8x32xf32>, vector<32x128xf32>, vector<8x128xf32> -> vector<8x128xf32>
    %c0_284 = arith.constant 0 : index
    %c0_285 = arith.constant 0 : index
    %437 = vector.load %arg11[%c0_284, %c0_285] : memref<1x128xf32, #tpu.memory_space<vmem>>, vector<1x128xf32>
    %438 = vector.broadcast %437 : vector<1x128xf32> to vector<8x128xf32>
    %439 = arith.addf %436, %438 : vector<8x128xf32>
    %c1_i32_286 = arith.constant 1 : i32
    %440 = arith.addi %c3_i32_261, %c1_i32_286 : i32
    %441 = arith.index_cast %440 : i32 to index
    %c0_287 = arith.constant 0 : index
    %c0_288 = arith.constant 0 : index
    %442 = vector.load %arg12[%441, %c0_287, %c0_288] : memref<8x8x128xf32, #tpu.memory_space<vmem>>, vector<1x8x128xf32>
    %443 = vector.shape_cast %442 : vector<1x8x128xf32> to vector<8x128xf32>
    %444 = vector.shape_cast %439 : vector<8x128xf32> to vector<1x8x128xf32>
    tpu.vector_store %arg12[%441, %c0_287, %c0_288], %444 {strides = array<i32>} : memref<8x8x128xf32, #tpu.memory_space<vmem>>, vector<1x8x128xf32>,
    %445 = arith.index_cast %c3_i32_261 : i32 to index
    %446 = memref.load %arg0[%445] : memref<7xi32, #tpu.memory_space<smem>>
    %c1_i32_289 = arith.constant 1 : i32
    %447 = arith.cmpi eq, %446, %c1_i32_289 : i32
    %448 = arith.extui %447 : i1 to i32
    %c0_i32_290 = arith.constant 0 : i32
    %449 = arith.cmpi ne, %448, %c0_i32_290 : i32
    scf.if %449 {
      %c1_i32_390 = arith.constant 1 : i32
      %602 = arith.addi %c3_i32_261, %c1_i32_390 : i32
      %603 = arith.index_cast %602 : i32 to index
      %c0_391 = arith.constant 0 : index
      %c0_392 = arith.constant 0 : index
      %604 = vector.load %arg2[%603, %c0_391, %c0_392] : memref<8x8x32xf32, #tpu.memory_space<vmem>>, vector<1x8x32xf32>
      %605 = vector.shape_cast %604 : vector<1x8x32xf32> to vector<8x32xf32>
      %c0_393 = arith.constant 0 : index
      %c0_394 = arith.constant 0 : index
      %606 = vector.load %arg13[%c0_393, %c0_394] : memref<8x32xf32, #tpu.memory_space<vmem>>, vector<8x32xf32>
      tpu.vector_store %arg13[%c0_393, %c0_394], %605 {strides = array<i32>} : memref<8x32xf32, #tpu.memory_space<vmem>>, vector<8x32xf32>,
    } else {
    }
    %450 = arith.index_cast %c3_i32_261 : i32 to index
    %451 = memref.load %arg0[%450] : memref<7xi32, #tpu.memory_space<smem>>
    %c0_i32_291 = arith.constant 0 : i32
    %452 = arith.cmpi eq, %451, %c0_i32_291 : i32
    %453 = arith.extui %452 : i1 to i32
    %c0_i32_292 = arith.constant 0 : i32
    %454 = arith.cmpi ne, %453, %c0_i32_292 : i32
    scf.if %454 {
      %602 = tpu.iota {dimensions = array<i32: 1>} : vector<8x128xi32>
      %cst_390 = arith.constant dense<0xFF800000> : vector<8xf32>
      %603 = vector.multi_reduction <maximumf>, %439, %cst_390 [1] : vector<8x128xf32> to vector<8xf32>
      %604 = vector.shape_cast %603 : vector<8xf32> to vector<8x1xf32>
      %605 = vector.broadcast %604 : vector<8x1xf32> to vector<8x128xf32>
      %606 = arith.cmpf oeq, %439, %605 : vector<8x128xf32>
      %c128_i32 = arith.constant 128 : i32
      %607 = vector.broadcast %c128_i32 : i32 to vector<8x128xi32>
      %608 = arith.select %606, %602, %607 : vector<8x128xi1>, vector<8x128xi32>
      %cst_391 = arith.constant dense<2147483647> : vector<8xi32>
      %609 = vector.multi_reduction <minsi>, %608, %cst_391 [1] : vector<8x128xi32> to vector<8xi32>
      %610 = vector.shape_cast %609 : vector<8xi32> to vector<8x1xi32>
      %611 = vector.broadcast %610 : vector<8x1xi32> to vector<8x128xi32>
      %612 = arith.cmpi eq, %602, %611 : vector<8x128xi32>
      %613 = arith.extui %612 : vector<8x128xi1> to vector<8x128xi32>
      %614 = arith.sitofp %613 : vector<8x128xi32> to vector<8x128xf32>
      %c0_392 = arith.constant 0 : index
      %c0_393 = arith.constant 0 : index
      %615 = vector.load %arg3[%c0_392, %c0_393] : memref<128x32xf32, #tpu.memory_space<vmem>>, vector<128x32xf32>
      %cst_394 = arith.constant dense<0.000000e+00> : vector<8x32xf32>
      %616 = tpu.matmul %614, %615, %cst_394 {dimension_numbers = #tpu.dot_dimension_numbers<[1], [0], [0], [1], [0, 0, 1, 1], [], []>} : vector<8x128xf32>, vector<128x32xf32>, vector<8x32xf32> -> vector<8x32xf32>
      %c0_395 = arith.constant 0 : index
      %c0_396 = arith.constant 0 : index
      %617 = vector.load %arg13[%c0_395, %c0_396] : memref<8x32xf32, #tpu.memory_space<vmem>>, vector<8x32xf32>
      tpu.vector_store %arg13[%c0_395, %c0_396], %616 {strides = array<i32>} : memref<8x32xf32, #tpu.memory_space<vmem>>, vector<8x32xf32>,
    } else {
    }
    %c4_i32_293 = arith.constant 4 : i32
    %c0_294 = arith.constant 0 : index
    %c0_295 = arith.constant 0 : index
    %455 = vector.load %arg13[%c0_294, %c0_295] : memref<8x32xf32, #tpu.memory_space<vmem>>, vector<8x32xf32>
    %c0_296 = arith.constant 0 : index
    %c0_297 = arith.constant 0 : index
    %456 = vector.load %arg14[%c0_296, %c0_297] : memref<8x32xf32, #tpu.memory_space<vmem>>, vector<8x32xf32>
    %c0_298 = arith.constant 0 : index
    %c0_299 = arith.constant 0 : index
    %457 = vector.load %arg15[%c0_298, %c0_299] : memref<8x32xf32, #tpu.memory_space<vmem>>, vector<8x32xf32>
    %c0_300 = arith.constant 0 : index
    %c0_301 = arith.constant 0 : index
    %458 = vector.load %arg7[%c0_300, %c0_301] : memref<32x128xf32, #tpu.memory_space<vmem>>, vector<32x128xf32>
    %c0_302 = arith.constant 0 : index
    %c0_303 = arith.constant 0 : index
    %459 = vector.load %arg8[%c0_302, %c0_303] : memref<32x128xf32, #tpu.memory_space<vmem>>, vector<32x128xf32>
    %c0_304 = arith.constant 0 : index
    %c0_305 = arith.constant 0 : index
    %460 = vector.load %arg9[%c0_304, %c0_305] : memref<1x128xf32, #tpu.memory_space<vmem>>, vector<1x128xf32>
    %cst_306 = arith.constant dense<0.000000e+00> : vector<8x128xf32>
    %461 = tpu.matmul %455, %458, %cst_306 {dimension_numbers = #tpu.dot_dimension_numbers<[1], [0], [0], [1], [0, 0, 1, 1], [], []>} : vector<8x32xf32>, vector<32x128xf32>, vector<8x128xf32> -> vector<8x128xf32>
    %cst_307 = arith.constant dense<0.000000e+00> : vector<8x128xf32>
    %462 = tpu.matmul %456, %459, %cst_307 {dimension_numbers = #tpu.dot_dimension_numbers<[1], [0], [0], [1], [0, 0, 1, 1], [], []>} : vector<8x32xf32>, vector<32x128xf32>, vector<8x128xf32> -> vector<8x128xf32>
    %463 = arith.addf %461, %462 : vector<8x128xf32>
    %464 = vector.broadcast %460 : vector<1x128xf32> to vector<8x128xf32>
    %465 = arith.addf %463, %464 : vector<8x128xf32>
    %466 = vector.extract_strided_slice %465 {offsets = [0, 0], sizes = [8, 96], strides = [1, 1]} : vector<8x128xf32> to vector<8x96xf32>
    %467 = arith.negf %466 : vector<8x96xf32>
    %468 = math.exp %467 : vector<8x96xf32>
    %cst_308 = arith.constant 1.000000e+00 : f32
    %469 = vector.broadcast %cst_308 : f32 to vector<8x96xf32>
    %470 = arith.addf %469, %468 : vector<8x96xf32>
    %471 = arith.divf %469, %470 : vector<8x96xf32>
    %472 = vector.extract_strided_slice %471 {offsets = [0, 0], sizes = [8, 32], strides = [1, 1]} : vector<8x96xf32> to vector<8x32xf32>
    %473 = vector.extract_strided_slice %471 {offsets = [0, 32], sizes = [8, 32], strides = [1, 1]} : vector<8x96xf32> to vector<8x32xf32>
    %474 = vector.extract_strided_slice %471 {offsets = [0, 64], sizes = [8, 32], strides = [1, 1]} : vector<8x96xf32> to vector<8x32xf32>
    %475 = vector.extract_strided_slice %465 {offsets = [0, 96], sizes = [8, 32], strides = [1, 1]} : vector<8x128xf32> to vector<8x32xf32>
    %476 = math.tanh %475 : vector<8x32xf32>
    %477 = arith.mulf %473, %457 : vector<8x32xf32>
    %478 = arith.mulf %472, %476 : vector<8x32xf32>
    %479 = arith.addf %477, %478 : vector<8x32xf32>
    %480 = math.tanh %479 : vector<8x32xf32>
    %481 = arith.mulf %474, %480 : vector<8x32xf32>
    %c0_309 = arith.constant 0 : index
    %c0_310 = arith.constant 0 : index
    %482 = vector.load %arg14[%c0_309, %c0_310] : memref<8x32xf32, #tpu.memory_space<vmem>>, vector<8x32xf32>
    tpu.vector_store %arg14[%c0_309, %c0_310], %481 {strides = array<i32>} : memref<8x32xf32, #tpu.memory_space<vmem>>, vector<8x32xf32>,
    %c0_311 = arith.constant 0 : index
    %c0_312 = arith.constant 0 : index
    %483 = vector.load %arg15[%c0_311, %c0_312] : memref<8x32xf32, #tpu.memory_space<vmem>>, vector<8x32xf32>
    tpu.vector_store %arg15[%c0_311, %c0_312], %479 {strides = array<i32>} : memref<8x32xf32, #tpu.memory_space<vmem>>, vector<8x32xf32>,
    %c0_313 = arith.constant 0 : index
    %c0_314 = arith.constant 0 : index
    %484 = vector.load %arg10[%c0_313, %c0_314] : memref<32x128xf32, #tpu.memory_space<vmem>>, vector<32x128xf32>
    %cst_315 = arith.constant dense<0.000000e+00> : vector<8x128xf32>
    %485 = tpu.matmul %481, %484, %cst_315 {dimension_numbers = #tpu.dot_dimension_numbers<[1], [0], [0], [1], [0, 0, 1, 1], [], []>} : vector<8x32xf32>, vector<32x128xf32>, vector<8x128xf32> -> vector<8x128xf32>
    %c0_316 = arith.constant 0 : index
    %c0_317 = arith.constant 0 : index
    %486 = vector.load %arg11[%c0_316, %c0_317] : memref<1x128xf32, #tpu.memory_space<vmem>>, vector<1x128xf32>
    %487 = vector.broadcast %486 : vector<1x128xf32> to vector<8x128xf32>
    %488 = arith.addf %485, %487 : vector<8x128xf32>
    %c1_i32_318 = arith.constant 1 : i32
    %489 = arith.addi %c4_i32_293, %c1_i32_318 : i32
    %490 = arith.index_cast %489 : i32 to index
    %c0_319 = arith.constant 0 : index
    %c0_320 = arith.constant 0 : index
    %491 = vector.load %arg12[%490, %c0_319, %c0_320] : memref<8x8x128xf32, #tpu.memory_space<vmem>>, vector<1x8x128xf32>
    %492 = vector.shape_cast %491 : vector<1x8x128xf32> to vector<8x128xf32>
    %493 = vector.shape_cast %488 : vector<8x128xf32> to vector<1x8x128xf32>
    tpu.vector_store %arg12[%490, %c0_319, %c0_320], %493 {strides = array<i32>} : memref<8x8x128xf32, #tpu.memory_space<vmem>>, vector<1x8x128xf32>,
    %494 = arith.index_cast %c4_i32_293 : i32 to index
    %495 = memref.load %arg0[%494] : memref<7xi32, #tpu.memory_space<smem>>
    %c1_i32_321 = arith.constant 1 : i32
    %496 = arith.cmpi eq, %495, %c1_i32_321 : i32
    %497 = arith.extui %496 : i1 to i32
    %c0_i32_322 = arith.constant 0 : i32
    %498 = arith.cmpi ne, %497, %c0_i32_322 : i32
    scf.if %498 {
      %c1_i32_390 = arith.constant 1 : i32
      %602 = arith.addi %c4_i32_293, %c1_i32_390 : i32
      %603 = arith.index_cast %602 : i32 to index
      %c0_391 = arith.constant 0 : index
      %c0_392 = arith.constant 0 : index
      %604 = vector.load %arg2[%603, %c0_391, %c0_392] : memref<8x8x32xf32, #tpu.memory_space<vmem>>, vector<1x8x32xf32>
      %605 = vector.shape_cast %604 : vector<1x8x32xf32> to vector<8x32xf32>
      %c0_393 = arith.constant 0 : index
      %c0_394 = arith.constant 0 : index
      %606 = vector.load %arg13[%c0_393, %c0_394] : memref<8x32xf32, #tpu.memory_space<vmem>>, vector<8x32xf32>
      tpu.vector_store %arg13[%c0_393, %c0_394], %605 {strides = array<i32>} : memref<8x32xf32, #tpu.memory_space<vmem>>, vector<8x32xf32>,
    } else {
    }
    %499 = arith.index_cast %c4_i32_293 : i32 to index
    %500 = memref.load %arg0[%499] : memref<7xi32, #tpu.memory_space<smem>>
    %c0_i32_323 = arith.constant 0 : i32
    %501 = arith.cmpi eq, %500, %c0_i32_323 : i32
    %502 = arith.extui %501 : i1 to i32
    %c0_i32_324 = arith.constant 0 : i32
    %503 = arith.cmpi ne, %502, %c0_i32_324 : i32
    scf.if %503 {
      %602 = tpu.iota {dimensions = array<i32: 1>} : vector<8x128xi32>
      %cst_390 = arith.constant dense<0xFF800000> : vector<8xf32>
      %603 = vector.multi_reduction <maximumf>, %488, %cst_390 [1] : vector<8x128xf32> to vector<8xf32>
      %604 = vector.shape_cast %603 : vector<8xf32> to vector<8x1xf32>
      %605 = vector.broadcast %604 : vector<8x1xf32> to vector<8x128xf32>
      %606 = arith.cmpf oeq, %488, %605 : vector<8x128xf32>
      %c128_i32 = arith.constant 128 : i32
      %607 = vector.broadcast %c128_i32 : i32 to vector<8x128xi32>
      %608 = arith.select %606, %602, %607 : vector<8x128xi1>, vector<8x128xi32>
      %cst_391 = arith.constant dense<2147483647> : vector<8xi32>
      %609 = vector.multi_reduction <minsi>, %608, %cst_391 [1] : vector<8x128xi32> to vector<8xi32>
      %610 = vector.shape_cast %609 : vector<8xi32> to vector<8x1xi32>
      %611 = vector.broadcast %610 : vector<8x1xi32> to vector<8x128xi32>
      %612 = arith.cmpi eq, %602, %611 : vector<8x128xi32>
      %613 = arith.extui %612 : vector<8x128xi1> to vector<8x128xi32>
      %614 = arith.sitofp %613 : vector<8x128xi32> to vector<8x128xf32>
      %c0_392 = arith.constant 0 : index
      %c0_393 = arith.constant 0 : index
      %615 = vector.load %arg3[%c0_392, %c0_393] : memref<128x32xf32, #tpu.memory_space<vmem>>, vector<128x32xf32>
      %cst_394 = arith.constant dense<0.000000e+00> : vector<8x32xf32>
      %616 = tpu.matmul %614, %615, %cst_394 {dimension_numbers = #tpu.dot_dimension_numbers<[1], [0], [0], [1], [0, 0, 1, 1], [], []>} : vector<8x128xf32>, vector<128x32xf32>, vector<8x32xf32> -> vector<8x32xf32>
      %c0_395 = arith.constant 0 : index
      %c0_396 = arith.constant 0 : index
      %617 = vector.load %arg13[%c0_395, %c0_396] : memref<8x32xf32, #tpu.memory_space<vmem>>, vector<8x32xf32>
      tpu.vector_store %arg13[%c0_395, %c0_396], %616 {strides = array<i32>} : memref<8x32xf32, #tpu.memory_space<vmem>>, vector<8x32xf32>,
    } else {
    }
    %c5_i32_325 = arith.constant 5 : i32
    %c0_326 = arith.constant 0 : index
    %c0_327 = arith.constant 0 : index
    %504 = vector.load %arg13[%c0_326, %c0_327] : memref<8x32xf32, #tpu.memory_space<vmem>>, vector<8x32xf32>
    %c0_328 = arith.constant 0 : index
    %c0_329 = arith.constant 0 : index
    %505 = vector.load %arg14[%c0_328, %c0_329] : memref<8x32xf32, #tpu.memory_space<vmem>>, vector<8x32xf32>
    %c0_330 = arith.constant 0 : index
    %c0_331 = arith.constant 0 : index
    %506 = vector.load %arg15[%c0_330, %c0_331] : memref<8x32xf32, #tpu.memory_space<vmem>>, vector<8x32xf32>
    %c0_332 = arith.constant 0 : index
    %c0_333 = arith.constant 0 : index
    %507 = vector.load %arg7[%c0_332, %c0_333] : memref<32x128xf32, #tpu.memory_space<vmem>>, vector<32x128xf32>
    %c0_334 = arith.constant 0 : index
    %c0_335 = arith.constant 0 : index
    %508 = vector.load %arg8[%c0_334, %c0_335] : memref<32x128xf32, #tpu.memory_space<vmem>>, vector<32x128xf32>
    %c0_336 = arith.constant 0 : index
    %c0_337 = arith.constant 0 : index
    %509 = vector.load %arg9[%c0_336, %c0_337] : memref<1x128xf32, #tpu.memory_space<vmem>>, vector<1x128xf32>
    %cst_338 = arith.constant dense<0.000000e+00> : vector<8x128xf32>
    %510 = tpu.matmul %504, %507, %cst_338 {dimension_numbers = #tpu.dot_dimension_numbers<[1], [0], [0], [1], [0, 0, 1, 1], [], []>} : vector<8x32xf32>, vector<32x128xf32>, vector<8x128xf32> -> vector<8x128xf32>
    %cst_339 = arith.constant dense<0.000000e+00> : vector<8x128xf32>
    %511 = tpu.matmul %505, %508, %cst_339 {dimension_numbers = #tpu.dot_dimension_numbers<[1], [0], [0], [1], [0, 0, 1, 1], [], []>} : vector<8x32xf32>, vector<32x128xf32>, vector<8x128xf32> -> vector<8x128xf32>
    %512 = arith.addf %510, %511 : vector<8x128xf32>
    %513 = vector.broadcast %509 : vector<1x128xf32> to vector<8x128xf32>
    %514 = arith.addf %512, %513 : vector<8x128xf32>
    %515 = vector.extract_strided_slice %514 {offsets = [0, 0], sizes = [8, 96], strides = [1, 1]} : vector<8x128xf32> to vector<8x96xf32>
    %516 = arith.negf %515 : vector<8x96xf32>
    %517 = math.exp %516 : vector<8x96xf32>
    %cst_340 = arith.constant 1.000000e+00 : f32
    %518 = vector.broadcast %cst_340 : f32 to vector<8x96xf32>
    %519 = arith.addf %518, %517 : vector<8x96xf32>
    %520 = arith.divf %518, %519 : vector<8x96xf32>
    %521 = vector.extract_strided_slice %520 {offsets = [0, 0], sizes = [8, 32], strides = [1, 1]} : vector<8x96xf32> to vector<8x32xf32>
    %522 = vector.extract_strided_slice %520 {offsets = [0, 32], sizes = [8, 32], strides = [1, 1]} : vector<8x96xf32> to vector<8x32xf32>
    %523 = vector.extract_strided_slice %520 {offsets = [0, 64], sizes = [8, 32], strides = [1, 1]} : vector<8x96xf32> to vector<8x32xf32>
    %524 = vector.extract_strided_slice %514 {offsets = [0, 96], sizes = [8, 32], strides = [1, 1]} : vector<8x128xf32> to vector<8x32xf32>
    %525 = math.tanh %524 : vector<8x32xf32>
    %526 = arith.mulf %522, %506 : vector<8x32xf32>
    %527 = arith.mulf %521, %525 : vector<8x32xf32>
    %528 = arith.addf %526, %527 : vector<8x32xf32>
    %529 = math.tanh %528 : vector<8x32xf32>
    %530 = arith.mulf %523, %529 : vector<8x32xf32>
    %c0_341 = arith.constant 0 : index
    %c0_342 = arith.constant 0 : index
    %531 = vector.load %arg14[%c0_341, %c0_342] : memref<8x32xf32, #tpu.memory_space<vmem>>, vector<8x32xf32>
    tpu.vector_store %arg14[%c0_341, %c0_342], %530 {strides = array<i32>} : memref<8x32xf32, #tpu.memory_space<vmem>>, vector<8x32xf32>,
    %c0_343 = arith.constant 0 : index
    %c0_344 = arith.constant 0 : index
    %532 = vector.load %arg15[%c0_343, %c0_344] : memref<8x32xf32, #tpu.memory_space<vmem>>, vector<8x32xf32>
    tpu.vector_store %arg15[%c0_343, %c0_344], %528 {strides = array<i32>} : memref<8x32xf32, #tpu.memory_space<vmem>>, vector<8x32xf32>,
    %c0_345 = arith.constant 0 : index
    %c0_346 = arith.constant 0 : index
    %533 = vector.load %arg10[%c0_345, %c0_346] : memref<32x128xf32, #tpu.memory_space<vmem>>, vector<32x128xf32>
    %cst_347 = arith.constant dense<0.000000e+00> : vector<8x128xf32>
    %534 = tpu.matmul %530, %533, %cst_347 {dimension_numbers = #tpu.dot_dimension_numbers<[1], [0], [0], [1], [0, 0, 1, 1], [], []>} : vector<8x32xf32>, vector<32x128xf32>, vector<8x128xf32> -> vector<8x128xf32>
    %c0_348 = arith.constant 0 : index
    %c0_349 = arith.constant 0 : index
    %535 = vector.load %arg11[%c0_348, %c0_349] : memref<1x128xf32, #tpu.memory_space<vmem>>, vector<1x128xf32>
    %536 = vector.broadcast %535 : vector<1x128xf32> to vector<8x128xf32>
    %537 = arith.addf %534, %536 : vector<8x128xf32>
    %c1_i32_350 = arith.constant 1 : i32
    %538 = arith.addi %c5_i32_325, %c1_i32_350 : i32
    %539 = arith.index_cast %538 : i32 to index
    %c0_351 = arith.constant 0 : index
    %c0_352 = arith.constant 0 : index
    %540 = vector.load %arg12[%539, %c0_351, %c0_352] : memref<8x8x128xf32, #tpu.memory_space<vmem>>, vector<1x8x128xf32>
    %541 = vector.shape_cast %540 : vector<1x8x128xf32> to vector<8x128xf32>
    %542 = vector.shape_cast %537 : vector<8x128xf32> to vector<1x8x128xf32>
    tpu.vector_store %arg12[%539, %c0_351, %c0_352], %542 {strides = array<i32>} : memref<8x8x128xf32, #tpu.memory_space<vmem>>, vector<1x8x128xf32>,
    %543 = arith.index_cast %c5_i32_325 : i32 to index
    %544 = memref.load %arg0[%543] : memref<7xi32, #tpu.memory_space<smem>>
    %c1_i32_353 = arith.constant 1 : i32
    %545 = arith.cmpi eq, %544, %c1_i32_353 : i32
    %546 = arith.extui %545 : i1 to i32
    %c0_i32_354 = arith.constant 0 : i32
    %547 = arith.cmpi ne, %546, %c0_i32_354 : i32
    scf.if %547 {
      %c1_i32_390 = arith.constant 1 : i32
      %602 = arith.addi %c5_i32_325, %c1_i32_390 : i32
      %603 = arith.index_cast %602 : i32 to index
      %c0_391 = arith.constant 0 : index
      %c0_392 = arith.constant 0 : index
      %604 = vector.load %arg2[%603, %c0_391, %c0_392] : memref<8x8x32xf32, #tpu.memory_space<vmem>>, vector<1x8x32xf32>
      %605 = vector.shape_cast %604 : vector<1x8x32xf32> to vector<8x32xf32>
      %c0_393 = arith.constant 0 : index
      %c0_394 = arith.constant 0 : index
      %606 = vector.load %arg13[%c0_393, %c0_394] : memref<8x32xf32, #tpu.memory_space<vmem>>, vector<8x32xf32>
      tpu.vector_store %arg13[%c0_393, %c0_394], %605 {strides = array<i32>} : memref<8x32xf32, #tpu.memory_space<vmem>>, vector<8x32xf32>,
    } else {
    }
    %548 = arith.index_cast %c5_i32_325 : i32 to index
    %549 = memref.load %arg0[%548] : memref<7xi32, #tpu.memory_space<smem>>
    %c0_i32_355 = arith.constant 0 : i32
    %550 = arith.cmpi eq, %549, %c0_i32_355 : i32
    %551 = arith.extui %550 : i1 to i32
    %c0_i32_356 = arith.constant 0 : i32
    %552 = arith.cmpi ne, %551, %c0_i32_356 : i32
    scf.if %552 {
      %602 = tpu.iota {dimensions = array<i32: 1>} : vector<8x128xi32>
      %cst_390 = arith.constant dense<0xFF800000> : vector<8xf32>
      %603 = vector.multi_reduction <maximumf>, %537, %cst_390 [1] : vector<8x128xf32> to vector<8xf32>
      %604 = vector.shape_cast %603 : vector<8xf32> to vector<8x1xf32>
      %605 = vector.broadcast %604 : vector<8x1xf32> to vector<8x128xf32>
      %606 = arith.cmpf oeq, %537, %605 : vector<8x128xf32>
      %c128_i32 = arith.constant 128 : i32
      %607 = vector.broadcast %c128_i32 : i32 to vector<8x128xi32>
      %608 = arith.select %606, %602, %607 : vector<8x128xi1>, vector<8x128xi32>
      %cst_391 = arith.constant dense<2147483647> : vector<8xi32>
      %609 = vector.multi_reduction <minsi>, %608, %cst_391 [1] : vector<8x128xi32> to vector<8xi32>
      %610 = vector.shape_cast %609 : vector<8xi32> to vector<8x1xi32>
      %611 = vector.broadcast %610 : vector<8x1xi32> to vector<8x128xi32>
      %612 = arith.cmpi eq, %602, %611 : vector<8x128xi32>
      %613 = arith.extui %612 : vector<8x128xi1> to vector<8x128xi32>
      %614 = arith.sitofp %613 : vector<8x128xi32> to vector<8x128xf32>
      %c0_392 = arith.constant 0 : index
      %c0_393 = arith.constant 0 : index
      %615 = vector.load %arg3[%c0_392, %c0_393] : memref<128x32xf32, #tpu.memory_space<vmem>>, vector<128x32xf32>
      %cst_394 = arith.constant dense<0.000000e+00> : vector<8x32xf32>
      %616 = tpu.matmul %614, %615, %cst_394 {dimension_numbers = #tpu.dot_dimension_numbers<[1], [0], [0], [1], [0, 0, 1, 1], [], []>} : vector<8x128xf32>, vector<128x32xf32>, vector<8x32xf32> -> vector<8x32xf32>
      %c0_395 = arith.constant 0 : index
      %c0_396 = arith.constant 0 : index
      %617 = vector.load %arg13[%c0_395, %c0_396] : memref<8x32xf32, #tpu.memory_space<vmem>>, vector<8x32xf32>
      tpu.vector_store %arg13[%c0_395, %c0_396], %616 {strides = array<i32>} : memref<8x32xf32, #tpu.memory_space<vmem>>, vector<8x32xf32>,
    } else {
    }
    %c6_i32_357 = arith.constant 6 : i32
    %c0_358 = arith.constant 0 : index
    %c0_359 = arith.constant 0 : index
    %553 = vector.load %arg13[%c0_358, %c0_359] : memref<8x32xf32, #tpu.memory_space<vmem>>, vector<8x32xf32>
    %c0_360 = arith.constant 0 : index
    %c0_361 = arith.constant 0 : index
    %554 = vector.load %arg14[%c0_360, %c0_361] : memref<8x32xf32, #tpu.memory_space<vmem>>, vector<8x32xf32>
    %c0_362 = arith.constant 0 : index
    %c0_363 = arith.constant 0 : index
    %555 = vector.load %arg15[%c0_362, %c0_363] : memref<8x32xf32, #tpu.memory_space<vmem>>, vector<8x32xf32>
    %c0_364 = arith.constant 0 : index
    %c0_365 = arith.constant 0 : index
    %556 = vector.load %arg7[%c0_364, %c0_365] : memref<32x128xf32, #tpu.memory_space<vmem>>, vector<32x128xf32>
    %c0_366 = arith.constant 0 : index
    %c0_367 = arith.constant 0 : index
    %557 = vector.load %arg8[%c0_366, %c0_367] : memref<32x128xf32, #tpu.memory_space<vmem>>, vector<32x128xf32>
    %c0_368 = arith.constant 0 : index
    %c0_369 = arith.constant 0 : index
    %558 = vector.load %arg9[%c0_368, %c0_369] : memref<1x128xf32, #tpu.memory_space<vmem>>, vector<1x128xf32>
    %cst_370 = arith.constant dense<0.000000e+00> : vector<8x128xf32>
    %559 = tpu.matmul %553, %556, %cst_370 {dimension_numbers = #tpu.dot_dimension_numbers<[1], [0], [0], [1], [0, 0, 1, 1], [], []>} : vector<8x32xf32>, vector<32x128xf32>, vector<8x128xf32> -> vector<8x128xf32>
    %cst_371 = arith.constant dense<0.000000e+00> : vector<8x128xf32>
    %560 = tpu.matmul %554, %557, %cst_371 {dimension_numbers = #tpu.dot_dimension_numbers<[1], [0], [0], [1], [0, 0, 1, 1], [], []>} : vector<8x32xf32>, vector<32x128xf32>, vector<8x128xf32> -> vector<8x128xf32>
    %561 = arith.addf %559, %560 : vector<8x128xf32>
    %562 = vector.broadcast %558 : vector<1x128xf32> to vector<8x128xf32>
    %563 = arith.addf %561, %562 : vector<8x128xf32>
    %564 = vector.extract_strided_slice %563 {offsets = [0, 0], sizes = [8, 96], strides = [1, 1]} : vector<8x128xf32> to vector<8x96xf32>
    %565 = arith.negf %564 : vector<8x96xf32>
    %566 = math.exp %565 : vector<8x96xf32>
    %cst_372 = arith.constant 1.000000e+00 : f32
    %567 = vector.broadcast %cst_372 : f32 to vector<8x96xf32>
    %568 = arith.addf %567, %566 : vector<8x96xf32>
    %569 = arith.divf %567, %568 : vector<8x96xf32>
    %570 = vector.extract_strided_slice %569 {offsets = [0, 0], sizes = [8, 32], strides = [1, 1]} : vector<8x96xf32> to vector<8x32xf32>
    %571 = vector.extract_strided_slice %569 {offsets = [0, 32], sizes = [8, 32], strides = [1, 1]} : vector<8x96xf32> to vector<8x32xf32>
    %572 = vector.extract_strided_slice %569 {offsets = [0, 64], sizes = [8, 32], strides = [1, 1]} : vector<8x96xf32> to vector<8x32xf32>
    %573 = vector.extract_strided_slice %563 {offsets = [0, 96], sizes = [8, 32], strides = [1, 1]} : vector<8x128xf32> to vector<8x32xf32>
    %574 = math.tanh %573 : vector<8x32xf32>
    %575 = arith.mulf %571, %555 : vector<8x32xf32>
    %576 = arith.mulf %570, %574 : vector<8x32xf32>
    %577 = arith.addf %575, %576 : vector<8x32xf32>
    %578 = math.tanh %577 : vector<8x32xf32>
    %579 = arith.mulf %572, %578 : vector<8x32xf32>
    %c0_373 = arith.constant 0 : index
    %c0_374 = arith.constant 0 : index
    %580 = vector.load %arg14[%c0_373, %c0_374] : memref<8x32xf32, #tpu.memory_space<vmem>>, vector<8x32xf32>
    tpu.vector_store %arg14[%c0_373, %c0_374], %579 {strides = array<i32>} : memref<8x32xf32, #tpu.memory_space<vmem>>, vector<8x32xf32>,
    %c0_375 = arith.constant 0 : index
    %c0_376 = arith.constant 0 : index
    %581 = vector.load %arg15[%c0_375, %c0_376] : memref<8x32xf32, #tpu.memory_space<vmem>>, vector<8x32xf32>
    tpu.vector_store %arg15[%c0_375, %c0_376], %577 {strides = array<i32>} : memref<8x32xf32, #tpu.memory_space<vmem>>, vector<8x32xf32>,
    %c0_377 = arith.constant 0 : index
    %c0_378 = arith.constant 0 : index
    %582 = vector.load %arg10[%c0_377, %c0_378] : memref<32x128xf32, #tpu.memory_space<vmem>>, vector<32x128xf32>
    %cst_379 = arith.constant dense<0.000000e+00> : vector<8x128xf32>
    %583 = tpu.matmul %579, %582, %cst_379 {dimension_numbers = #tpu.dot_dimension_numbers<[1], [0], [0], [1], [0, 0, 1, 1], [], []>} : vector<8x32xf32>, vector<32x128xf32>, vector<8x128xf32> -> vector<8x128xf32>
    %c0_380 = arith.constant 0 : index
    %c0_381 = arith.constant 0 : index
    %584 = vector.load %arg11[%c0_380, %c0_381] : memref<1x128xf32, #tpu.memory_space<vmem>>, vector<1x128xf32>
    %585 = vector.broadcast %584 : vector<1x128xf32> to vector<8x128xf32>
    %586 = arith.addf %583, %585 : vector<8x128xf32>
    %c1_i32_382 = arith.constant 1 : i32
    %587 = arith.addi %c6_i32_357, %c1_i32_382 : i32
    %588 = arith.index_cast %587 : i32 to index
    %c0_383 = arith.constant 0 : index
    %c0_384 = arith.constant 0 : index
    %589 = vector.load %arg12[%588, %c0_383, %c0_384] : memref<8x8x128xf32, #tpu.memory_space<vmem>>, vector<1x8x128xf32>
    %590 = vector.shape_cast %589 : vector<1x8x128xf32> to vector<8x128xf32>
    %591 = vector.shape_cast %586 : vector<8x128xf32> to vector<1x8x128xf32>
    tpu.vector_store %arg12[%588, %c0_383, %c0_384], %591 {strides = array<i32>} : memref<8x8x128xf32, #tpu.memory_space<vmem>>, vector<1x8x128xf32>,
    %592 = arith.index_cast %c6_i32_357 : i32 to index
    %593 = memref.load %arg0[%592] : memref<7xi32, #tpu.memory_space<smem>>
    %c1_i32_385 = arith.constant 1 : i32
    %594 = arith.cmpi eq, %593, %c1_i32_385 : i32
    %595 = arith.extui %594 : i1 to i32
    %c0_i32_386 = arith.constant 0 : i32
    %596 = arith.cmpi ne, %595, %c0_i32_386 : i32
    scf.if %596 {
      %c1_i32_390 = arith.constant 1 : i32
      %602 = arith.addi %c6_i32_357, %c1_i32_390 : i32
      %603 = arith.index_cast %602 : i32 to index
      %c0_391 = arith.constant 0 : index
      %c0_392 = arith.constant 0 : index
      %604 = vector.load %arg2[%603, %c0_391, %c0_392] : memref<8x8x32xf32, #tpu.memory_space<vmem>>, vector<1x8x32xf32>
      %605 = vector.shape_cast %604 : vector<1x8x32xf32> to vector<8x32xf32>
      %c0_393 = arith.constant 0 : index
      %c0_394 = arith.constant 0 : index
      %606 = vector.load %arg13[%c0_393, %c0_394] : memref<8x32xf32, #tpu.memory_space<vmem>>, vector<8x32xf32>
      tpu.vector_store %arg13[%c0_393, %c0_394], %605 {strides = array<i32>} : memref<8x32xf32, #tpu.memory_space<vmem>>, vector<8x32xf32>,
    } else {
    }
    %597 = arith.index_cast %c6_i32_357 : i32 to index
    %598 = memref.load %arg0[%597] : memref<7xi32, #tpu.memory_space<smem>>
    %c0_i32_387 = arith.constant 0 : i32
    %599 = arith.cmpi eq, %598, %c0_i32_387 : i32
    %600 = arith.extui %599 : i1 to i32
    %c0_i32_388 = arith.constant 0 : i32
    %601 = arith.cmpi ne, %600, %c0_i32_388 : i32
    scf.if %601 {
      %602 = tpu.iota {dimensions = array<i32: 1>} : vector<8x128xi32>
      %cst_390 = arith.constant dense<0xFF800000> : vector<8xf32>
      %603 = vector.multi_reduction <maximumf>, %586, %cst_390 [1] : vector<8x128xf32> to vector<8xf32>
      %604 = vector.shape_cast %603 : vector<8xf32> to vector<8x1xf32>
      %605 = vector.broadcast %604 : vector<8x1xf32> to vector<8x128xf32>
      %606 = arith.cmpf oeq, %586, %605 : vector<8x128xf32>
      %c128_i32 = arith.constant 128 : i32
      %607 = vector.broadcast %c128_i32 : i32 to vector<8x128xi32>
      %608 = arith.select %606, %602, %607 : vector<8x128xi1>, vector<8x128xi32>
      %cst_391 = arith.constant dense<2147483647> : vector<8xi32>
      %609 = vector.multi_reduction <minsi>, %608, %cst_391 [1] : vector<8x128xi32> to vector<8xi32>
      %610 = vector.shape_cast %609 : vector<8xi32> to vector<8x1xi32>
      %611 = vector.broadcast %610 : vector<8x1xi32> to vector<8x128xi32>
      %612 = arith.cmpi eq, %602, %611 : vector<8x128xi32>
      %613 = arith.extui %612 : vector<8x128xi1> to vector<8x128xi32>
      %614 = arith.sitofp %613 : vector<8x128xi32> to vector<8x128xf32>
      %c0_392 = arith.constant 0 : index
      %c0_393 = arith.constant 0 : index
      %615 = vector.load %arg3[%c0_392, %c0_393] : memref<128x32xf32, #tpu.memory_space<vmem>>, vector<128x32xf32>
      %cst_394 = arith.constant dense<0.000000e+00> : vector<8x32xf32>
      %616 = tpu.matmul %614, %615, %cst_394 {dimension_numbers = #tpu.dot_dimension_numbers<[1], [0], [0], [1], [0, 0, 1, 1], [], []>} : vector<8x128xf32>, vector<128x32xf32>, vector<8x32xf32> -> vector<8x32xf32>
      %c0_395 = arith.constant 0 : index
      %c0_396 = arith.constant 0 : index
      %617 = vector.load %arg13[%c0_395, %c0_396] : memref<8x32xf32, #tpu.memory_space<vmem>>, vector<8x32xf32>
      tpu.vector_store %arg13[%c0_395, %c0_396], %616 {strides = array<i32>} : memref<8x32xf32, #tpu.memory_space<vmem>>, vector<8x32xf32>,
    } else {
    }
    %c7_i32_389 = arith.constant 7 : i32
    return
  }
}

</mosaic_0001>

<llo_original>
// kernel: seq2seq_forward.1
$region0: #{seq2seq_forward.1}
  #allocation0 [shape = 'u32[]', space=smem, size = 0x4, offset = 0x4, fixed_abs, tag = 'smem constant byte address 0x4 - core index']
  #allocation1 [shape = 'u32[144,128]{1,0:T(1,128)}', space=vmem, size = 0x12000, scoped, tag = 'internal scratch']
  #allocation2 [shape = 'f32[8,32]{1,0:T(8,128)}', space=vmem, size = 0x1000, scoped, tag = 'scratch operand']
  #allocation3 [shape = 'f32[8,32]{1,0:T(8,128)}', space=vmem, size = 0x1000, scoped, tag = 'scratch operand']
  #allocation4 [shape = 'f32[8,32]{1,0:T(8,128)}', space=vmem, size = 0x1000, scoped, tag = 'scratch operand']
  %s0 = inlined_call_operand.vmem [shape: s32[7], index: 0, kind: input, shape index: {}]
  %s1 = inlined_call_operand.vmem [shape: f32[8,8,32], index: 1, kind: input, shape index: {}]
  %s2 = inlined_call_operand.vmem [shape: f32[8,8,32], index: 2, kind: input, shape index: {}]
  %s3 = inlined_call_operand.vmem [shape: f32[128,32], index: 3, kind: input, shape index: {}]
  %s4 = inlined_call_operand.vmem [shape: f32[32,128], index: 4, kind: input, shape index: {}]
  %s5 = inlined_call_operand.vmem [shape: f32[32,128], index: 5, kind: input, shape index: {}]
  %s6 = inlined_call_operand.vmem [shape: f32[1,128], index: 6, kind: input, shape index: {}]
  %s7 = inlined_call_operand.vmem [shape: f32[32,128], index: 7, kind: input, shape index: {}]
  %s8 = inlined_call_operand.vmem [shape: f32[32,128], index: 8, kind: input, shape index: {}]
  %s9 = inlined_call_operand.vmem [shape: f32[1,128], index: 9, kind: input, shape index: {}]
  %s10 = inlined_call_operand.vmem [shape: f32[32,128], index: 10, kind: input, shape index: {}]
  %s11 = inlined_call_operand.vmem [shape: f32[1,128], index: 11, kind: input, shape index: {}]
  %s12 = inlined_call_operand.hbm [shape: f32[8,8,128], index: 12, kind: output, shape index: {}]
  %s13 = sld [smem:[#allocation0]]
  $region118: #{seq2seq_forward.1} parent=0
    _
  %s15 = ssub.s32 1, %s13
  %s16 = scalar_select 0, %s15, %s13
  $region1: #{seq2seq_forward.1} parent=0
    #allocation5 [shape = 'u8[512]{0}', space=smem, size = 0x200, scoped, tag = 'input window, operand 0, single buffered']
    #allocation6 [shape = 's32[1]{0}', space=sflag, size = 0x4, scoped, tag = 'scoped memory for seq2seq_forward.1']
    #allocation7 [shape = 's32[1]{0}', space=sflag, size = 0x4, scoped, tag = 'scoped memory for seq2seq_forward.1']
    #allocation8 [shape = 'u8[32768]{0}', space=vmem, size = 0x8000, scoped, tag = 'output window, operand 0, single buffered']
    %17 = vsyncpa [#allocation7], 0
    %18 = vsyncpa [#allocation6], 0
    // Predicated region
    $region2: #{seq2seq_forward.1} parent=1 // pred_check
      _
    $region3: #{seq2seq_forward.1} parent=1 // pred_check_branch
      %20 = sbr.rel (0) target = $region5
    $region4: #{seq2seq_forward.1} parent=1 // pred_region
      %s22 = ssub.s32 16, 16
      %23 = vsyncadd [#allocation7], %s22
      %s25 = sshll.u32 %s0, 4
      %s26 = int_to_ptr.vmem [resolvable:$true] %s25
      %28 = dma.vmem_to_smem %s26, 16, [#allocation5], [#allocation7]
    $region5: #{seq2seq_forward.1} parent=1 // pred_fallthru
      _
    // Predicated region
    $region6: #{seq2seq_forward.1} parent=1 // pred_check
      _
    $region7: #{seq2seq_forward.1} parent=1 // pred_check_branch
      %30 = sbr.rel (0) target = $region9
    $region8: #{seq2seq_forward.1} parent=1 // pred_region
      _
    $region9: #{seq2seq_forward.1} parent=1 // pred_fallthru
      _
    // Predicated region
    $region10: #{seq2seq_forward.1} parent=1 // pred_check
      _
    $region11: #{seq2seq_forward.1} parent=1 // pred_check_branch
      %32 = sbr.rel (0) target = $region13
    $region12: #{seq2seq_forward.1} parent=1 // pred_region
      _
    $region13: #{seq2seq_forward.1} parent=1 // pred_fallthru
      _
    // Predicated region
    $region14: #{seq2seq_forward.1} parent=1 // pred_check
      _
    $region15: #{seq2seq_forward.1} parent=1 // pred_check_branch
      %34 = sbr.rel (0) target = $region17
    $region16: #{seq2seq_forward.1} parent=1 // pred_region
      _
    $region17: #{seq2seq_forward.1} parent=1 // pred_fallthru
      _
    // Predicated region
    $region18: #{seq2seq_forward.1} parent=1 // pred_check
      _
    $region19: #{seq2seq_forward.1} parent=1 // pred_check_branch
      %36 = sbr.rel (0) target = $region21
    $region20: #{seq2seq_forward.1} parent=1 // pred_region
      _
    $region21: #{seq2seq_forward.1} parent=1 // pred_fallthru
      _
    // Predicated region
    $region22: #{seq2seq_forward.1} parent=1 // pred_check
      _
    $region23: #{seq2seq_forward.1} parent=1 // pred_check_branch
      %38 = sbr.rel (0) target = $region25
    $region24: #{seq2seq_forward.1} parent=1 // pred_region
      _
    $region25: #{seq2seq_forward.1} parent=1 // pred_fallthru
      _
    // Predicated region
    $region26: #{seq2seq_forward.1} parent=1 // pred_check
      _
    $region27: #{seq2seq_forward.1} parent=1 // pred_check_branch
      %40 = sbr.rel (0) target = $region29
    $region28: #{seq2seq_forward.1} parent=1 // pred_region
      _
    $region29: #{seq2seq_forward.1} parent=1 // pred_fallthru
      _
    // Predicated region
    $region30: #{seq2seq_forward.1} parent=1 // pred_check
      _
    $region31: #{seq2seq_forward.1} parent=1 // pred_check_branch
      %42 = sbr.rel (0) target = $region33
    $region32: #{seq2seq_forward.1} parent=1 // pred_region
      _
    $region33: #{seq2seq_forward.1} parent=1 // pred_fallthru
      _
    // Predicated region
    $region34: #{seq2seq_forward.1} parent=1 // pred_check
      _
    $region35: #{seq2seq_forward.1} parent=1 // pred_check_branch
      %44 = sbr.rel (0) target = $region37
    $region36: #{seq2seq_forward.1} parent=1 // pred_region
      _
    $region37: #{seq2seq_forward.1} parent=1 // pred_fallthru
      _
    // Predicated region
    $region38: #{seq2seq_forward.1} parent=1 // pred_check
      _
    $region39: #{seq2seq_forward.1} parent=1 // pred_check_branch
      %46 = sbr.rel (0) target = $region41
    $region40: #{seq2seq_forward.1} parent=1 // pred_region
      _
    $region41: #{seq2seq_forward.1} parent=1 // pred_fallthru
      _
    // Predicated region
    $region42: #{seq2seq_forward.1} parent=1 // pred_check
      _
    $region43: #{seq2seq_forward.1} parent=1 // pred_check_branch
      %48 = sbr.rel (0) target = $region45
    $region44: #{seq2seq_forward.1} parent=1 // pred_region
      _
    $region45: #{seq2seq_forward.1} parent=1 // pred_fallthru
      _
    // Predicated region
    $region46: #{seq2seq_forward.1} parent=1 // pred_check
      _
    $region47: #{seq2seq_forward.1} parent=1 // pred_check_branch
      %50 = sbr.rel (0) target = $region49
    $region48: #{seq2seq_forward.1} parent=1 // pred_region
      _
    $region49: #{seq2seq_forward.1} parent=1 // pred_fallthru
      _
    // Predicated region
    $region50: #{seq2seq_forward.1} parent=1 // pred_check
      _
    $region51: #{seq2seq_forward.1} parent=1 // pred_check_branch
      %52 = sbr.rel (0) target = $region53
    $region52: #{seq2seq_forward.1} parent=1 // pred_region
      %53 = dma.done [#allocation7], 16
    $region53: #{seq2seq_forward.1} parent=1 // pred_fallthru
      _
    %54 = sfence
    %55 = vst [vmem:[#allocation8] sm:$0xff] 0.0
    %vm56 = vcmask 261120
    %57 = vst.msk [vmem:[#allocation3] sm:$0xff] %vm56, 0.0
    %58 = vst.msk [vmem:[#allocation4] sm:$0xff] %vm56, 0.0
    %v59 = vld [vmem:[%s1] sm:$0xff]
    %v60 = vld [vmem:[#allocation3] sm:$0xff]
    %v61 = vld [vmem:[#allocation4] sm:$0xff]
    %v62 = vld [vmem:[%s4] sm:$0xff]
    %v63 = vld [vmem:[%s4 + $0x8] sm:$0xff]
    %v64 = vld [vmem:[%s4 + $0x10] sm:$0xff]
    %v65 = vld [vmem:[%s4 + $0x18] sm:$0xff]
    %v66 = vld [vmem:[%s5] sm:$0xff]
    %v67 = vld [vmem:[%s5 + $0x8] sm:$0xff]
    %v68 = vld [vmem:[%s5 + $0x10] sm:$0xff]
    %v69 = vld [vmem:[%s5 + $0x18] sm:$0xff]
    %v70 = vld [vmem:[%s6] sm:$0x1]
    %v72 = vsel %vm56, %v60, 0
    %74 = vmatprep.subr.mxu0 0.0
    %75 = vmatpush1.msra.mxu0 0.0
    %76 = vmatprep.subr.mxu0 0.0
    %77 = vmatpush1.msra.mxu0 0.0
    %78 = vmatprep.subr.mxu0 0.0
    %79 = vmatpush1.msra.mxu0 0.0
    %80 = vmatprep.subr.mxu0 0.0
    %81 = vmatpush1.msra.mxu0 0.0
    %82 = vmatprep.subr.mxu0 0.0
    %83 = vmatpush1.msra.mxu0 0.0
    %84 = vmatprep.subr.mxu0 0.0
    %85 = vmatpush1.msra.mxu0 0.0
    %86 = vmatprep.subr.mxu0 0.0
    %87 = vmatpush1.msra.mxu0 0.0
    %88 = vmatprep.subr.mxu0 0.0
    %89 = vmatpush1.msra.mxu0 0.0
    %90 = vmatprep.subr.mxu0 0.0
    %91 = vmatpush1.msra.mxu0 0.0
    %92 = vmatprep.subr.mxu0 0.0
    %93 = vmatpush1.msra.mxu0 0.0
    %94 = vmatprep.subr.mxu0 0.0
    %95 = vmatpush1.msra.mxu0 0.0
    %96 = vmatprep.subr.mxu0 0.0
    %97 = vmatpush1.msra.mxu0 0.0
    %98 = vmatprep.subr.mxu0 0.0
    %99 = vmatpush1.msra.mxu0 %v69
    %100 = vmatprep.subr.mxu0 0.0
    %101 = vmatpush1.msra.mxu0 %v68
    %102 = vmatprep.subr.mxu0 0.0
    %103 = vmatpush1.msra.mxu0 %v67
    %104 = vmatprep.subr.mxu0 0.0
    %105 = vmatpush1.msra.mxu0 %v66
    %106 = vmatprep.subr.mxu0 0.0
    %107 = vmatpush2.msra.mxu0 0.0
    %108 = vmatprep.subr.mxu0 0.0
    %109 = vmatpush2.msra.mxu0 0.0
    %110 = vmatprep.subr.mxu0 0.0
    %111 = vmatpush2.msra.mxu0 0.0
    %112 = vmatprep.subr.mxu0 0.0
    %113 = vmatpush2.msra.mxu0 0.0
    %114 = vmatprep.subr.mxu0 0.0
    %115 = vmatpush2.msra.mxu0 0.0
    %116 = vmatprep.subr.mxu0 0.0
    %117 = vmatpush2.msra.mxu0 0.0
    %118 = vmatprep.subr.mxu0 0.0
    %119 = vmatpush2.msra.mxu0 0.0
    %120 = vmatprep.subr.mxu0 0.0
    %121 = vmatpush2.msra.mxu0 0.0
    %122 = vmatprep.subr.mxu0 0.0
    %123 = vmatpush2.msra.mxu0 0.0
    %124 = vmatprep.subr.mxu0 0.0
    %125 = vmatpush2.msra.mxu0 0.0
    %126 = vmatprep.subr.mxu0 0.0
    %127 = vmatpush2.msra.mxu0 0.0
    %128 = vmatprep.subr.mxu0 0.0
    %129 = vmatpush2.msra.mxu0 0.0
    %130 = vmatprep.subr.mxu0 0.0
    %131 = vmatpush2.msra.mxu0 0.0
    %132 = vmatprep.subr.mxu0 0.0
    %133 = vmatpush2.msra.mxu0 0.0
    %134 = vmatprep.subr.mxu0 0.0
    %135 = vmatpush2.msra.mxu0 0.0
    %136 = vmatprep.subr.mxu0 0.0
    %137 = vmatpush2.msra.mxu0 0.0
    %138 = vmatprep.mubr.f32.mxu0 0.0
    %139 = vmatmul.mubr.f32.gmra.mxu0 %v72
    %v140 = vpop.f32.mrf.mxu0
    %v141 = vadd.f32 0.0, %v140
    %v142 = vpop.f32.mrf.mxu0
    %143 = vdwg.mxu0
    %v145 = vsel %vm56, %v59, 0
    %147 = vmatprep.subr.mxu0 0.0
    %148 = vmatpush1.msra.mxu0 0.0
    %149 = vmatprep.subr.mxu0 0.0
    %150 = vmatpush1.msra.mxu0 0.0
    %151 = vmatprep.subr.mxu0 0.0
    %152 = vmatpush1.msra.mxu0 0.0
    %153 = vmatprep.subr.mxu0 0.0
    %154 = vmatpush1.msra.mxu0 0.0
    %155 = vmatprep.subr.mxu0 0.0
    %156 = vmatpush1.msra.mxu0 0.0
    %157 = vmatprep.subr.mxu0 0.0
    %158 = vmatpush1.msra.mxu0 0.0
    %159 = vmatprep.subr.mxu0 0.0
    %160 = vmatpush1.msra.mxu0 0.0
    %161 = vmatprep.subr.mxu0 0.0
    %162 = vmatpush1.msra.mxu0 0.0
    %163 = vmatprep.subr.mxu0 0.0
    %164 = vmatpush1.msra.mxu0 0.0
    %165 = vmatprep.subr.mxu0 0.0
    %166 = vmatpush1.msra.mxu0 0.0
    %167 = vmatprep.subr.mxu0 0.0
    %168 = vmatpush1.msra.mxu0 0.0
    %169 = vmatprep.subr.mxu0 0.0
    %170 = vmatpush1.msra.mxu0 0.0
    %171 = vmatprep.subr.mxu0 0.0
    %172 = vmatpush1.msra.mxu0 %v65
    %173 = vmatprep.subr.mxu0 0.0
    %174 = vmatpush1.msra.mxu0 %v64
    %175 = vmatprep.subr.mxu0 0.0
    %176 = vmatpush1.msra.mxu0 %v63
    %177 = vmatprep.subr.mxu0 0.0
    %178 = vmatpush1.msra.mxu0 %v62
    %179 = vmatprep.subr.mxu0 0.0
    %180 = vmatpush2.msra.mxu0 0.0
    %181 = vmatprep.subr.mxu0 0.0
    %182 = vmatpush2.msra.mxu0 0.0
    %183 = vmatprep.subr.mxu0 0.0
    %184 = vmatpush2.msra.mxu0 0.0
    %185 = vmatprep.subr.mxu0 0.0
    %186 = vmatpush2.msra.mxu0 0.0
    %187 = vmatprep.subr.mxu0 0.0
    %188 = vmatpush2.msra.mxu0 0.0
    %189 = vmatprep.subr.mxu0 0.0
    %190 = vmatpush2.msra.mxu0 0.0
    %191 = vmatprep.subr.mxu0 0.0
    %192 = vmatpush2.msra.mxu0 0.0
    %193 = vmatprep.subr.mxu0 0.0
    %194 = vmatpush2.msra.mxu0 0.0
    %195 = vmatprep.subr.mxu0 0.0
    %196 = vmatpush2.msra.mxu0 0.0
    %197 = vmatprep.subr.mxu0 0.0
    %198 = vmatpush2.msra.mxu0 0.0
    %199 = vmatprep.subr.mxu0 0.0
    %200 = vmatpush2.msra.mxu0 0.0
    %201 = vmatprep.subr.mxu0 0.0
    %202 = vmatpush2.msra.mxu0 0.0
    %203 = vmatprep.subr.mxu0 0.0
    %204 = vmatpush2.msra.mxu0 0.0
    %205 = vmatprep.subr.mxu0 0.0
    %206 = vmatpush2.msra.mxu0 0.0
    %207 = vmatprep.subr.mxu0 0.0
    %208 = vmatpush2.msra.mxu0 0.0
    %209 = vmatprep.subr.mxu0 0.0
    %210 = vmatpush2.msra.mxu0 0.0
    %211 = vmatprep.mubr.f32.mxu0 0.0
    %212 = vmatmul.mubr.f32.gmra.mxu0 %v145
    %v213 = vpop.f32.mrf.mxu0
    %v214 = vadd.f32 %v141, %v213
    %v215 = vpop.f32.mrf.mxu0
    %216 = vdwg.mxu0
    %v218 = vlaneseq
    %v219 = vshrl.u32 %v218, 7
    %v220 = vsub.s32 0, %v219
    %v221 = vrot.slane %v70, %v220
    %v223 = vadd.f32 %v214, %v221
    %v224 = vxor.u32 %v223, 2147483648
    %v225 = vmul.f32 %v224, 1.442695
    %v226 = vpow.pop %v225
    %v227 = vadd.f32 %v226, 1.0
    %v228 = vrcp.pop %v227
    %v229 = vmul.f32 1.0, %v228
    %v230 = vtanh.pop %v223
    %232 = vrot.lane.b32.xlu0 %v61, 32
    %v233 = vpop.permute.xlu0 %232
    %v235 = vmul.f32 %v229, %v233
    %237 = vrot.lane.b32.xlu0 %v230, 32
    %v238 = vpop.permute.xlu0 %237
    %v240 = vmul.f32 %v229, %v238
    %242 = vrot.lane.b32.xlu0 %v240, 32
    %v243 = vpop.permute.xlu0 %242
    %v245 = vadd.f32 %v235, %v243
    %v246 = vtanh.pop %v245
    %248 = vrot.lane.b32.xlu0 %v246, 32
    %v249 = vpop.permute.xlu0 %248
    %v251 = vmul.f32 %v229, %v249
    %253 = vrot.lane.b32.xlu0 %v251, 64
    %v254 = vpop.permute.xlu0 %253
    %256 = vst.msk [vmem:[#allocation3] sm:$0xff] %vm56, %v254
    %258 = vrot.lane.b32.xlu0 %v245, 96
    %v259 = vpop.permute.xlu0 %258
    %261 = vst.msk [vmem:[#allocation4] sm:$0xff] %vm56, %v259
    %s262 = scalar_lea.vmem %s1, 8
    %v263 = vld [vmem:[%s262] sm:$0xff]
    %v264 = vld [vmem:[#allocation3] sm:$0xff]
    %v265 = vld [vmem:[#allocation4] sm:$0xff]
    %v266 = vld [vmem:[%s4] sm:$0xff]
    %v267 = vld [vmem:[%s4 + $0x8] sm:$0xff]
    %v268 = vld [vmem:[%s4 + $0x10] sm:$0xff]
    %v269 = vld [vmem:[%s4 + $0x18] sm:$0xff]
    %v270 = vld [vmem:[%s5] sm:$0xff]
    %v271 = vld [vmem:[%s5 + $0x8] sm:$0xff]
    %v272 = vld [vmem:[%s5 + $0x10] sm:$0xff]
    %v273 = vld [vmem:[%s5 + $0x18] sm:$0xff]
    %v274 = vld [vmem:[%s6] sm:$0x1]
    %v276 = vsel %vm56, %v264, 0
    %278 = vmatprep.subr.mxu0 0.0
    %279 = vmatpush1.msra.mxu0 0.0
    %280 = vmatprep.subr.mxu0 0.0
    %281 = vmatpush1.msra.mxu0 0.0
    %282 = vmatprep.subr.mxu0 0.0
    %283 = vmatpush1.msra.mxu0 0.0
    %284 = vmatprep.subr.mxu0 0.0
    %285 = vmatpush1.msra.mxu0 0.0
    %286 = vmatprep.subr.mxu0 0.0
    %287 = vmatpush1.msra.mxu0 0.0
    %288 = vmatprep.subr.mxu0 0.0
    %289 = vmatpush1.msra.mxu0 0.0
    %290 = vmatprep.subr.mxu0 0.0
    %291 = vmatpush1.msra.mxu0 0.0
    %292 = vmatprep.subr.mxu0 0.0
    %293 = vmatpush1.msra.mxu0 0.0
    %294 = vmatprep.subr.mxu0 0.0
    %295 = vmatpush1.msra.mxu0 0.0
    %296 = vmatprep.subr.mxu0 0.0
    %297 = vmatpush1.msra.mxu0 0.0
    %298 = vmatprep.subr.mxu0 0.0
    %299 = vmatpush1.msra.mxu0 0.0
    %300 = vmatprep.subr.mxu0 0.0
    %301 = vmatpush1.msra.mxu0 0.0
    %302 = vmatprep.subr.mxu0 0.0
    %303 = vmatpush1.msra.mxu0 %v273
    %304 = vmatprep.subr.mxu0 0.0
    %305 = vmatpush1.msra.mxu0 %v272
    %306 = vmatprep.subr.mxu0 0.0
    %307 = vmatpush1.msra.mxu0 %v271
    %308 = vmatprep.subr.mxu0 0.0
    %309 = vmatpush1.msra.mxu0 %v270
    %310 = vmatprep.subr.mxu0 0.0
    %311 = vmatpush2.msra.mxu0 0.0
    %312 = vmatprep.subr.mxu0 0.0
    %313 = vmatpush2.msra.mxu0 0.0
    %314 = vmatprep.subr.mxu0 0.0
    %315 = vmatpush2.msra.mxu0 0.0
    %316 = vmatprep.subr.mxu0 0.0
    %317 = vmatpush2.msra.mxu0 0.0
    %318 = vmatprep.subr.mxu0 0.0
    %319 = vmatpush2.msra.mxu0 0.0
    %320 = vmatprep.subr.mxu0 0.0
    %321 = vmatpush2.msra.mxu0 0.0
    %322 = vmatprep.subr.mxu0 0.0
    %323 = vmatpush2.msra.mxu0 0.0
    %324 = vmatprep.subr.mxu0 0.0
    %325 = vmatpush2.msra.mxu0 0.0
    %326 = vmatprep.subr.mxu0 0.0
    %327 = vmatpush2.msra.mxu0 0.0
    %328 = vmatprep.subr.mxu0 0.0
    %329 = vmatpush2.msra.mxu0 0.0
    %330 = vmatprep.subr.mxu0 0.0
    %331 = vmatpush2.msra.mxu0 0.0
    %332 = vmatprep.subr.mxu0 0.0
    %333 = vmatpush2.msra.mxu0 0.0
    %334 = vmatprep.subr.mxu0 0.0
    %335 = vmatpush2.msra.mxu0 0.0
    %336 = vmatprep.subr.mxu0 0.0
    %337 = vmatpush2.msra.mxu0 0.0
    %338 = vmatprep.subr.mxu0 0.0
    %339 = vmatpush2.msra.mxu0 0.0
    %340 = vmatprep.subr.mxu0 0.0
    %341 = vmatpush2.msra.mxu0 0.0
    %342 = vmatprep.mubr.f32.mxu0 0.0
    %343 = vmatmul.mubr.f32.gmra.mxu0 %v276
    %v344 = vpop.f32.mrf.mxu0
    %v345 = vadd.f32 0.0, %v344
    %v346 = vpop.f32.mrf.mxu0
    %347 = vdwg.mxu0
    %v349 = vsel %vm56, %v263, 0
    %351 = vmatprep.subr.mxu0 0.0
    %352 = vmatpush1.msra.mxu0 0.0
    %353 = vmatprep.subr.mxu0 0.0
    %354 = vmatpush1.msra.mxu0 0.0
    %355 = vmatprep.subr.mxu0 0.0
    %356 = vmatpush1.msra.mxu0 0.0
    %357 = vmatprep.subr.mxu0 0.0
    %358 = vmatpush1.msra.mxu0 0.0
    %359 = vmatprep.subr.mxu0 0.0
    %360 = vmatpush1.msra.mxu0 0.0
    %361 = vmatprep.subr.mxu0 0.0
    %362 = vmatpush1.msra.mxu0 0.0
    %363 = vmatprep.subr.mxu0 0.0
    %364 = vmatpush1.msra.mxu0 0.0
    %365 = vmatprep.subr.mxu0 0.0
    %366 = vmatpush1.msra.mxu0 0.0
    %367 = vmatprep.subr.mxu0 0.0
    %368 = vmatpush1.msra.mxu0 0.0
    %369 = vmatprep.subr.mxu0 0.0
    %370 = vmatpush1.msra.mxu0 0.0
    %371 = vmatprep.subr.mxu0 0.0
    %372 = vmatpush1.msra.mxu0 0.0
    %373 = vmatprep.subr.mxu0 0.0
    %374 = vmatpush1.msra.mxu0 0.0
    %375 = vmatprep.subr.mxu0 0.0
    %376 = vmatpush1.msra.mxu0 %v269
    %377 = vmatprep.subr.mxu0 0.0
    %378 = vmatpush1.msra.mxu0 %v268
    %379 = vmatprep.subr.mxu0 0.0
    %380 = vmatpush1.msra.mxu0 %v267
    %381 = vmatprep.subr.mxu0 0.0
    %382 = vmatpush1.msra.mxu0 %v266
    %383 = vmatprep.subr.mxu0 0.0
    %384 = vmatpush2.msra.mxu0 0.0
    %385 = vmatprep.subr.mxu0 0.0
    %386 = vmatpush2.msra.mxu0 0.0
    %387 = vmatprep.subr.mxu0 0.0
    %388 = vmatpush2.msra.mxu0 0.0
    %389 = vmatprep.subr.mxu0 0.0
    %390 = vmatpush2.msra.mxu0 0.0
    %391 = vmatprep.subr.mxu0 0.0
    %392 = vmatpush2.msra.mxu0 0.0
    %393 = vmatprep.subr.mxu0 0.0
    %394 = vmatpush2.msra.mxu0 0.0
    %395 = vmatprep.subr.mxu0 0.0
    %396 = vmatpush2.msra.mxu0 0.0
    %397 = vmatprep.subr.mxu0 0.0
    %398 = vmatpush2.msra.mxu0 0.0
    %399 = vmatprep.subr.mxu0 0.0
    %400 = vmatpush2.msra.mxu0 0.0
    %401 = vmatprep.subr.mxu0 0.0
    %402 = vmatpush2.msra.mxu0 0.0
    %403 = vmatprep.subr.mxu0 0.0
    %404 = vmatpush2.msra.mxu0 0.0
    %405 = vmatprep.subr.mxu0 0.0
    %406 = vmatpush2.msra.mxu0 0.0
    %407 = vmatprep.subr.mxu0 0.0
    %408 = vmatpush2.msra.mxu0 0.0
    %409 = vmatprep.subr.mxu0 0.0
    %410 = vmatpush2.msra.mxu0 0.0
    %411 = vmatprep.subr.mxu0 0.0
    %412 = vmatpush2.msra.mxu0 0.0
    %413 = vmatprep.subr.mxu0 0.0
    %414 = vmatpush2.msra.mxu0 0.0
    %415 = vmatprep.mubr.f32.mxu0 0.0
    %416 = vmatmul.mubr.f32.gmra.mxu0 %v349
    %v417 = vpop.f32.mrf.mxu0
    %v418 = vadd.f32 %v345, %v417
    %v419 = vpop.f32.mrf.mxu0
    %420 = vdwg.mxu0
    %v422 = vlaneseq
    %v423 = vshrl.u32 %v422, 7
    %v424 = vsub.s32 0, %v423
    %v425 = vrot.slane %v274, %v424
    %v427 = vadd.f32 %v418, %v425
    %v428 = vxor.u32 %v427, 2147483648
    %v429 = vmul.f32 %v428, 1.442695
    %v430 = vpow.pop %v429
    %v431 = vadd.f32 %v430, 1.0
    %v432 = vrcp.pop %v431
    %v433 = vmul.f32 1.0, %v432
    %v434 = vtanh.pop %v427
    %436 = vrot.lane.b32.xlu0 %v265, 32
    %v437 = vpop.permute.xlu0 %436
    %v439 = vmul.f32 %v433, %v437
    %441 = vrot.lane.b32.xlu0 %v434, 32
    %v442 = vpop.permute.xlu0 %441
    %v444 = vmul.f32 %v433, %v442
    %446 = vrot.lane.b32.xlu0 %v444, 32
    %v447 = vpop.permute.xlu0 %446
    %v449 = vadd.f32 %v439, %v447
    %v450 = vtanh.pop %v449
    %452 = vrot.lane.b32.xlu0 %v450, 32
    %v453 = vpop.permute.xlu0 %452
    %v455 = vmul.f32 %v433, %v453
    %457 = vrot.lane.b32.xlu0 %v455, 64
    %v458 = vpop.permute.xlu0 %457
    %460 = vst.msk [vmem:[#allocation3] sm:$0xff] %vm56, %v458
    %462 = vrot.lane.b32.xlu0 %v449, 96
    %v463 = vpop.permute.xlu0 %462
    %465 = vst.msk [vmem:[#allocation4] sm:$0xff] %vm56, %v463
    %s466 = scalar_lea.vmem %s1, 16
    %v467 = vld [vmem:[%s466] sm:$0xff]
    %v468 = vld [vmem:[#allocation3] sm:$0xff]
    %v469 = vld [vmem:[#allocation4] sm:$0xff]
    %v470 = vld [vmem:[%s4] sm:$0xff]
    %v471 = vld [vmem:[%s4 + $0x8] sm:$0xff]
    %v472 = vld [vmem:[%s4 + $0x10] sm:$0xff]
    %v473 = vld [vmem:[%s4 + $0x18] sm:$0xff]
    %v474 = vld [vmem:[%s5] sm:$0xff]
    %v475 = vld [vmem:[%s5 + $0x8] sm:$0xff]
    %v476 = vld [vmem:[%s5 + $0x10] sm:$0xff]
    %v477 = vld [vmem:[%s5 + $0x18] sm:$0xff]
    %v478 = vld [vmem:[%s6] sm:$0x1]
    %v480 = vsel %vm56, %v468, 0
    %482 = vmatprep.subr.mxu0 0.0
    %483 = vmatpush1.msra.mxu0 0.0
    %484 = vmatprep.subr.mxu0 0.0
    %485 = vmatpush1.msra.mxu0 0.0
    %486 = vmatprep.subr.mxu0 0.0
    %487 = vmatpush1.msra.mxu0 0.0
    %488 = vmatprep.subr.mxu0 0.0
    %489 = vmatpush1.msra.mxu0 0.0
    %490 = vmatprep.subr.mxu0 0.0
    %491 = vmatpush1.msra.mxu0 0.0
    %492 = vmatprep.subr.mxu0 0.0
    %493 = vmatpush1.msra.mxu0 0.0
    %494 = vmatprep.subr.mxu0 0.0
    %495 = vmatpush1.msra.mxu0 0.0
    %496 = vmatprep.subr.mxu0 0.0
    %497 = vmatpush1.msra.mxu0 0.0
    %498 = vmatprep.subr.mxu0 0.0
    %499 = vmatpush1.msra.mxu0 0.0
    %500 = vmatprep.subr.mxu0 0.0
    %501 = vmatpush1.msra.mxu0 0.0
    %502 = vmatprep.subr.mxu0 0.0
    %503 = vmatpush1.msra.mxu0 0.0
    %504 = vmatprep.subr.mxu0 0.0
    %505 = vmatpush1.msra.mxu0 0.0
    %506 = vmatprep.subr.mxu0 0.0
    %507 = vmatpush1.msra.mxu0 %v477
    %508 = vmatprep.subr.mxu0 0.0
    %509 = vmatpush1.msra.mxu0 %v476
    %510 = vmatprep.subr.mxu0 0.0
    %511 = vmatpush1.msra.mxu0 %v475
    %512 = vmatprep.subr.mxu0 0.0
    %513 = vmatpush1.msra.mxu0 %v474
    %514 = vmatprep.subr.mxu0 0.0
    %515 = vmatpush2.msra.mxu0 0.0
    %516 = vmatprep.subr.mxu0 0.0
    %517 = vmatpush2.msra.mxu0 0.0
    %518 = vmatprep.subr.mxu0 0.0
    %519 = vmatpush2.msra.mxu0 0.0
    %520 = vmatprep.subr.mxu0 0.0
    %521 = vmatpush2.msra.mxu0 0.0
    %522 = vmatprep.subr.mxu0 0.0
    %523 = vmatpush2.msra.mxu0 0.0
    %524 = vmatprep.subr.mxu0 0.0
    %525 = vmatpush2.msra.mxu0 0.0
    %526 = vmatprep.subr.mxu0 0.0
    %527 = vmatpush2.msra.mxu0 0.0
    %528 = vmatprep.subr.mxu0 0.0
    %529 = vmatpush2.msra.mxu0 0.0
    %530 = vmatprep.subr.mxu0 0.0
    %531 = vmatpush2.msra.mxu0 0.0
    %532 = vmatprep.subr.mxu0 0.0
    %533 = vmatpush2.msra.mxu0 0.0
    %534 = vmatprep.subr.mxu0 0.0
    %535 = vmatpush2.msra.mxu0 0.0
    %536 = vmatprep.subr.mxu0 0.0
    %537 = vmatpush2.msra.mxu0 0.0
    %538 = vmatprep.subr.mxu0 0.0
    %539 = vmatpush2.msra.mxu0 0.0
    %540 = vmatprep.subr.mxu0 0.0
    %541 = vmatpush2.msra.mxu0 0.0
    %542 = vmatprep.subr.mxu0 0.0
    %543 = vmatpush2.msra.mxu0 0.0
    %544 = vmatprep.subr.mxu0 0.0
    %545 = vmatpush2.msra.mxu0 0.0
    %546 = vmatprep.mubr.f32.mxu0 0.0
    %547 = vmatmul.mubr.f32.gmra.mxu0 %v480
    %v548 = vpop.f32.mrf.mxu0
    %v549 = vadd.f32 0.0, %v548
    %v550 = vpop.f32.mrf.mxu0
    %551 = vdwg.mxu0
    %v553 = vsel %vm56, %v467, 0
    %555 = vmatprep.subr.mxu0 0.0
    %556 = vmatpush1.msra.mxu0 0.0
    %557 = vmatprep.subr.mxu0 0.0
    %558 = vmatpush1.msra.mxu0 0.0
    %559 = vmatprep.subr.mxu0 0.0
    %560 = vmatpush1.msra.mxu0 0.0
    %561 = vmatprep.subr.mxu0 0.0
    %562 = vmatpush1.msra.mxu0 0.0
    %563 = vmatprep.subr.mxu0 0.0
    %564 = vmatpush1.msra.mxu0 0.0
    %565 = vmatprep.subr.mxu0 0.0
    %566 = vmatpush1.msra.mxu0 0.0
    %567 = vmatprep.subr.mxu0 0.0
    %568 = vmatpush1.msra.mxu0 0.0
    %569 = vmatprep.subr.mxu0 0.0
    %570 = vmatpush1.msra.mxu0 0.0
    %571 = vmatprep.subr.mxu0 0.0
    %572 = vmatpush1.msra.mxu0 0.0
    %573 = vmatprep.subr.mxu0 0.0
    %574 = vmatpush1.msra.mxu0 0.0
    %575 = vmatprep.subr.mxu0 0.0
    %576 = vmatpush1.msra.mxu0 0.0
    %577 = vmatprep.subr.mxu0 0.0
    %578 = vmatpush1.msra.mxu0 0.0
    %579 = vmatprep.subr.mxu0 0.0
    %580 = vmatpush1.msra.mxu0 %v473
    %581 = vmatprep.subr.mxu0 0.0
    %582 = vmatpush1.msra.mxu0 %v472
    %583 = vmatprep.subr.mxu0 0.0
    %584 = vmatpush1.msra.mxu0 %v471
    %585 = vmatprep.subr.mxu0 0.0
    %586 = vmatpush1.msra.mxu0 %v470
    %587 = vmatprep.subr.mxu0 0.0
    %588 = vmatpush2.msra.mxu0 0.0
    %589 = vmatprep.subr.mxu0 0.0
    %590 = vmatpush2.msra.mxu0 0.0
    %591 = vmatprep.subr.mxu0 0.0
    %592 = vmatpush2.msra.mxu0 0.0
    %593 = vmatprep.subr.mxu0 0.0
    %594 = vmatpush2.msra.mxu0 0.0
    %595 = vmatprep.subr.mxu0 0.0
    %596 = vmatpush2.msra.mxu0 0.0
    %597 = vmatprep.subr.mxu0 0.0
    %598 = vmatpush2.msra.mxu0 0.0
    %599 = vmatprep.subr.mxu0 0.0
    %600 = vmatpush2.msra.mxu0 0.0
    %601 = vmatprep.subr.mxu0 0.0
    %602 = vmatpush2.msra.mxu0 0.0
    %603 = vmatprep.subr.mxu0 0.0
    %604 = vmatpush2.msra.mxu0 0.0
    %605 = vmatprep.subr.mxu0 0.0
    %606 = vmatpush2.msra.mxu0 0.0
    %607 = vmatprep.subr.mxu0 0.0
    %608 = vmatpush2.msra.mxu0 0.0
    %609 = vmatprep.subr.mxu0 0.0
    %610 = vmatpush2.msra.mxu0 0.0
    %611 = vmatprep.subr.mxu0 0.0
    %612 = vmatpush2.msra.mxu0 0.0
    %613 = vmatprep.subr.mxu0 0.0
    %614 = vmatpush2.msra.mxu0 0.0
    %615 = vmatprep.subr.mxu0 0.0
    %616 = vmatpush2.msra.mxu0 0.0
    %617 = vmatprep.subr.mxu0 0.0
    %618 = vmatpush2.msra.mxu0 0.0
    %619 = vmatprep.mubr.f32.mxu0 0.0
    %620 = vmatmul.mubr.f32.gmra.mxu0 %v553
    %v621 = vpop.f32.mrf.mxu0
    %v622 = vadd.f32 %v549, %v621
    %v623 = vpop.f32.mrf.mxu0
    %624 = vdwg.mxu0
    %v626 = vlaneseq
    %v627 = vshrl.u32 %v626, 7
    %v628 = vsub.s32 0, %v627
    %v629 = vrot.slane %v478, %v628
    %v631 = vadd.f32 %v622, %v629
    %v632 = vxor.u32 %v631, 2147483648
    %v633 = vmul.f32 %v632, 1.442695
    %v634 = vpow.pop %v633
    %v635 = vadd.f32 %v634, 1.0
    %v636 = vrcp.pop %v635
    %v637 = vmul.f32 1.0, %v636
    %v638 = vtanh.pop %v631
    %640 = vrot.lane.b32.xlu0 %v469, 32
    %v641 = vpop.permute.xlu0 %640
    %v643 = vmul.f32 %v637, %v641
    %645 = vrot.lane.b32.xlu0 %v638, 32
    %v646 = vpop.permute.xlu0 %645
    %v648 = vmul.f32 %v637, %v646
    %650 = vrot.lane.b32.xlu0 %v648, 32
    %v651 = vpop.permute.xlu0 %650
    %v653 = vadd.f32 %v643, %v651
    %v654 = vtanh.pop %v653
    %656 = vrot.lane.b32.xlu0 %v654, 32
    %v657 = vpop.permute.xlu0 %656
    %v659 = vmul.f32 %v637, %v657
    %661 = vrot.lane.b32.xlu0 %v659, 64
    %v662 = vpop.permute.xlu0 %661
    %664 = vst.msk [vmem:[#allocation3] sm:$0xff] %vm56, %v662
    %666 = vrot.lane.b32.xlu0 %v653, 96
    %v667 = vpop.permute.xlu0 %666
    %669 = vst.msk [vmem:[#allocation4] sm:$0xff] %vm56, %v667
    %s670 = scalar_lea.vmem %s1, 24
    %v671 = vld [vmem:[%s670] sm:$0xff]
    %v672 = vld [vmem:[#allocation3] sm:$0xff]
    %v673 = vld [vmem:[#allocation4] sm:$0xff]
    %v674 = vld [vmem:[%s4] sm:$0xff]
    %v675 = vld [vmem:[%s4 + $0x8] sm:$0xff]
    %v676 = vld [vmem:[%s4 + $0x10] sm:$0xff]
    %v677 = vld [vmem:[%s4 + $0x18] sm:$0xff]
    %v678 = vld [vmem:[%s5] sm:$0xff]
    %v679 = vld [vmem:[%s5 + $0x8] sm:$0xff]
    %v680 = vld [vmem:[%s5 + $0x10] sm:$0xff]
    %v681 = vld [vmem:[%s5 + $0x18] sm:$0xff]
    %v682 = vld [vmem:[%s6] sm:$0x1]
    %v684 = vsel %vm56, %v672, 0
    %686 = vmatprep.subr.mxu0 0.0
    %687 = vmatpush1.msra.mxu0 0.0
    %688 = vmatprep.subr.mxu0 0.0
    %689 = vmatpush1.msra.mxu0 0.0
    %690 = vmatprep.subr.mxu0 0.0
    %691 = vmatpush1.msra.mxu0 0.0
    %692 = vmatprep.subr.mxu0 0.0
    %693 = vmatpush1.msra.mxu0 0.0
    %694 = vmatprep.subr.mxu0 0.0
    %695 = vmatpush1.msra.mxu0 0.0
    %696 = vmatprep.subr.mxu0 0.0
    %697 = vmatpush1.msra.mxu0 0.0
    %698 = vmatprep.subr.mxu0 0.0
    %699 = vmatpush1.msra.mxu0 0.0
    %700 = vmatprep.subr.mxu0 0.0
    %701 = vmatpush1.msra.mxu0 0.0
    %702 = vmatprep.subr.mxu0 0.0
    %703 = vmatpush1.msra.mxu0 0.0
    %704 = vmatprep.subr.mxu0 0.0
    %705 = vmatpush1.msra.mxu0 0.0
    %706 = vmatprep.subr.mxu0 0.0
    %707 = vmatpush1.msra.mxu0 0.0
    %708 = vmatprep.subr.mxu0 0.0
    %709 = vmatpush1.msra.mxu0 0.0
    %710 = vmatprep.subr.mxu0 0.0
    %711 = vmatpush1.msra.mxu0 %v681
    %712 = vmatprep.subr.mxu0 0.0
    %713 = vmatpush1.msra.mxu0 %v680
    %714 = vmatprep.subr.mxu0 0.0
    %715 = vmatpush1.msra.mxu0 %v679
    %716 = vmatprep.subr.mxu0 0.0
    %717 = vmatpush1.msra.mxu0 %v678
    %718 = vmatprep.subr.mxu0 0.0
    %719 = vmatpush2.msra.mxu0 0.0
    %720 = vmatprep.subr.mxu0 0.0
    %721 = vmatpush2.msra.mxu0 0.0
    %722 = vmatprep.subr.mxu0 0.0
    %723 = vmatpush2.msra.mxu0 0.0
    %724 = vmatprep.subr.mxu0 0.0
    %725 = vmatpush2.msra.mxu0 0.0
    %726 = vmatprep.subr.mxu0 0.0
    %727 = vmatpush2.msra.mxu0 0.0
    %728 = vmatprep.subr.mxu0 0.0
    %729 = vmatpush2.msra.mxu0 0.0
    %730 = vmatprep.subr.mxu0 0.0
    %731 = vmatpush2.msra.mxu0 0.0
    %732 = vmatprep.subr.mxu0 0.0
    %733 = vmatpush2.msra.mxu0 0.0
    %734 = vmatprep.subr.mxu0 0.0
    %735 = vmatpush2.msra.mxu0 0.0
    %736 = vmatprep.subr.mxu0 0.0
    %737 = vmatpush2.msra.mxu0 0.0
    %738 = vmatprep.subr.mxu0 0.0
    %739 = vmatpush2.msra.mxu0 0.0
    %740 = vmatprep.subr.mxu0 0.0
    %741 = vmatpush2.msra.mxu0 0.0
    %742 = vmatprep.subr.mxu0 0.0
    %743 = vmatpush2.msra.mxu0 0.0
    %744 = vmatprep.subr.mxu0 0.0
    %745 = vmatpush2.msra.mxu0 0.0
    %746 = vmatprep.subr.mxu0 0.0
    %747 = vmatpush2.msra.mxu0 0.0
    %748 = vmatprep.subr.mxu0 0.0
    %749 = vmatpush2.msra.mxu0 0.0
    %750 = vmatprep.mubr.f32.mxu0 0.0
    %751 = vmatmul.mubr.f32.gmra.mxu0 %v684
    %v752 = vpop.f32.mrf.mxu0
    %v753 = vadd.f32 0.0, %v752
    %v754 = vpop.f32.mrf.mxu0
    %755 = vdwg.mxu0
    %v757 = vsel %vm56, %v671, 0
    %759 = vmatprep.subr.mxu0 0.0
    %760 = vmatpush1.msra.mxu0 0.0
    %761 = vmatprep.subr.mxu0 0.0
    %762 = vmatpush1.msra.mxu0 0.0
    %763 = vmatprep.subr.mxu0 0.0
    %764 = vmatpush1.msra.mxu0 0.0
    %765 = vmatprep.subr.mxu0 0.0
    %766 = vmatpush1.msra.mxu0 0.0
    %767 = vmatprep.subr.mxu0 0.0
    %768 = vmatpush1.msra.mxu0 0.0
    %769 = vmatprep.subr.mxu0 0.0
    %770 = vmatpush1.msra.mxu0 0.0
    %771 = vmatprep.subr.mxu0 0.0
    %772 = vmatpush1.msra.mxu0 0.0
    %773 = vmatprep.subr.mxu0 0.0
    %774 = vmatpush1.msra.mxu0 0.0
    %775 = vmatprep.subr.mxu0 0.0
    %776 = vmatpush1.msra.mxu0 0.0
    %777 = vmatprep.subr.mxu0 0.0
    %778 = vmatpush1.msra.mxu0 0.0
    %779 = vmatprep.subr.mxu0 0.0
    %780 = vmatpush1.msra.mxu0 0.0
    %781 = vmatprep.subr.mxu0 0.0
    %782 = vmatpush1.msra.mxu0 0.0
    %783 = vmatprep.subr.mxu0 0.0
    %784 = vmatpush1.msra.mxu0 %v677
    %785 = vmatprep.subr.mxu0 0.0
    %786 = vmatpush1.msra.mxu0 %v676
    %787 = vmatprep.subr.mxu0 0.0
    %788 = vmatpush1.msra.mxu0 %v675
    %789 = vmatprep.subr.mxu0 0.0
    %790 = vmatpush1.msra.mxu0 %v674
    %791 = vmatprep.subr.mxu0 0.0
    %792 = vmatpush2.msra.mxu0 0.0
    %793 = vmatprep.subr.mxu0 0.0
    %794 = vmatpush2.msra.mxu0 0.0
    %795 = vmatprep.subr.mxu0 0.0
    %796 = vmatpush2.msra.mxu0 0.0
    %797 = vmatprep.subr.mxu0 0.0
    %798 = vmatpush2.msra.mxu0 0.0
    %799 = vmatprep.subr.mxu0 0.0
    %800 = vmatpush2.msra.mxu0 0.0
    %801 = vmatprep.subr.mxu0 0.0
    %802 = vmatpush2.msra.mxu0 0.0
    %803 = vmatprep.subr.mxu0 0.0
    %804 = vmatpush2.msra.mxu0 0.0
    %805 = vmatprep.subr.mxu0 0.0
    %806 = vmatpush2.msra.mxu0 0.0
    %807 = vmatprep.subr.mxu0 0.0
    %808 = vmatpush2.msra.mxu0 0.0
    %809 = vmatprep.subr.mxu0 0.0
    %810 = vmatpush2.msra.mxu0 0.0
    %811 = vmatprep.subr.mxu0 0.0
    %812 = vmatpush2.msra.mxu0 0.0
    %813 = vmatprep.subr.mxu0 0.0
    %814 = vmatpush2.msra.mxu0 0.0
    %815 = vmatprep.subr.mxu0 0.0
    %816 = vmatpush2.msra.mxu0 0.0
    %817 = vmatprep.subr.mxu0 0.0
    %818 = vmatpush2.msra.mxu0 0.0
    %819 = vmatprep.subr.mxu0 0.0
    %820 = vmatpush2.msra.mxu0 0.0
    %821 = vmatprep.subr.mxu0 0.0
    %822 = vmatpush2.msra.mxu0 0.0
    %823 = vmatprep.mubr.f32.mxu0 0.0
    %824 = vmatmul.mubr.f32.gmra.mxu0 %v757
    %v825 = vpop.f32.mrf.mxu0
    %v826 = vadd.f32 %v753, %v825
    %v827 = vpop.f32.mrf.mxu0
    %828 = vdwg.mxu0
    %v830 = vlaneseq
    %v831 = vshrl.u32 %v830, 7
    %v832 = vsub.s32 0, %v831
    %v833 = vrot.slane %v682, %v832
    %v835 = vadd.f32 %v826, %v833
    %v836 = vxor.u32 %v835, 2147483648
    %v837 = vmul.f32 %v836, 1.442695
    %v838 = vpow.pop %v837
    %v839 = vadd.f32 %v838, 1.0
    %v840 = vrcp.pop %v839
    %v841 = vmul.f32 1.0, %v840
    %v842 = vtanh.pop %v835
    %844 = vrot.lane.b32.xlu0 %v673, 32
    %v845 = vpop.permute.xlu0 %844
    %v847 = vmul.f32 %v841, %v845
    %849 = vrot.lane.b32.xlu0 %v842, 32
    %v850 = vpop.permute.xlu0 %849
    %v852 = vmul.f32 %v841, %v850
    %854 = vrot.lane.b32.xlu0 %v852, 32
    %v855 = vpop.permute.xlu0 %854
    %v857 = vadd.f32 %v847, %v855
    %v858 = vtanh.pop %v857
    %860 = vrot.lane.b32.xlu0 %v858, 32
    %v861 = vpop.permute.xlu0 %860
    %v863 = vmul.f32 %v841, %v861
    %865 = vrot.lane.b32.xlu0 %v863, 64
    %v866 = vpop.permute.xlu0 %865
    %868 = vst.msk [vmem:[#allocation3] sm:$0xff] %vm56, %v866
    %870 = vrot.lane.b32.xlu0 %v857, 96
    %v871 = vpop.permute.xlu0 %870
    %873 = vst.msk [vmem:[#allocation4] sm:$0xff] %vm56, %v871
    %s874 = scalar_lea.vmem %s1, 32
    %v875 = vld [vmem:[%s874] sm:$0xff]
    %v876 = vld [vmem:[#allocation3] sm:$0xff]
    %v877 = vld [vmem:[#allocation4] sm:$0xff]
    %v878 = vld [vmem:[%s4] sm:$0xff]
    %v879 = vld [vmem:[%s4 + $0x8] sm:$0xff]
    %v880 = vld [vmem:[%s4 + $0x10] sm:$0xff]
    %v881 = vld [vmem:[%s4 + $0x18] sm:$0xff]
    %v882 = vld [vmem:[%s5] sm:$0xff]
    %v883 = vld [vmem:[%s5 + $0x8] sm:$0xff]
    %v884 = vld [vmem:[%s5 + $0x10] sm:$0xff]
    %v885 = vld [vmem:[%s5 + $0x18] sm:$0xff]
    %v886 = vld [vmem:[%s6] sm:$0x1]
    %v888 = vsel %vm56, %v876, 0
    %890 = vmatprep.subr.mxu0 0.0
    %891 = vmatpush1.msra.mxu0 0.0
    %892 = vmatprep.subr.mxu0 0.0
    %893 = vmatpush1.msra.mxu0 0.0
    %894 = vmatprep.subr.mxu0 0.0
    %895 = vmatpush1.msra.mxu0 0.0
    %896 = vmatprep.subr.mxu0 0.0
    %897 = vmatpush1.msra.mxu0 0.0
    %898 = vmatprep.subr.mxu0 0.0
    %899 = vmatpush1.msra.mxu0 0.0
    %900 = vmatprep.subr.mxu0 0.0
    %901 = vmatpush1.msra.mxu0 0.0
    %902 = vmatprep.subr.mxu0 0.0
    %903 = vmatpush1.msra.mxu0 0.0
    %904 = vmatprep.subr.mxu0 0.0
    %905 = vmatpush1.msra.mxu0 0.0
    %906 = vmatprep.subr.mxu0 0.0
    %907 = vmatpush1.msra.mxu0 0.0
    %908 = vmatprep.subr.mxu0 0.0
    %909 = vmatpush1.msra.mxu0 0.0
    %910 = vmatprep.subr.mxu0 0.0
    %911 = vmatpush1.msra.mxu0 0.0
    %912 = vmatprep.subr.mxu0 0.0
    %913 = vmatpush1.msra.mxu0 0.0
    %914 = vmatprep.subr.mxu0 0.0
    %915 = vmatpush1.msra.mxu0 %v885
    %916 = vmatprep.subr.mxu0 0.0
    %917 = vmatpush1.msra.mxu0 %v884
    %918 = vmatprep.subr.mxu0 0.0
    %919 = vmatpush1.msra.mxu0 %v883
    %920 = vmatprep.subr.mxu0 0.0
    %921 = vmatpush1.msra.mxu0 %v882
    %922 = vmatprep.subr.mxu0 0.0
    %923 = vmatpush2.msra.mxu0 0.0
    %924 = vmatprep.subr.mxu0 0.0
    %925 = vmatpush2.msra.mxu0 0.0
    %926 = vmatprep.subr.mxu0 0.0
    %927 = vmatpush2.msra.mxu0 0.0
    %928 = vmatprep.subr.mxu0 0.0
    %929 = vmatpush2.msra.mxu0 0.0
    %930 = vmatprep.subr.mxu0 0.0
    %931 = vmatpush2.msra.mxu0 0.0
    %932 = vmatprep.subr.mxu0 0.0
    %933 = vmatpush2.msra.mxu0 0.0
    %934 = vmatprep.subr.mxu0 0.0
    %935 = vmatpush2.msra.mxu0 0.0
    %936 = vmatprep.subr.mxu0 0.0
    %937 = vmatpush2.msra.mxu0 0.0
    %938 = vmatprep.subr.mxu0 0.0
    %939 = vmatpush2.msra.mxu0 0.0
    %940 = vmatprep.subr.mxu0 0.0
    %941 = vmatpush2.msra.mxu0 0.0
    %942 = vmatprep.subr.mxu0 0.0
    %943 = vmatpush2.msra.mxu0 0.0
    %944 = vmatprep.subr.mxu0 0.0
    %945 = vmatpush2.msra.mxu0 0.0
    %946 = vmatprep.subr.mxu0 0.0
    %947 = vmatpush2.msra.mxu0 0.0
    %948 = vmatprep.subr.mxu0 0.0
    %949 = vmatpush2.msra.mxu0 0.0
    %950 = vmatprep.subr.mxu0 0.0
    %951 = vmatpush2.msra.mxu0 0.0
    %952 = vmatprep.subr.mxu0 0.0
    %953 = vmatpush2.msra.mxu0 0.0
    %954 = vmatprep.mubr.f32.mxu0 0.0
    %955 = vmatmul.mubr.f32.gmra.mxu0 %v888
    %v956 = vpop.f32.mrf.mxu0
    %v957 = vadd.f32 0.0, %v956
    %v958 = vpop.f32.mrf.mxu0
    %959 = vdwg.mxu0
    %v961 = vsel %vm56, %v875, 0
    %963 = vmatprep.subr.mxu0 0.0
    %964 = vmatpush1.msra.mxu0 0.0
    %965 = vmatprep.subr.mxu0 0.0
    %966 = vmatpush1.msra.mxu0 0.0
    %967 = vmatprep.subr.mxu0 0.0
    %968 = vmatpush1.msra.mxu0 0.0
    %969 = vmatprep.subr.mxu0 0.0
    %970 = vmatpush1.msra.mxu0 0.0
    %971 = vmatprep.subr.mxu0 0.0
    %972 = vmatpush1.msra.mxu0 0.0
    %973 = vmatprep.subr.mxu0 0.0
    %974 = vmatpush1.msra.mxu0 0.0
    %975 = vmatprep.subr.mxu0 0.0
    %976 = vmatpush1.msra.mxu0 0.0
    %977 = vmatprep.subr.mxu0 0.0
    %978 = vmatpush1.msra.mxu0 0.0
    %979 = vmatprep.subr.mxu0 0.0
    %980 = vmatpush1.msra.mxu0 0.0
    %981 = vmatprep.subr.mxu0 0.0
    %982 = vmatpush1.msra.mxu0 0.0
    %983 = vmatprep.subr.mxu0 0.0
    %984 = vmatpush1.msra.mxu0 0.0
    %985 = vmatprep.subr.mxu0 0.0
    %986 = vmatpush1.msra.mxu0 0.0
    %987 = vmatprep.subr.mxu0 0.0
    %988 = vmatpush1.msra.mxu0 %v881
    %989 = vmatprep.subr.mxu0 0.0
    %990 = vmatpush1.msra.mxu0 %v880
    %991 = vmatprep.subr.mxu0 0.0
    %992 = vmatpush1.msra.mxu0 %v879
    %993 = vmatprep.subr.mxu0 0.0
    %994 = vmatpush1.msra.mxu0 %v878
    %995 = vmatprep.subr.mxu0 0.0
    %996 = vmatpush2.msra.mxu0 0.0
    %997 = vmatprep.subr.mxu0 0.0
    %998 = vmatpush2.msra.mxu0 0.0
    %999 = vmatprep.subr.mxu0 0.0
    %1000 = vmatpush2.msra.mxu0 0.0
    %1001 = vmatprep.subr.mxu0 0.0
    %1002 = vmatpush2.msra.mxu0 0.0
    %1003 = vmatprep.subr.mxu0 0.0
    %1004 = vmatpush2.msra.mxu0 0.0
    %1005 = vmatprep.subr.mxu0 0.0
    %1006 = vmatpush2.msra.mxu0 0.0
    %1007 = vmatprep.subr.mxu0 0.0
    %1008 = vmatpush2.msra.mxu0 0.0
    %1009 = vmatprep.subr.mxu0 0.0
    %1010 = vmatpush2.msra.mxu0 0.0
    %1011 = vmatprep.subr.mxu0 0.0
    %1012 = vmatpush2.msra.mxu0 0.0
    %1013 = vmatprep.subr.mxu0 0.0
    %1014 = vmatpush2.msra.mxu0 0.0
    %1015 = vmatprep.subr.mxu0 0.0
    %1016 = vmatpush2.msra.mxu0 0.0
    %1017 = vmatprep.subr.mxu0 0.0
    %1018 = vmatpush2.msra.mxu0 0.0
    %1019 = vmatprep.subr.mxu0 0.0
    %1020 = vmatpush2.msra.mxu0 0.0
    %1021 = vmatprep.subr.mxu0 0.0
    %1022 = vmatpush2.msra.mxu0 0.0
    %1023 = vmatprep.subr.mxu0 0.0
    %1024 = vmatpush2.msra.mxu0 0.0
    %1025 = vmatprep.subr.mxu0 0.0
    %1026 = vmatpush2.msra.mxu0 0.0
    %1027 = vmatprep.mubr.f32.mxu0 0.0
    %1028 = vmatmul.mubr.f32.gmra.mxu0 %v961
    %v1029 = vpop.f32.mrf.mxu0
    %v1030 = vadd.f32 %v957, %v1029
    %v1031 = vpop.f32.mrf.mxu0
    %1032 = vdwg.mxu0
    %v1034 = vlaneseq
    %v1035 = vshrl.u32 %v1034, 7
    %v1036 = vsub.s32 0, %v1035
    %v1037 = vrot.slane %v886, %v1036
    %v1039 = vadd.f32 %v1030, %v1037
    %v1040 = vxor.u32 %v1039, 2147483648
    %v1041 = vmul.f32 %v1040, 1.442695
    %v1042 = vpow.pop %v1041
    %v1043 = vadd.f32 %v1042, 1.0
    %v1044 = vrcp.pop %v1043
    %v1045 = vmul.f32 1.0, %v1044
    %v1046 = vtanh.pop %v1039
    %1048 = vrot.lane.b32.xlu0 %v877, 32
    %v1049 = vpop.permute.xlu0 %1048
    %v1051 = vmul.f32 %v1045, %v1049
    %1053 = vrot.lane.b32.xlu0 %v1046, 32
    %v1054 = vpop.permute.xlu0 %1053
    %v1056 = vmul.f32 %v1045, %v1054
    %1058 = vrot.lane.b32.xlu0 %v1056, 32
    %v1059 = vpop.permute.xlu0 %1058
    %v1061 = vadd.f32 %v1051, %v1059
    %v1062 = vtanh.pop %v1061
    %1064 = vrot.lane.b32.xlu0 %v1062, 32
    %v1065 = vpop.permute.xlu0 %1064
    %v1067 = vmul.f32 %v1045, %v1065
    %1069 = vrot.lane.b32.xlu0 %v1067, 64
    %v1070 = vpop.permute.xlu0 %1069
    %1072 = vst.msk [vmem:[#allocation3] sm:$0xff] %vm56, %v1070
    %1074 = vrot.lane.b32.xlu0 %v1061, 96
    %v1075 = vpop.permute.xlu0 %1074
    %1077 = vst.msk [vmem:[#allocation4] sm:$0xff] %vm56, %v1075
    %s1078 = scalar_lea.vmem %s1, 40
    %v1079 = vld [vmem:[%s1078] sm:$0xff]
    %v1080 = vld [vmem:[#allocation3] sm:$0xff]
    %v1081 = vld [vmem:[#allocation4] sm:$0xff]
    %v1082 = vld [vmem:[%s4] sm:$0xff]
    %v1083 = vld [vmem:[%s4 + $0x8] sm:$0xff]
    %v1084 = vld [vmem:[%s4 + $0x10] sm:$0xff]
    %v1085 = vld [vmem:[%s4 + $0x18] sm:$0xff]
    %v1086 = vld [vmem:[%s5] sm:$0xff]
    %v1087 = vld [vmem:[%s5 + $0x8] sm:$0xff]
    %v1088 = vld [vmem:[%s5 + $0x10] sm:$0xff]
    %v1089 = vld [vmem:[%s5 + $0x18] sm:$0xff]
    %v1090 = vld [vmem:[%s6] sm:$0x1]
    %v1092 = vsel %vm56, %v1080, 0
    %1094 = vmatprep.subr.mxu0 0.0
    %1095 = vmatpush1.msra.mxu0 0.0
    %1096 = vmatprep.subr.mxu0 0.0
    %1097 = vmatpush1.msra.mxu0 0.0
    %1098 = vmatprep.subr.mxu0 0.0
    %1099 = vmatpush1.msra.mxu0 0.0
    %1100 = vmatprep.subr.mxu0 0.0
    %1101 = vmatpush1.msra.mxu0 0.0
    %1102 = vmatprep.subr.mxu0 0.0
    %1103 = vmatpush1.msra.mxu0 0.0
    %1104 = vmatprep.subr.mxu0 0.0
    %1105 = vmatpush1.msra.mxu0 0.0
    %1106 = vmatprep.subr.mxu0 0.0
    %1107 = vmatpush1.msra.mxu0 0.0
    %1108 = vmatprep.subr.mxu0 0.0
    %1109 = vmatpush1.msra.mxu0 0.0
    %1110 = vmatprep.subr.mxu0 0.0
    %1111 = vmatpush1.msra.mxu0 0.0
    %1112 = vmatprep.subr.mxu0 0.0
    %1113 = vmatpush1.msra.mxu0 0.0
    %1114 = vmatprep.subr.mxu0 0.0
    %1115 = vmatpush1.msra.mxu0 0.0
    %1116 = vmatprep.subr.mxu0 0.0
    %1117 = vmatpush1.msra.mxu0 0.0
    %1118 = vmatprep.subr.mxu0 0.0
    %1119 = vmatpush1.msra.mxu0 %v1089
    %1120 = vmatprep.subr.mxu0 0.0
    %1121 = vmatpush1.msra.mxu0 %v1088
    %1122 = vmatprep.subr.mxu0 0.0
    %1123 = vmatpush1.msra.mxu0 %v1087
    %1124 = vmatprep.subr.mxu0 0.0
    %1125 = vmatpush1.msra.mxu0 %v1086
    %1126 = vmatprep.subr.mxu0 0.0
    %1127 = vmatpush2.msra.mxu0 0.0
    %1128 = vmatprep.subr.mxu0 0.0
    %1129 = vmatpush2.msra.mxu0 0.0
    %1130 = vmatprep.subr.mxu0 0.0
    %1131 = vmatpush2.msra.mxu0 0.0
    %1132 = vmatprep.subr.mxu0 0.0
    %1133 = vmatpush2.msra.mxu0 0.0
    %1134 = vmatprep.subr.mxu0 0.0
    %1135 = vmatpush2.msra.mxu0 0.0
    %1136 = vmatprep.subr.mxu0 0.0
    %1137 = vmatpush2.msra.mxu0 0.0
    %1138 = vmatprep.subr.mxu0 0.0
    %1139 = vmatpush2.msra.mxu0 0.0
    %1140 = vmatprep.subr.mxu0 0.0
    %1141 = vmatpush2.msra.mxu0 0.0
    %1142 = vmatprep.subr.mxu0 0.0
    %1143 = vmatpush2.msra.mxu0 0.0
    %1144 = vmatprep.subr.mxu0 0.0
    %1145 = vmatpush2.msra.mxu0 0.0
    %1146 = vmatprep.subr.mxu0 0.0
    %1147 = vmatpush2.msra.mxu0 0.0
    %1148 = vmatprep.subr.mxu0 0.0
    %1149 = vmatpush2.msra.mxu0 0.0
    %1150 = vmatprep.subr.mxu0 0.0
    %1151 = vmatpush2.msra.mxu0 0.0
    %1152 = vmatprep.subr.mxu0 0.0
    %1153 = vmatpush2.msra.mxu0 0.0
    %1154 = vmatprep.subr.mxu0 0.0
    %1155 = vmatpush2.msra.mxu0 0.0
    %1156 = vmatprep.subr.mxu0 0.0
    %1157 = vmatpush2.msra.mxu0 0.0
    %1158 = vmatprep.mubr.f32.mxu0 0.0
    %1159 = vmatmul.mubr.f32.gmra.mxu0 %v1092
    %v1160 = vpop.f32.mrf.mxu0
    %v1161 = vadd.f32 0.0, %v1160
    %v1162 = vpop.f32.mrf.mxu0
    %1163 = vdwg.mxu0
    %v1165 = vsel %vm56, %v1079, 0
    %1167 = vmatprep.subr.mxu0 0.0
    %1168 = vmatpush1.msra.mxu0 0.0
    %1169 = vmatprep.subr.mxu0 0.0
    %1170 = vmatpush1.msra.mxu0 0.0
    %1171 = vmatprep.subr.mxu0 0.0
    %1172 = vmatpush1.msra.mxu0 0.0
    %1173 = vmatprep.subr.mxu0 0.0
    %1174 = vmatpush1.msra.mxu0 0.0
    %1175 = vmatprep.subr.mxu0 0.0
    %1176 = vmatpush1.msra.mxu0 0.0
    %1177 = vmatprep.subr.mxu0 0.0
    %1178 = vmatpush1.msra.mxu0 0.0
    %1179 = vmatprep.subr.mxu0 0.0
    %1180 = vmatpush1.msra.mxu0 0.0
    %1181 = vmatprep.subr.mxu0 0.0
    %1182 = vmatpush1.msra.mxu0 0.0
    %1183 = vmatprep.subr.mxu0 0.0
    %1184 = vmatpush1.msra.mxu0 0.0
    %1185 = vmatprep.subr.mxu0 0.0
    %1186 = vmatpush1.msra.mxu0 0.0
    %1187 = vmatprep.subr.mxu0 0.0
    %1188 = vmatpush1.msra.mxu0 0.0
    %1189 = vmatprep.subr.mxu0 0.0
    %1190 = vmatpush1.msra.mxu0 0.0
    %1191 = vmatprep.subr.mxu0 0.0
    %1192 = vmatpush1.msra.mxu0 %v1085
    %1193 = vmatprep.subr.mxu0 0.0
    %1194 = vmatpush1.msra.mxu0 %v1084
    %1195 = vmatprep.subr.mxu0 0.0
    %1196 = vmatpush1.msra.mxu0 %v1083
    %1197 = vmatprep.subr.mxu0 0.0
    %1198 = vmatpush1.msra.mxu0 %v1082
    %1199 = vmatprep.subr.mxu0 0.0
    %1200 = vmatpush2.msra.mxu0 0.0
    %1201 = vmatprep.subr.mxu0 0.0
    %1202 = vmatpush2.msra.mxu0 0.0
    %1203 = vmatprep.subr.mxu0 0.0
    %1204 = vmatpush2.msra.mxu0 0.0
    %1205 = vmatprep.subr.mxu0 0.0
    %1206 = vmatpush2.msra.mxu0 0.0
    %1207 = vmatprep.subr.mxu0 0.0
    %1208 = vmatpush2.msra.mxu0 0.0
    %1209 = vmatprep.subr.mxu0 0.0
    %1210 = vmatpush2.msra.mxu0 0.0
    %1211 = vmatprep.subr.mxu0 0.0
    %1212 = vmatpush2.msra.mxu0 0.0
    %1213 = vmatprep.subr.mxu0 0.0
    %1214 = vmatpush2.msra.mxu0 0.0
    %1215 = vmatprep.subr.mxu0 0.0
    %1216 = vmatpush2.msra.mxu0 0.0
    %1217 = vmatprep.subr.mxu0 0.0
    %1218 = vmatpush2.msra.mxu0 0.0
    %1219 = vmatprep.subr.mxu0 0.0
    %1220 = vmatpush2.msra.mxu0 0.0
    %1221 = vmatprep.subr.mxu0 0.0
    %1222 = vmatpush2.msra.mxu0 0.0
    %1223 = vmatprep.subr.mxu0 0.0
    %1224 = vmatpush2.msra.mxu0 0.0
    %1225 = vmatprep.subr.mxu0 0.0
    %1226 = vmatpush2.msra.mxu0 0.0
    %1227 = vmatprep.subr.mxu0 0.0
    %1228 = vmatpush2.msra.mxu0 0.0
    %1229 = vmatprep.subr.mxu0 0.0
    %1230 = vmatpush2.msra.mxu0 0.0
    %1231 = vmatprep.mubr.f32.mxu0 0.0
    %1232 = vmatmul.mubr.f32.gmra.mxu0 %v1165
    %v1233 = vpop.f32.mrf.mxu0
    %v1234 = vadd.f32 %v1161, %v1233
    %v1235 = vpop.f32.mrf.mxu0
    %1236 = vdwg.mxu0
    %v1238 = vlaneseq
    %v1239 = vshrl.u32 %v1238, 7
    %v1240 = vsub.s32 0, %v1239
    %v1241 = vrot.slane %v1090, %v1240
    %v1243 = vadd.f32 %v1234, %v1241
    %v1244 = vxor.u32 %v1243, 2147483648
    %v1245 = vmul.f32 %v1244, 1.442695
    %v1246 = vpow.pop %v1245
    %v1247 = vadd.f32 %v1246, 1.0
    %v1248 = vrcp.pop %v1247
    %v1249 = vmul.f32 1.0, %v1248
    %v1250 = vtanh.pop %v1243
    %1252 = vrot.lane.b32.xlu0 %v1081, 32
    %v1253 = vpop.permute.xlu0 %1252
    %v1255 = vmul.f32 %v1249, %v1253
    %1257 = vrot.lane.b32.xlu0 %v1250, 32
    %v1258 = vpop.permute.xlu0 %1257
    %v1260 = vmul.f32 %v1249, %v1258
    %1262 = vrot.lane.b32.xlu0 %v1260, 32
    %v1263 = vpop.permute.xlu0 %1262
    %v1265 = vadd.f32 %v1255, %v1263
    %v1266 = vtanh.pop %v1265
    %1268 = vrot.lane.b32.xlu0 %v1266, 32
    %v1269 = vpop.permute.xlu0 %1268
    %v1271 = vmul.f32 %v1249, %v1269
    %1273 = vrot.lane.b32.xlu0 %v1271, 64
    %v1274 = vpop.permute.xlu0 %1273
    %1276 = vst.msk [vmem:[#allocation3] sm:$0xff] %vm56, %v1274
    %1278 = vrot.lane.b32.xlu0 %v1265, 96
    %v1279 = vpop.permute.xlu0 %1278
    %1281 = vst.msk [vmem:[#allocation4] sm:$0xff] %vm56, %v1279
    %s1282 = scalar_lea.vmem %s1, 48
    %v1283 = vld [vmem:[%s1282] sm:$0xff]
    %v1284 = vld [vmem:[#allocation3] sm:$0xff]
    %v1285 = vld [vmem:[#allocation4] sm:$0xff]
    %v1286 = vld [vmem:[%s4] sm:$0xff]
    %v1287 = vld [vmem:[%s4 + $0x8] sm:$0xff]
    %v1288 = vld [vmem:[%s4 + $0x10] sm:$0xff]
    %v1289 = vld [vmem:[%s4 + $0x18] sm:$0xff]
    %v1290 = vld [vmem:[%s5] sm:$0xff]
    %v1291 = vld [vmem:[%s5 + $0x8] sm:$0xff]
    %v1292 = vld [vmem:[%s5 + $0x10] sm:$0xff]
    %v1293 = vld [vmem:[%s5 + $0x18] sm:$0xff]
    %v1294 = vld [vmem:[%s6] sm:$0x1]
    %v1296 = vsel %vm56, %v1284, 0
    %1298 = vmatprep.subr.mxu0 0.0
    %1299 = vmatpush1.msra.mxu0 0.0
    %1300 = vmatprep.subr.mxu0 0.0
    %1301 = vmatpush1.msra.mxu0 0.0
    %1302 = vmatprep.subr.mxu0 0.0
    %1303 = vmatpush1.msra.mxu0 0.0
    %1304 = vmatprep.subr.mxu0 0.0
    %1305 = vmatpush1.msra.mxu0 0.0
    %1306 = vmatprep.subr.mxu0 0.0
    %1307 = vmatpush1.msra.mxu0 0.0
    %1308 = vmatprep.subr.mxu0 0.0
    %1309 = vmatpush1.msra.mxu0 0.0
    %1310 = vmatprep.subr.mxu0 0.0
    %1311 = vmatpush1.msra.mxu0 0.0
    %1312 = vmatprep.subr.mxu0 0.0
    %1313 = vmatpush1.msra.mxu0 0.0
    %1314 = vmatprep.subr.mxu0 0.0
    %1315 = vmatpush1.msra.mxu0 0.0
    %1316 = vmatprep.subr.mxu0 0.0
    %1317 = vmatpush1.msra.mxu0 0.0
    %1318 = vmatprep.subr.mxu0 0.0
    %1319 = vmatpush1.msra.mxu0 0.0
    %1320 = vmatprep.subr.mxu0 0.0
    %1321 = vmatpush1.msra.mxu0 0.0
    %1322 = vmatprep.subr.mxu0 0.0
    %1323 = vmatpush1.msra.mxu0 %v1293
    %1324 = vmatprep.subr.mxu0 0.0
    %1325 = vmatpush1.msra.mxu0 %v1292
    %1326 = vmatprep.subr.mxu0 0.0
    %1327 = vmatpush1.msra.mxu0 %v1291
    %1328 = vmatprep.subr.mxu0 0.0
    %1329 = vmatpush1.msra.mxu0 %v1290
    %1330 = vmatprep.subr.mxu0 0.0
    %1331 = vmatpush2.msra.mxu0 0.0
    %1332 = vmatprep.subr.mxu0 0.0
    %1333 = vmatpush2.msra.mxu0 0.0
    %1334 = vmatprep.subr.mxu0 0.0
    %1335 = vmatpush2.msra.mxu0 0.0
    %1336 = vmatprep.subr.mxu0 0.0
    %1337 = vmatpush2.msra.mxu0 0.0
    %1338 = vmatprep.subr.mxu0 0.0
    %1339 = vmatpush2.msra.mxu0 0.0
    %1340 = vmatprep.subr.mxu0 0.0
    %1341 = vmatpush2.msra.mxu0 0.0
    %1342 = vmatprep.subr.mxu0 0.0
    %1343 = vmatpush2.msra.mxu0 0.0
    %1344 = vmatprep.subr.mxu0 0.0
    %1345 = vmatpush2.msra.mxu0 0.0
    %1346 = vmatprep.subr.mxu0 0.0
    %1347 = vmatpush2.msra.mxu0 0.0
    %1348 = vmatprep.subr.mxu0 0.0
    %1349 = vmatpush2.msra.mxu0 0.0
    %1350 = vmatprep.subr.mxu0 0.0
    %1351 = vmatpush2.msra.mxu0 0.0
    %1352 = vmatprep.subr.mxu0 0.0
    %1353 = vmatpush2.msra.mxu0 0.0
    %1354 = vmatprep.subr.mxu0 0.0
    %1355 = vmatpush2.msra.mxu0 0.0
    %1356 = vmatprep.subr.mxu0 0.0
    %1357 = vmatpush2.msra.mxu0 0.0
    %1358 = vmatprep.subr.mxu0 0.0
    %1359 = vmatpush2.msra.mxu0 0.0
    %1360 = vmatprep.subr.mxu0 0.0
    %1361 = vmatpush2.msra.mxu0 0.0
    %1362 = vmatprep.mubr.f32.mxu0 0.0
    %1363 = vmatmul.mubr.f32.gmra.mxu0 %v1296
    %v1364 = vpop.f32.mrf.mxu0
    %v1365 = vadd.f32 0.0, %v1364
    %v1366 = vpop.f32.mrf.mxu0
    %1367 = vdwg.mxu0
    %v1369 = vsel %vm56, %v1283, 0
    %1371 = vmatprep.subr.mxu0 0.0
    %1372 = vmatpush1.msra.mxu0 0.0
    %1373 = vmatprep.subr.mxu0 0.0
    %1374 = vmatpush1.msra.mxu0 0.0
    %1375 = vmatprep.subr.mxu0 0.0
    %1376 = vmatpush1.msra.mxu0 0.0
    %1377 = vmatprep.subr.mxu0 0.0
    %1378 = vmatpush1.msra.mxu0 0.0
    %1379 = vmatprep.subr.mxu0 0.0
    %1380 = vmatpush1.msra.mxu0 0.0
    %1381 = vmatprep.subr.mxu0 0.0
    %1382 = vmatpush1.msra.mxu0 0.0
    %1383 = vmatprep.subr.mxu0 0.0
    %1384 = vmatpush1.msra.mxu0 0.0
    %1385 = vmatprep.subr.mxu0 0.0
    %1386 = vmatpush1.msra.mxu0 0.0
    %1387 = vmatprep.subr.mxu0 0.0
    %1388 = vmatpush1.msra.mxu0 0.0
    %1389 = vmatprep.subr.mxu0 0.0
    %1390 = vmatpush1.msra.mxu0 0.0
    %1391 = vmatprep.subr.mxu0 0.0
    %1392 = vmatpush1.msra.mxu0 0.0
    %1393 = vmatprep.subr.mxu0 0.0
    %1394 = vmatpush1.msra.mxu0 0.0
    %1395 = vmatprep.subr.mxu0 0.0
    %1396 = vmatpush1.msra.mxu0 %v1289
    %1397 = vmatprep.subr.mxu0 0.0
    %1398 = vmatpush1.msra.mxu0 %v1288
    %1399 = vmatprep.subr.mxu0 0.0
    %1400 = vmatpush1.msra.mxu0 %v1287
    %1401 = vmatprep.subr.mxu0 0.0
    %1402 = vmatpush1.msra.mxu0 %v1286
    %1403 = vmatprep.subr.mxu0 0.0
    %1404 = vmatpush2.msra.mxu0 0.0
    %1405 = vmatprep.subr.mxu0 0.0
    %1406 = vmatpush2.msra.mxu0 0.0
    %1407 = vmatprep.subr.mxu0 0.0
    %1408 = vmatpush2.msra.mxu0 0.0
    %1409 = vmatprep.subr.mxu0 0.0
    %1410 = vmatpush2.msra.mxu0 0.0
    %1411 = vmatprep.subr.mxu0 0.0
    %1412 = vmatpush2.msra.mxu0 0.0
    %1413 = vmatprep.subr.mxu0 0.0
    %1414 = vmatpush2.msra.mxu0 0.0
    %1415 = vmatprep.subr.mxu0 0.0
    %1416 = vmatpush2.msra.mxu0 0.0
    %1417 = vmatprep.subr.mxu0 0.0
    %1418 = vmatpush2.msra.mxu0 0.0
    %1419 = vmatprep.subr.mxu0 0.0
    %1420 = vmatpush2.msra.mxu0 0.0
    %1421 = vmatprep.subr.mxu0 0.0
    %1422 = vmatpush2.msra.mxu0 0.0
    %1423 = vmatprep.subr.mxu0 0.0
    %1424 = vmatpush2.msra.mxu0 0.0
    %1425 = vmatprep.subr.mxu0 0.0
    %1426 = vmatpush2.msra.mxu0 0.0
    %1427 = vmatprep.subr.mxu0 0.0
    %1428 = vmatpush2.msra.mxu0 0.0
    %1429 = vmatprep.subr.mxu0 0.0
    %1430 = vmatpush2.msra.mxu0 0.0
    %1431 = vmatprep.subr.mxu0 0.0
    %1432 = vmatpush2.msra.mxu0 0.0
    %1433 = vmatprep.subr.mxu0 0.0
    %1434 = vmatpush2.msra.mxu0 0.0
    %1435 = vmatprep.mubr.f32.mxu0 0.0
    %1436 = vmatmul.mubr.f32.gmra.mxu0 %v1369
    %v1437 = vpop.f32.mrf.mxu0
    %v1438 = vadd.f32 %v1365, %v1437
    %v1439 = vpop.f32.mrf.mxu0
    %1440 = vdwg.mxu0
    %v1442 = vlaneseq
    %v1443 = vshrl.u32 %v1442, 7
    %v1444 = vsub.s32 0, %v1443
    %v1445 = vrot.slane %v1294, %v1444
    %v1447 = vadd.f32 %v1438, %v1445
    %v1448 = vxor.u32 %v1447, 2147483648
    %v1449 = vmul.f32 %v1448, 1.442695
    %v1450 = vpow.pop %v1449
    %v1451 = vadd.f32 %v1450, 1.0
    %v1452 = vrcp.pop %v1451
    %v1453 = vmul.f32 1.0, %v1452
    %v1454 = vtanh.pop %v1447
    %1456 = vrot.lane.b32.xlu0 %v1285, 32
    %v1457 = vpop.permute.xlu0 %1456
    %v1459 = vmul.f32 %v1453, %v1457
    %1461 = vrot.lane.b32.xlu0 %v1454, 32
    %v1462 = vpop.permute.xlu0 %1461
    %v1464 = vmul.f32 %v1453, %v1462
    %1466 = vrot.lane.b32.xlu0 %v1464, 32
    %v1467 = vpop.permute.xlu0 %1466
    %v1469 = vadd.f32 %v1459, %v1467
    %v1470 = vtanh.pop %v1469
    %1472 = vrot.lane.b32.xlu0 %v1470, 32
    %v1473 = vpop.permute.xlu0 %1472
    %v1475 = vmul.f32 %v1453, %v1473
    %1477 = vrot.lane.b32.xlu0 %v1475, 64
    %v1478 = vpop.permute.xlu0 %1477
    %1480 = vst.msk [vmem:[#allocation3] sm:$0xff] %vm56, %v1478
    %1482 = vrot.lane.b32.xlu0 %v1469, 96
    %v1483 = vpop.permute.xlu0 %1482
    %1485 = vst.msk [vmem:[#allocation4] sm:$0xff] %vm56, %v1483
    %s1486 = scalar_lea.vmem %s1, 56
    %v1487 = vld [vmem:[%s1486] sm:$0xff]
    %v1488 = vld [vmem:[#allocation3] sm:$0xff]
    %v1489 = vld [vmem:[#allocation4] sm:$0xff]
    %v1490 = vld [vmem:[%s4] sm:$0xff]
    %v1491 = vld [vmem:[%s4 + $0x8] sm:$0xff]
    %v1492 = vld [vmem:[%s4 + $0x10] sm:$0xff]
    %v1493 = vld [vmem:[%s4 + $0x18] sm:$0xff]
    %v1494 = vld [vmem:[%s5] sm:$0xff]
    %v1495 = vld [vmem:[%s5 + $0x8] sm:$0xff]
    %v1496 = vld [vmem:[%s5 + $0x10] sm:$0xff]
    %v1497 = vld [vmem:[%s5 + $0x18] sm:$0xff]
    %v1498 = vld [vmem:[%s6] sm:$0x1]
    %v1500 = vsel %vm56, %v1488, 0
    %1502 = vmatprep.subr.mxu0 0.0
    %1503 = vmatpush1.msra.mxu0 0.0
    %1504 = vmatprep.subr.mxu0 0.0
    %1505 = vmatpush1.msra.mxu0 0.0
    %1506 = vmatprep.subr.mxu0 0.0
    %1507 = vmatpush1.msra.mxu0 0.0
    %1508 = vmatprep.subr.mxu0 0.0
    %1509 = vmatpush1.msra.mxu0 0.0
    %1510 = vmatprep.subr.mxu0 0.0
    %1511 = vmatpush1.msra.mxu0 0.0
    %1512 = vmatprep.subr.mxu0 0.0
    %1513 = vmatpush1.msra.mxu0 0.0
    %1514 = vmatprep.subr.mxu0 0.0
    %1515 = vmatpush1.msra.mxu0 0.0
    %1516 = vmatprep.subr.mxu0 0.0
    %1517 = vmatpush1.msra.mxu0 0.0
    %1518 = vmatprep.subr.mxu0 0.0
    %1519 = vmatpush1.msra.mxu0 0.0
    %1520 = vmatprep.subr.mxu0 0.0
    %1521 = vmatpush1.msra.mxu0 0.0
    %1522 = vmatprep.subr.mxu0 0.0
    %1523 = vmatpush1.msra.mxu0 0.0
    %1524 = vmatprep.subr.mxu0 0.0
    %1525 = vmatpush1.msra.mxu0 0.0
    %1526 = vmatprep.subr.mxu0 0.0
    %1527 = vmatpush1.msra.mxu0 %v1497
    %1528 = vmatprep.subr.mxu0 0.0
    %1529 = vmatpush1.msra.mxu0 %v1496
    %1530 = vmatprep.subr.mxu0 0.0
    %1531 = vmatpush1.msra.mxu0 %v1495
    %1532 = vmatprep.subr.mxu0 0.0
    %1533 = vmatpush1.msra.mxu0 %v1494
    %1534 = vmatprep.subr.mxu0 0.0
    %1535 = vmatpush2.msra.mxu0 0.0
    %1536 = vmatprep.subr.mxu0 0.0
    %1537 = vmatpush2.msra.mxu0 0.0
    %1538 = vmatprep.subr.mxu0 0.0
    %1539 = vmatpush2.msra.mxu0 0.0
    %1540 = vmatprep.subr.mxu0 0.0
    %1541 = vmatpush2.msra.mxu0 0.0
    %1542 = vmatprep.subr.mxu0 0.0
    %1543 = vmatpush2.msra.mxu0 0.0
    %1544 = vmatprep.subr.mxu0 0.0
    %1545 = vmatpush2.msra.mxu0 0.0
    %1546 = vmatprep.subr.mxu0 0.0
    %1547 = vmatpush2.msra.mxu0 0.0
    %1548 = vmatprep.subr.mxu0 0.0
    %1549 = vmatpush2.msra.mxu0 0.0
    %1550 = vmatprep.subr.mxu0 0.0
    %1551 = vmatpush2.msra.mxu0 0.0
    %1552 = vmatprep.subr.mxu0 0.0
    %1553 = vmatpush2.msra.mxu0 0.0
    %1554 = vmatprep.subr.mxu0 0.0
    %1555 = vmatpush2.msra.mxu0 0.0
    %1556 = vmatprep.subr.mxu0 0.0
    %1557 = vmatpush2.msra.mxu0 0.0
    %1558 = vmatprep.subr.mxu0 0.0
    %1559 = vmatpush2.msra.mxu0 0.0
    %1560 = vmatprep.subr.mxu0 0.0
    %1561 = vmatpush2.msra.mxu0 0.0
    %1562 = vmatprep.subr.mxu0 0.0
    %1563 = vmatpush2.msra.mxu0 0.0
    %1564 = vmatprep.subr.mxu0 0.0
    %1565 = vmatpush2.msra.mxu0 0.0
    %1566 = vmatprep.mubr.f32.mxu0 0.0
    %1567 = vmatmul.mubr.f32.gmra.mxu0 %v1500
    %v1568 = vpop.f32.mrf.mxu0
    %v1569 = vadd.f32 0.0, %v1568
    %v1570 = vpop.f32.mrf.mxu0
    %1571 = vdwg.mxu0
    %v1573 = vsel %vm56, %v1487, 0
    %1575 = vmatprep.subr.mxu0 0.0
    %1576 = vmatpush1.msra.mxu0 0.0
    %1577 = vmatprep.subr.mxu0 0.0
    %1578 = vmatpush1.msra.mxu0 0.0
    %1579 = vmatprep.subr.mxu0 0.0
    %1580 = vmatpush1.msra.mxu0 0.0
    %1581 = vmatprep.subr.mxu0 0.0
    %1582 = vmatpush1.msra.mxu0 0.0
    %1583 = vmatprep.subr.mxu0 0.0
    %1584 = vmatpush1.msra.mxu0 0.0
    %1585 = vmatprep.subr.mxu0 0.0
    %1586 = vmatpush1.msra.mxu0 0.0
    %1587 = vmatprep.subr.mxu0 0.0
    %1588 = vmatpush1.msra.mxu0 0.0
    %1589 = vmatprep.subr.mxu0 0.0
    %1590 = vmatpush1.msra.mxu0 0.0
    %1591 = vmatprep.subr.mxu0 0.0
    %1592 = vmatpush1.msra.mxu0 0.0
    %1593 = vmatprep.subr.mxu0 0.0
    %1594 = vmatpush1.msra.mxu0 0.0
    %1595 = vmatprep.subr.mxu0 0.0
    %1596 = vmatpush1.msra.mxu0 0.0
    %1597 = vmatprep.subr.mxu0 0.0
    %1598 = vmatpush1.msra.mxu0 0.0
    %1599 = vmatprep.subr.mxu0 0.0
    %1600 = vmatpush1.msra.mxu0 %v1493
    %1601 = vmatprep.subr.mxu0 0.0
    %1602 = vmatpush1.msra.mxu0 %v1492
    %1603 = vmatprep.subr.mxu0 0.0
    %1604 = vmatpush1.msra.mxu0 %v1491
    %1605 = vmatprep.subr.mxu0 0.0
    %1606 = vmatpush1.msra.mxu0 %v1490
    %1607 = vmatprep.subr.mxu0 0.0
    %1608 = vmatpush2.msra.mxu0 0.0
    %1609 = vmatprep.subr.mxu0 0.0
    %1610 = vmatpush2.msra.mxu0 0.0
    %1611 = vmatprep.subr.mxu0 0.0
    %1612 = vmatpush2.msra.mxu0 0.0
    %1613 = vmatprep.subr.mxu0 0.0
    %1614 = vmatpush2.msra.mxu0 0.0
    %1615 = vmatprep.subr.mxu0 0.0
    %1616 = vmatpush2.msra.mxu0 0.0
    %1617 = vmatprep.subr.mxu0 0.0
    %1618 = vmatpush2.msra.mxu0 0.0
    %1619 = vmatprep.subr.mxu0 0.0
    %1620 = vmatpush2.msra.mxu0 0.0
    %1621 = vmatprep.subr.mxu0 0.0
    %1622 = vmatpush2.msra.mxu0 0.0
    %1623 = vmatprep.subr.mxu0 0.0
    %1624 = vmatpush2.msra.mxu0 0.0
    %1625 = vmatprep.subr.mxu0 0.0
    %1626 = vmatpush2.msra.mxu0 0.0
    %1627 = vmatprep.subr.mxu0 0.0
    %1628 = vmatpush2.msra.mxu0 0.0
    %1629 = vmatprep.subr.mxu0 0.0
    %1630 = vmatpush2.msra.mxu0 0.0
    %1631 = vmatprep.subr.mxu0 0.0
    %1632 = vmatpush2.msra.mxu0 0.0
    %1633 = vmatprep.subr.mxu0 0.0
    %1634 = vmatpush2.msra.mxu0 0.0
    %1635 = vmatprep.subr.mxu0 0.0
    %1636 = vmatpush2.msra.mxu0 0.0
    %1637 = vmatprep.subr.mxu0 0.0
    %1638 = vmatpush2.msra.mxu0 0.0
    %1639 = vmatprep.mubr.f32.mxu0 0.0
    %1640 = vmatmul.mubr.f32.gmra.mxu0 %v1573
    %v1641 = vpop.f32.mrf.mxu0
    %v1642 = vadd.f32 %v1569, %v1641
    %v1643 = vpop.f32.mrf.mxu0
    %1644 = vdwg.mxu0
    %v1646 = vlaneseq
    %v1647 = vshrl.u32 %v1646, 7
    %v1648 = vsub.s32 0, %v1647
    %v1649 = vrot.slane %v1498, %v1648
    %v1651 = vadd.f32 %v1642, %v1649
    %v1652 = vxor.u32 %v1651, 2147483648
    %v1653 = vmul.f32 %v1652, 1.442695
    %v1654 = vpow.pop %v1653
    %v1655 = vadd.f32 %v1654, 1.0
    %v1656 = vrcp.pop %v1655
    %v1657 = vmul.f32 1.0, %v1656
    %v1658 = vtanh.pop %v1651
    %1660 = vrot.lane.b32.xlu0 %v1489, 32
    %v1661 = vpop.permute.xlu0 %1660
    %v1663 = vmul.f32 %v1657, %v1661
    %1665 = vrot.lane.b32.xlu0 %v1658, 32
    %v1666 = vpop.permute.xlu0 %1665
    %v1668 = vmul.f32 %v1657, %v1666
    %1670 = vrot.lane.b32.xlu0 %v1668, 32
    %v1671 = vpop.permute.xlu0 %1670
    %v1673 = vadd.f32 %v1663, %v1671
    %v1674 = vtanh.pop %v1673
    %1676 = vrot.lane.b32.xlu0 %v1674, 32
    %v1677 = vpop.permute.xlu0 %1676
    %v1679 = vmul.f32 %v1657, %v1677
    %1681 = vrot.lane.b32.xlu0 %v1679, 64
    %v1682 = vpop.permute.xlu0 %1681
    %1684 = vst.msk [vmem:[#allocation3] sm:$0xff] %vm56, %v1682
    %1686 = vrot.lane.b32.xlu0 %v1673, 96
    %v1687 = vpop.permute.xlu0 %1686
    %1689 = vst.msk [vmem:[#allocation4] sm:$0xff] %vm56, %v1687
    %v1690 = vld [vmem:[%s2] sm:$0xff]
    %1691 = vst.msk [vmem:[#allocation2] sm:$0xff] %vm56, %v1690
    %v1692 = vld [vmem:[#allocation2] sm:$0xff]
    %v1693 = vld [vmem:[#allocation3] sm:$0xff]
    %v1694 = vld [vmem:[#allocation4] sm:$0xff]
    %v1695 = vld [vmem:[%s7] sm:$0xff]
    %v1696 = vld [vmem:[%s7 + $0x8] sm:$0xff]
    %v1697 = vld [vmem:[%s7 + $0x10] sm:$0xff]
    %v1698 = vld [vmem:[%s7 + $0x18] sm:$0xff]
    %v1699 = vld [vmem:[%s8] sm:$0xff]
    %v1700 = vld [vmem:[%s8 + $0x8] sm:$0xff]
    %v1701 = vld [vmem:[%s8 + $0x10] sm:$0xff]
    %v1702 = vld [vmem:[%s8 + $0x18] sm:$0xff]
    %v1703 = vld [vmem:[%s9] sm:$0x1]
    %v1705 = vsel %vm56, %v1693, 0
    %1707 = vmatprep.subr.mxu0 0.0
    %1708 = vmatpush1.msra.mxu0 0.0
    %1709 = vmatprep.subr.mxu0 0.0
    %1710 = vmatpush1.msra.mxu0 0.0
    %1711 = vmatprep.subr.mxu0 0.0
    %1712 = vmatpush1.msra.mxu0 0.0
    %1713 = vmatprep.subr.mxu0 0.0
    %1714 = vmatpush1.msra.mxu0 0.0
    %1715 = vmatprep.subr.mxu0 0.0
    %1716 = vmatpush1.msra.mxu0 0.0
    %1717 = vmatprep.subr.mxu0 0.0
    %1718 = vmatpush1.msra.mxu0 0.0
    %1719 = vmatprep.subr.mxu0 0.0
    %1720 = vmatpush1.msra.mxu0 0.0
    %1721 = vmatprep.subr.mxu0 0.0
    %1722 = vmatpush1.msra.mxu0 0.0
    %1723 = vmatprep.subr.mxu0 0.0
    %1724 = vmatpush1.msra.mxu0 0.0
    %1725 = vmatprep.subr.mxu0 0.0
    %1726 = vmatpush1.msra.mxu0 0.0
    %1727 = vmatprep.subr.mxu0 0.0
    %1728 = vmatpush1.msra.mxu0 0.0
    %1729 = vmatprep.subr.mxu0 0.0
    %1730 = vmatpush1.msra.mxu0 0.0
    %1731 = vmatprep.subr.mxu0 0.0
    %1732 = vmatpush1.msra.mxu0 %v1702
    %1733 = vmatprep.subr.mxu0 0.0
    %1734 = vmatpush1.msra.mxu0 %v1701
    %1735 = vmatprep.subr.mxu0 0.0
    %1736 = vmatpush1.msra.mxu0 %v1700
    %1737 = vmatprep.subr.mxu0 0.0
    %1738 = vmatpush1.msra.mxu0 %v1699
    %1739 = vmatprep.subr.mxu0 0.0
    %1740 = vmatpush2.msra.mxu0 0.0
    %1741 = vmatprep.subr.mxu0 0.0
    %1742 = vmatpush2.msra.mxu0 0.0
    %1743 = vmatprep.subr.mxu0 0.0
    %1744 = vmatpush2.msra.mxu0 0.0
    %1745 = vmatprep.subr.mxu0 0.0
    %1746 = vmatpush2.msra.mxu0 0.0
    %1747 = vmatprep.subr.mxu0 0.0
    %1748 = vmatpush2.msra.mxu0 0.0
    %1749 = vmatprep.subr.mxu0 0.0
    %1750 = vmatpush2.msra.mxu0 0.0
    %1751 = vmatprep.subr.mxu0 0.0
    %1752 = vmatpush2.msra.mxu0 0.0
    %1753 = vmatprep.subr.mxu0 0.0
    %1754 = vmatpush2.msra.mxu0 0.0
    %1755 = vmatprep.subr.mxu0 0.0
    %1756 = vmatpush2.msra.mxu0 0.0
    %1757 = vmatprep.subr.mxu0 0.0
    %1758 = vmatpush2.msra.mxu0 0.0
    %1759 = vmatprep.subr.mxu0 0.0
    %1760 = vmatpush2.msra.mxu0 0.0
    %1761 = vmatprep.subr.mxu0 0.0
    %1762 = vmatpush2.msra.mxu0 0.0
    %1763 = vmatprep.subr.mxu0 0.0
    %1764 = vmatpush2.msra.mxu0 0.0
    %1765 = vmatprep.subr.mxu0 0.0
    %1766 = vmatpush2.msra.mxu0 0.0
    %1767 = vmatprep.subr.mxu0 0.0
    %1768 = vmatpush2.msra.mxu0 0.0
    %1769 = vmatprep.subr.mxu0 0.0
    %1770 = vmatpush2.msra.mxu0 0.0
    %1771 = vmatprep.mubr.f32.mxu0 0.0
    %1772 = vmatmul.mubr.f32.gmra.mxu0 %v1705
    %v1773 = vpop.f32.mrf.mxu0
    %v1774 = vadd.f32 0.0, %v1773
    %v1775 = vpop.f32.mrf.mxu0
    %1776 = vdwg.mxu0
    %v1778 = vsel %vm56, %v1692, 0
    %1780 = vmatprep.subr.mxu0 0.0
    %1781 = vmatpush1.msra.mxu0 0.0
    %1782 = vmatprep.subr.mxu0 0.0
    %1783 = vmatpush1.msra.mxu0 0.0
    %1784 = vmatprep.subr.mxu0 0.0
    %1785 = vmatpush1.msra.mxu0 0.0
    %1786 = vmatprep.subr.mxu0 0.0
    %1787 = vmatpush1.msra.mxu0 0.0
    %1788 = vmatprep.subr.mxu0 0.0
    %1789 = vmatpush1.msra.mxu0 0.0
    %1790 = vmatprep.subr.mxu0 0.0
    %1791 = vmatpush1.msra.mxu0 0.0
    %1792 = vmatprep.subr.mxu0 0.0
    %1793 = vmatpush1.msra.mxu0 0.0
    %1794 = vmatprep.subr.mxu0 0.0
    %1795 = vmatpush1.msra.mxu0 0.0
    %1796 = vmatprep.subr.mxu0 0.0
    %1797 = vmatpush1.msra.mxu0 0.0
    %1798 = vmatprep.subr.mxu0 0.0
    %1799 = vmatpush1.msra.mxu0 0.0
    %1800 = vmatprep.subr.mxu0 0.0
    %1801 = vmatpush1.msra.mxu0 0.0
    %1802 = vmatprep.subr.mxu0 0.0
    %1803 = vmatpush1.msra.mxu0 0.0
    %1804 = vmatprep.subr.mxu0 0.0
    %1805 = vmatpush1.msra.mxu0 %v1698
    %1806 = vmatprep.subr.mxu0 0.0
    %1807 = vmatpush1.msra.mxu0 %v1697
    %1808 = vmatprep.subr.mxu0 0.0
    %1809 = vmatpush1.msra.mxu0 %v1696
    %1810 = vmatprep.subr.mxu0 0.0
    %1811 = vmatpush1.msra.mxu0 %v1695
    %1812 = vmatprep.subr.mxu0 0.0
    %1813 = vmatpush2.msra.mxu0 0.0
    %1814 = vmatprep.subr.mxu0 0.0
    %1815 = vmatpush2.msra.mxu0 0.0
    %1816 = vmatprep.subr.mxu0 0.0
    %1817 = vmatpush2.msra.mxu0 0.0
    %1818 = vmatprep.subr.mxu0 0.0
    %1819 = vmatpush2.msra.mxu0 0.0
    %1820 = vmatprep.subr.mxu0 0.0
    %1821 = vmatpush2.msra.mxu0 0.0
    %1822 = vmatprep.subr.mxu0 0.0
    %1823 = vmatpush2.msra.mxu0 0.0
    %1824 = vmatprep.subr.mxu0 0.0
    %1825 = vmatpush2.msra.mxu0 0.0
    %1826 = vmatprep.subr.mxu0 0.0
    %1827 = vmatpush2.msra.mxu0 0.0
    %1828 = vmatprep.subr.mxu0 0.0
    %1829 = vmatpush2.msra.mxu0 0.0
    %1830 = vmatprep.subr.mxu0 0.0
    %1831 = vmatpush2.msra.mxu0 0.0
    %1832 = vmatprep.subr.mxu0 0.0
    %1833 = vmatpush2.msra.mxu0 0.0
    %1834 = vmatprep.subr.mxu0 0.0
    %1835 = vmatpush2.msra.mxu0 0.0
    %1836 = vmatprep.subr.mxu0 0.0
    %1837 = vmatpush2.msra.mxu0 0.0
    %1838 = vmatprep.subr.mxu0 0.0
    %1839 = vmatpush2.msra.mxu0 0.0
    %1840 = vmatprep.subr.mxu0 0.0
    %1841 = vmatpush2.msra.mxu0 0.0
    %1842 = vmatprep.subr.mxu0 0.0
    %1843 = vmatpush2.msra.mxu0 0.0
    %1844 = vmatprep.mubr.f32.mxu0 0.0
    %1845 = vmatmul.mubr.f32.gmra.mxu0 %v1778
    %v1846 = vpop.f32.mrf.mxu0
    %v1847 = vadd.f32 %v1774, %v1846
    %v1848 = vpop.f32.mrf.mxu0
    %1849 = vdwg.mxu0
    %v1851 = vlaneseq
    %v1852 = vshrl.u32 %v1851, 7
    %v1853 = vsub.s32 0, %v1852
    %v1854 = vrot.slane %v1703, %v1853
    %v1856 = vadd.f32 %v1847, %v1854
    %v1857 = vxor.u32 %v1856, 2147483648
    %v1858 = vmul.f32 %v1857, 1.442695
    %v1859 = vpow.pop %v1858
    %v1860 = vadd.f32 %v1859, 1.0
    %v1861 = vrcp.pop %v1860
    %v1862 = vmul.f32 1.0, %v1861
    %v1863 = vtanh.pop %v1856
    %1865 = vrot.lane.b32.xlu0 %v1694, 32
    %v1866 = vpop.permute.xlu0 %1865
    %v1868 = vmul.f32 %v1862, %v1866
    %1870 = vrot.lane.b32.xlu0 %v1863, 32
    %v1871 = vpop.permute.xlu0 %1870
    %v1873 = vmul.f32 %v1862, %v1871
    %1875 = vrot.lane.b32.xlu0 %v1873, 32
    %v1876 = vpop.permute.xlu0 %1875
    %v1878 = vadd.f32 %v1868, %v1876
    %v1879 = vtanh.pop %v1878
    %1881 = vrot.lane.b32.xlu0 %v1879, 32
    %v1882 = vpop.permute.xlu0 %1881
    %v1884 = vmul.f32 %v1862, %v1882
    %1886 = vrot.lane.b32.xlu0 %v1884, 64
    %v1887 = vpop.permute.xlu0 %1886
    %1889 = vst.msk [vmem:[#allocation3] sm:$0xff] %vm56, %v1887
    %1891 = vrot.lane.b32.xlu0 %v1878, 96
    %v1892 = vpop.permute.xlu0 %1891
    %1894 = vst.msk [vmem:[#allocation4] sm:$0xff] %vm56, %v1892
    %v1895 = vld [vmem:[%s10] sm:$0xff]
    %v1896 = vld [vmem:[%s10 + $0x8] sm:$0xff]
    %v1897 = vld [vmem:[%s10 + $0x10] sm:$0xff]
    %v1898 = vld [vmem:[%s10 + $0x18] sm:$0xff]
    %v1899 = vld [vmem:[%s11] sm:$0x1]
    %v1901 = vlaneseq
    %v1902 = vshrl.u32 %v1901, 7
    %v1903 = vsub.s32 0, %v1902
    %v1904 = vrot.slane %v1899, %v1903
    %v1906 = vsel %vm56, %v1887, 0
    %1908 = vmatprep.subr.mxu0 0.0
    %1909 = vmatpush1.msra.mxu0 0.0
    %1910 = vmatprep.subr.mxu0 0.0
    %1911 = vmatpush1.msra.mxu0 0.0
    %1912 = vmatprep.subr.mxu0 0.0
    %1913 = vmatpush1.msra.mxu0 0.0
    %1914 = vmatprep.subr.mxu0 0.0
    %1915 = vmatpush1.msra.mxu0 0.0
    %1916 = vmatprep.subr.mxu0 0.0
    %1917 = vmatpush1.msra.mxu0 0.0
    %1918 = vmatprep.subr.mxu0 0.0
    %1919 = vmatpush1.msra.mxu0 0.0
    %1920 = vmatprep.subr.mxu0 0.0
    %1921 = vmatpush1.msra.mxu0 0.0
    %1922 = vmatprep.subr.mxu0 0.0
    %1923 = vmatpush1.msra.mxu0 0.0
    %1924 = vmatprep.subr.mxu0 0.0
    %1925 = vmatpush1.msra.mxu0 0.0
    %1926 = vmatprep.subr.mxu0 0.0
    %1927 = vmatpush1.msra.mxu0 0.0
    %1928 = vmatprep.subr.mxu0 0.0
    %1929 = vmatpush1.msra.mxu0 0.0
    %1930 = vmatprep.subr.mxu0 0.0
    %1931 = vmatpush1.msra.mxu0 0.0
    %1932 = vmatprep.subr.mxu0 0.0
    %1933 = vmatpush1.msra.mxu0 %v1898
    %1934 = vmatprep.subr.mxu0 0.0
    %1935 = vmatpush1.msra.mxu0 %v1897
    %1936 = vmatprep.subr.mxu0 0.0
    %1937 = vmatpush1.msra.mxu0 %v1896
    %1938 = vmatprep.subr.mxu0 0.0
    %1939 = vmatpush1.msra.mxu0 %v1895
    %1940 = vmatprep.subr.mxu0 0.0
    %1941 = vmatpush2.msra.mxu0 0.0
    %1942 = vmatprep.subr.mxu0 0.0
    %1943 = vmatpush2.msra.mxu0 0.0
    %1944 = vmatprep.subr.mxu0 0.0
    %1945 = vmatpush2.msra.mxu0 0.0
    %1946 = vmatprep.subr.mxu0 0.0
    %1947 = vmatpush2.msra.mxu0 0.0
    %1948 = vmatprep.subr.mxu0 0.0
    %1949 = vmatpush2.msra.mxu0 0.0
    %1950 = vmatprep.subr.mxu0 0.0
    %1951 = vmatpush2.msra.mxu0 0.0
    %1952 = vmatprep.subr.mxu0 0.0
    %1953 = vmatpush2.msra.mxu0 0.0
    %1954 = vmatprep.subr.mxu0 0.0
    %1955 = vmatpush2.msra.mxu0 0.0
    %1956 = vmatprep.subr.mxu0 0.0
    %1957 = vmatpush2.msra.mxu0 0.0
    %1958 = vmatprep.subr.mxu0 0.0
    %1959 = vmatpush2.msra.mxu0 0.0
    %1960 = vmatprep.subr.mxu0 0.0
    %1961 = vmatpush2.msra.mxu0 0.0
    %1962 = vmatprep.subr.mxu0 0.0
    %1963 = vmatpush2.msra.mxu0 0.0
    %1964 = vmatprep.subr.mxu0 0.0
    %1965 = vmatpush2.msra.mxu0 0.0
    %1966 = vmatprep.subr.mxu0 0.0
    %1967 = vmatpush2.msra.mxu0 0.0
    %1968 = vmatprep.subr.mxu0 0.0
    %1969 = vmatpush2.msra.mxu0 0.0
    %1970 = vmatprep.subr.mxu0 0.0
    %1971 = vmatpush2.msra.mxu0 0.0
    %1972 = vmatprep.mubr.f32.mxu0 0.0
    %1973 = vmatmul.mubr.f32.gmra.mxu0 %v1906
    %v1974 = vpop.f32.mrf.mxu0
    %v1975 = vadd.f32 %v1904, %v1974
    %v1976 = vpop.f32.mrf.mxu0
    %1977 = vdwg.mxu0
    %s1978 = scalar_lea.vmem [#allocation8], 8
    %1979 = vst [vmem:[%s1978] sm:$0xff] %v1975
    %s1980 = sld [smem:[#allocation5]]
    %p1981 = scmp.eq.s32.totalorder %s1980, 1
    // Predicated region
    $region54: #{seq2seq_forward.1} parent=1 // pred_check
      %p1982 = pneg %p1981
    $region55: #{seq2seq_forward.1} parent=1 // pred_check_branch
      %1984 = sbr.rel (%p1982) target = $region57
    $region56: #{seq2seq_forward.1} parent=1 // pred_region
      %s1985 = scalar_lea.vmem %s2, 8
      %v1986 = vld [vmem:[%s1985] sm:$0xff]
      %1987 = vst.msk [vmem:[#allocation2] sm:$0xff] %vm56, %v1986
    $region57: #{seq2seq_forward.1} parent=1 // pred_fallthru
      _
    %s1988 = sld [smem:[#allocation5]]
    %p1989 = scmp.eq.s32.totalorder %s1988, 0
    // Predicated region
    $region58: #{seq2seq_forward.1} parent=1 // pred_check
      %p1990 = pneg %p1989
    $region59: #{seq2seq_forward.1} parent=1 // pred_check_branch
      %1992 = sbr.rel (%p1990) target = $region61
    $region60: #{seq2seq_forward.1} parent=1 // pred_region
      %v1993 = vlaneseq
      %v1994 = vand.u32 %v1993, 127
      %1995 = vmax.xlane.f32.xlu0 %v1975
      %v1996 = vpop.xlane.xlu0 %1995
      %vm1997 = vcmp.eq.f32.partialorder %v1975, %v1996
      %v1998 = vsel %vm1997, %v1994, 128
      %v1999 = vand.u32 %v1998, 65535
      %v2000 = vshra.s32 %v1998, 16
      %v2001 = vcvt.s32.f32 %v1999
      %v2002 = vcvt.s32.f32 %v2000
      %2003 = vmin.xlane.f32.xlu0 %v2002
      %v2004 = vpop.xlane.xlu0 %2003
      %vm2005 = vcmp.eq.f32.partialorder %v2002, %v2004
      %v2006 = vsel %vm2005, %v2001, inf
      %2007 = vmin.xlane.f32.xlu0 %v2006
      %v2008 = vpop.xlane.xlu0 %2007
      %v2009 = vcvt.f32.s32 %v2008
      %v2010 = vcvt.f32.s32 %v2004
      %v2011 = vshll.u32 %v2010, 16
      %v2012 = vadd.s32 %v2011, %v2009
      %vm2013 = vcmp.eq.s32.totalorder %v1994, %v2012
      %v2014 = vsel %vm2013, 1, 0
      %v2015 = vcvt.s32.f32 %v2014
      %v2016 = vld [vmem:[%s3] sm:$0xff]
      %v2017 = vld [vmem:[%s3 + $0x8] sm:$0xff]
      %v2018 = vld [vmem:[%s3 + $0x10] sm:$0xff]
      %v2019 = vld [vmem:[%s3 + $0x18] sm:$0xff]
      %v2020 = vld [vmem:[%s3 + $0x20] sm:$0xff]
      %v2021 = vld [vmem:[%s3 + $0x28] sm:$0xff]
      %v2022 = vld [vmem:[%s3 + $0x30] sm:$0xff]
      %v2023 = vld [vmem:[%s3 + $0x38] sm:$0xff]
      %v2024 = vld [vmem:[%s3 + $0x40] sm:$0xff]
      %v2025 = vld [vmem:[%s3 + $0x48] sm:$0xff]
      %v2026 = vld [vmem:[%s3 + $0x50] sm:$0xff]
      %v2027 = vld [vmem:[%s3 + $0x58] sm:$0xff]
      %v2028 = vld [vmem:[%s3 + $0x60] sm:$0xff]
      %v2029 = vld [vmem:[%s3 + $0x68] sm:$0xff]
      %v2030 = vld [vmem:[%s3 + $0x70] sm:$0xff]
      %v2031 = vld [vmem:[%s3 + $0x78] sm:$0xff]
      %2032 = vmatprep.subr.mxu0 0.0
      %2033 = vmatpush1.msra.mxu0 %v2031
      %2034 = vmatprep.subr.mxu0 0.0
      %2035 = vmatpush1.msra.mxu0 %v2030
      %2036 = vmatprep.subr.mxu0 0.0
      %2037 = vmatpush1.msra.mxu0 %v2029
      %2038 = vmatprep.subr.mxu0 0.0
      %2039 = vmatpush1.msra.mxu0 %v2028
      %2040 = vmatprep.subr.mxu0 0.0
      %2041 = vmatpush1.msra.mxu0 %v2027
      %2042 = vmatprep.subr.mxu0 0.0
      %2043 = vmatpush1.msra.mxu0 %v2026
      %2044 = vmatprep.subr.mxu0 0.0
      %2045 = vmatpush1.msra.mxu0 %v2025
      %2046 = vmatprep.subr.mxu0 0.0
      %2047 = vmatpush1.msra.mxu0 %v2024
      %2048 = vmatprep.subr.mxu0 0.0
      %2049 = vmatpush1.msra.mxu0 %v2023
      %2050 = vmatprep.subr.mxu0 0.0
      %2051 = vmatpush1.msra.mxu0 %v2022
      %2052 = vmatprep.subr.mxu0 0.0
      %2053 = vmatpush1.msra.mxu0 %v2021
      %2054 = vmatprep.subr.mxu0 0.0
      %2055 = vmatpush1.msra.mxu0 %v2020
      %2056 = vmatprep.subr.mxu0 0.0
      %2057 = vmatpush1.msra.mxu0 %v2019
      %2058 = vmatprep.subr.mxu0 0.0
      %2059 = vmatpush1.msra.mxu0 %v2018
      %2060 = vmatprep.subr.mxu0 0.0
      %2061 = vmatpush1.msra.mxu0 %v2017
      %2062 = vmatprep.subr.mxu0 0.0
      %2063 = vmatpush1.msra.mxu0 %v2016
      %2064 = vmatprep.subr.mxu0 0.0
      %2065 = vmatpush2.msra.mxu0 0.0
      %2066 = vmatprep.subr.mxu0 0.0
      %2067 = vmatpush2.msra.mxu0 0.0
      %2068 = vmatprep.subr.mxu0 0.0
      %2069 = vmatpush2.msra.mxu0 0.0
      %2070 = vmatprep.subr.mxu0 0.0
      %2071 = vmatpush2.msra.mxu0 0.0
      %2072 = vmatprep.subr.mxu0 0.0
      %2073 = vmatpush2.msra.mxu0 0.0
      %2074 = vmatprep.subr.mxu0 0.0
      %2075 = vmatpush2.msra.mxu0 0.0
      %2076 = vmatprep.subr.mxu0 0.0
      %2077 = vmatpush2.msra.mxu0 0.0
      %2078 = vmatprep.subr.mxu0 0.0
      %2079 = vmatpush2.msra.mxu0 0.0
      %2080 = vmatprep.subr.mxu0 0.0
      %2081 = vmatpush2.msra.mxu0 0.0
      %2082 = vmatprep.subr.mxu0 0.0
      %2083 = vmatpush2.msra.mxu0 0.0
      %2084 = vmatprep.subr.mxu0 0.0
      %2085 = vmatpush2.msra.mxu0 0.0
      %2086 = vmatprep.subr.mxu0 0.0
      %2087 = vmatpush2.msra.mxu0 0.0
      %2088 = vmatprep.subr.mxu0 0.0
      %2089 = vmatpush2.msra.mxu0 0.0
      %2090 = vmatprep.subr.mxu0 0.0
      %2091 = vmatpush2.msra.mxu0 0.0
      %2092 = vmatprep.subr.mxu0 0.0
      %2093 = vmatpush2.msra.mxu0 0.0
      %2094 = vmatprep.subr.mxu0 0.0
      %2095 = vmatpush2.msra.mxu0 0.0
      %2096 = vmatprep.mubr.f32.mxu0 0.0
      %2097 = vmatmul.mubr.f32.gmra.mxu0 %v2015
      %v2098 = vpop.f32.mrf.mxu0
      %v2099 = vadd.f32 0.0, %v2098
      %v2100 = vpop.f32.mrf.mxu0
      %2101 = vdwg.mxu0
      %2102 = vst.msk [vmem:[#allocation2] sm:$0xff] %vm56, %v2099
    $region61: #{seq2seq_forward.1} parent=1 // pred_fallthru
      _
    %v2103 = vld [vmem:[#allocation2] sm:$0xff]
    %v2104 = vld [vmem:[#allocation3] sm:$0xff]
    %v2105 = vld [vmem:[#allocation4] sm:$0xff]
    %v2106 = vld [vmem:[%s7] sm:$0xff]
    %v2107 = vld [vmem:[%s7 + $0x8] sm:$0xff]
    %v2108 = vld [vmem:[%s7 + $0x10] sm:$0xff]
    %v2109 = vld [vmem:[%s7 + $0x18] sm:$0xff]
    %v2110 = vld [vmem:[%s8] sm:$0xff]
    %v2111 = vld [vmem:[%s8 + $0x8] sm:$0xff]
    %v2112 = vld [vmem:[%s8 + $0x10] sm:$0xff]
    %v2113 = vld [vmem:[%s8 + $0x18] sm:$0xff]
    %v2114 = vld [vmem:[%s9] sm:$0x1]
    %v2116 = vsel %vm56, %v2104, 0
    %2118 = vmatprep.subr.mxu0 0.0
    %2119 = vmatpush1.msra.mxu0 0.0
    %2120 = vmatprep.subr.mxu0 0.0
    %2121 = vmatpush1.msra.mxu0 0.0
    %2122 = vmatprep.subr.mxu0 0.0
    %2123 = vmatpush1.msra.mxu0 0.0
    %2124 = vmatprep.subr.mxu0 0.0
    %2125 = vmatpush1.msra.mxu0 0.0
    %2126 = vmatprep.subr.mxu0 0.0
    %2127 = vmatpush1.msra.mxu0 0.0
    %2128 = vmatprep.subr.mxu0 0.0
    %2129 = vmatpush1.msra.mxu0 0.0
    %2130 = vmatprep.subr.mxu0 0.0
    %2131 = vmatpush1.msra.mxu0 0.0
    %2132 = vmatprep.subr.mxu0 0.0
    %2133 = vmatpush1.msra.mxu0 0.0
    %2134 = vmatprep.subr.mxu0 0.0
    %2135 = vmatpush1.msra.mxu0 0.0
    %2136 = vmatprep.subr.mxu0 0.0
    %2137 = vmatpush1.msra.mxu0 0.0
    %2138 = vmatprep.subr.mxu0 0.0
    %2139 = vmatpush1.msra.mxu0 0.0
    %2140 = vmatprep.subr.mxu0 0.0
    %2141 = vmatpush1.msra.mxu0 0.0
    %2142 = vmatprep.subr.mxu0 0.0
    %2143 = vmatpush1.msra.mxu0 %v2113
    %2144 = vmatprep.subr.mxu0 0.0
    %2145 = vmatpush1.msra.mxu0 %v2112
    %2146 = vmatprep.subr.mxu0 0.0
    %2147 = vmatpush1.msra.mxu0 %v2111
    %2148 = vmatprep.subr.mxu0 0.0
    %2149 = vmatpush1.msra.mxu0 %v2110
    %2150 = vmatprep.subr.mxu0 0.0
    %2151 = vmatpush2.msra.mxu0 0.0
    %2152 = vmatprep.subr.mxu0 0.0
    %2153 = vmatpush2.msra.mxu0 0.0
    %2154 = vmatprep.subr.mxu0 0.0
    %2155 = vmatpush2.msra.mxu0 0.0
    %2156 = vmatprep.subr.mxu0 0.0
    %2157 = vmatpush2.msra.mxu0 0.0
    %2158 = vmatprep.subr.mxu0 0.0
    %2159 = vmatpush2.msra.mxu0 0.0
    %2160 = vmatprep.subr.mxu0 0.0
    %2161 = vmatpush2.msra.mxu0 0.0
    %2162 = vmatprep.subr.mxu0 0.0
    %2163 = vmatpush2.msra.mxu0 0.0
    %2164 = vmatprep.subr.mxu0 0.0
    %2165 = vmatpush2.msra.mxu0 0.0
    %2166 = vmatprep.subr.mxu0 0.0
    %2167 = vmatpush2.msra.mxu0 0.0
    %2168 = vmatprep.subr.mxu0 0.0
    %2169 = vmatpush2.msra.mxu0 0.0
    %2170 = vmatprep.subr.mxu0 0.0
    %2171 = vmatpush2.msra.mxu0 0.0
    %2172 = vmatprep.subr.mxu0 0.0
    %2173 = vmatpush2.msra.mxu0 0.0
    %2174 = vmatprep.subr.mxu0 0.0
    %2175 = vmatpush2.msra.mxu0 0.0
    %2176 = vmatprep.subr.mxu0 0.0
    %2177 = vmatpush2.msra.mxu0 0.0
    %2178 = vmatprep.subr.mxu0 0.0
    %2179 = vmatpush2.msra.mxu0 0.0
    %2180 = vmatprep.subr.mxu0 0.0
    %2181 = vmatpush2.msra.mxu0 0.0
    %2182 = vmatprep.mubr.f32.mxu0 0.0
    %2183 = vmatmul.mubr.f32.gmra.mxu0 %v2116
    %v2184 = vpop.f32.mrf.mxu0
    %v2185 = vadd.f32 0.0, %v2184
    %v2186 = vpop.f32.mrf.mxu0
    %2187 = vdwg.mxu0
    %v2189 = vsel %vm56, %v2103, 0
    %2191 = vmatprep.subr.mxu0 0.0
    %2192 = vmatpush1.msra.mxu0 0.0
    %2193 = vmatprep.subr.mxu0 0.0
    %2194 = vmatpush1.msra.mxu0 0.0
    %2195 = vmatprep.subr.mxu0 0.0
    %2196 = vmatpush1.msra.mxu0 0.0
    %2197 = vmatprep.subr.mxu0 0.0
    %2198 = vmatpush1.msra.mxu0 0.0
    %2199 = vmatprep.subr.mxu0 0.0
    %2200 = vmatpush1.msra.mxu0 0.0
    %2201 = vmatprep.subr.mxu0 0.0
    %2202 = vmatpush1.msra.mxu0 0.0
    %2203 = vmatprep.subr.mxu0 0.0
    %2204 = vmatpush1.msra.mxu0 0.0
    %2205 = vmatprep.subr.mxu0 0.0
    %2206 = vmatpush1.msra.mxu0 0.0
    %2207 = vmatprep.subr.mxu0 0.0
    %2208 = vmatpush1.msra.mxu0 0.0
    %2209 = vmatprep.subr.mxu0 0.0
    %2210 = vmatpush1.msra.mxu0 0.0
    %2211 = vmatprep.subr.mxu0 0.0
    %2212 = vmatpush1.msra.mxu0 0.0
    %2213 = vmatprep.subr.mxu0 0.0
    %2214 = vmatpush1.msra.mxu0 0.0
    %2215 = vmatprep.subr.mxu0 0.0
    %2216 = vmatpush1.msra.mxu0 %v2109
    %2217 = vmatprep.subr.mxu0 0.0
    %2218 = vmatpush1.msra.mxu0 %v2108
    %2219 = vmatprep.subr.mxu0 0.0
    %2220 = vmatpush1.msra.mxu0 %v2107
    %2221 = vmatprep.subr.mxu0 0.0
    %2222 = vmatpush1.msra.mxu0 %v2106
    %2223 = vmatprep.subr.mxu0 0.0
    %2224 = vmatpush2.msra.mxu0 0.0
    %2225 = vmatprep.subr.mxu0 0.0
    %2226 = vmatpush2.msra.mxu0 0.0
    %2227 = vmatprep.subr.mxu0 0.0
    %2228 = vmatpush2.msra.mxu0 0.0
    %2229 = vmatprep.subr.mxu0 0.0
    %2230 = vmatpush2.msra.mxu0 0.0
    %2231 = vmatprep.subr.mxu0 0.0
    %2232 = vmatpush2.msra.mxu0 0.0
    %2233 = vmatprep.subr.mxu0 0.0
    %2234 = vmatpush2.msra.mxu0 0.0
    %2235 = vmatprep.subr.mxu0 0.0
    %2236 = vmatpush2.msra.mxu0 0.0
    %2237 = vmatprep.subr.mxu0 0.0
    %2238 = vmatpush2.msra.mxu0 0.0
    %2239 = vmatprep.subr.mxu0 0.0
    %2240 = vmatpush2.msra.mxu0 0.0
    %2241 = vmatprep.subr.mxu0 0.0
    %2242 = vmatpush2.msra.mxu0 0.0
    %2243 = vmatprep.subr.mxu0 0.0
    %2244 = vmatpush2.msra.mxu0 0.0
    %2245 = vmatprep.subr.mxu0 0.0
    %2246 = vmatpush2.msra.mxu0 0.0
    %2247 = vmatprep.subr.mxu0 0.0
    %2248 = vmatpush2.msra.mxu0 0.0
    %2249 = vmatprep.subr.mxu0 0.0
    %2250 = vmatpush2.msra.mxu0 0.0
    %2251 = vmatprep.subr.mxu0 0.0
    %2252 = vmatpush2.msra.mxu0 0.0
    %2253 = vmatprep.subr.mxu0 0.0
    %2254 = vmatpush2.msra.mxu0 0.0
    %2255 = vmatprep.mubr.f32.mxu0 0.0
    %2256 = vmatmul.mubr.f32.gmra.mxu0 %v2189
    %v2257 = vpop.f32.mrf.mxu0
    %v2258 = vadd.f32 %v2185, %v2257
    %v2259 = vpop.f32.mrf.mxu0
    %2260 = vdwg.mxu0
    %v2262 = vlaneseq
    %v2263 = vshrl.u32 %v2262, 7
    %v2264 = vsub.s32 0, %v2263
    %v2265 = vrot.slane %v2114, %v2264
    %v2267 = vadd.f32 %v2258, %v2265
    %v2268 = vxor.u32 %v2267, 2147483648
    %v2269 = vmul.f32 %v2268, 1.442695
    %v2270 = vpow.pop %v2269
    %v2271 = vadd.f32 %v2270, 1.0
    %v2272 = vrcp.pop %v2271
    %v2273 = vmul.f32 1.0, %v2272
    %v2274 = vtanh.pop %v2267
    %2276 = vrot.lane.b32.xlu0 %v2105, 32
    %v2277 = vpop.permute.xlu0 %2276
    %v2279 = vmul.f32 %v2273, %v2277
    %2281 = vrot.lane.b32.xlu0 %v2274, 32
    %v2282 = vpop.permute.xlu0 %2281
    %v2284 = vmul.f32 %v2273, %v2282
    %2286 = vrot.lane.b32.xlu0 %v2284, 32
    %v2287 = vpop.permute.xlu0 %2286
    %v2289 = vadd.f32 %v2279, %v2287
    %v2290 = vtanh.pop %v2289
    %2292 = vrot.lane.b32.xlu0 %v2290, 32
    %v2293 = vpop.permute.xlu0 %2292
    %v2295 = vmul.f32 %v2273, %v2293
    %2297 = vrot.lane.b32.xlu0 %v2295, 64
    %v2298 = vpop.permute.xlu0 %2297
    %2300 = vst.msk [vmem:[#allocation3] sm:$0xff] %vm56, %v2298
    %2302 = vrot.lane.b32.xlu0 %v2289, 96
    %v2303 = vpop.permute.xlu0 %2302
    %2305 = vst.msk [vmem:[#allocation4] sm:$0xff] %vm56, %v2303
    %v2306 = vld [vmem:[%s10] sm:$0xff]
    %v2307 = vld [vmem:[%s10 + $0x8] sm:$0xff]
    %v2308 = vld [vmem:[%s10 + $0x10] sm:$0xff]
    %v2309 = vld [vmem:[%s10 + $0x18] sm:$0xff]
    %v2310 = vld [vmem:[%s11] sm:$0x1]
    %v2312 = vlaneseq
    %v2313 = vshrl.u32 %v2312, 7
    %v2314 = vsub.s32 0, %v2313
    %v2315 = vrot.slane %v2310, %v2314
    %v2317 = vsel %vm56, %v2298, 0
    %2319 = vmatprep.subr.mxu0 0.0
    %2320 = vmatpush1.msra.mxu0 0.0
    %2321 = vmatprep.subr.mxu0 0.0
    %2322 = vmatpush1.msra.mxu0 0.0
    %2323 = vmatprep.subr.mxu0 0.0
    %2324 = vmatpush1.msra.mxu0 0.0
    %2325 = vmatprep.subr.mxu0 0.0
    %2326 = vmatpush1.msra.mxu0 0.0
    %2327 = vmatprep.subr.mxu0 0.0
    %2328 = vmatpush1.msra.mxu0 0.0
    %2329 = vmatprep.subr.mxu0 0.0
    %2330 = vmatpush1.msra.mxu0 0.0
    %2331 = vmatprep.subr.mxu0 0.0
    %2332 = vmatpush1.msra.mxu0 0.0
    %2333 = vmatprep.subr.mxu0 0.0
    %2334 = vmatpush1.msra.mxu0 0.0
    %2335 = vmatprep.subr.mxu0 0.0
    %2336 = vmatpush1.msra.mxu0 0.0
    %2337 = vmatprep.subr.mxu0 0.0
    %2338 = vmatpush1.msra.mxu0 0.0
    %2339 = vmatprep.subr.mxu0 0.0
    %2340 = vmatpush1.msra.mxu0 0.0
    %2341 = vmatprep.subr.mxu0 0.0
    %2342 = vmatpush1.msra.mxu0 0.0
    %2343 = vmatprep.subr.mxu0 0.0
    %2344 = vmatpush1.msra.mxu0 %v2309
    %2345 = vmatprep.subr.mxu0 0.0
    %2346 = vmatpush1.msra.mxu0 %v2308
    %2347 = vmatprep.subr.mxu0 0.0
    %2348 = vmatpush1.msra.mxu0 %v2307
    %2349 = vmatprep.subr.mxu0 0.0
    %2350 = vmatpush1.msra.mxu0 %v2306
    %2351 = vmatprep.subr.mxu0 0.0
    %2352 = vmatpush2.msra.mxu0 0.0
    %2353 = vmatprep.subr.mxu0 0.0
    %2354 = vmatpush2.msra.mxu0 0.0
    %2355 = vmatprep.subr.mxu0 0.0
    %2356 = vmatpush2.msra.mxu0 0.0
    %2357 = vmatprep.subr.mxu0 0.0
    %2358 = vmatpush2.msra.mxu0 0.0
    %2359 = vmatprep.subr.mxu0 0.0
    %2360 = vmatpush2.msra.mxu0 0.0
    %2361 = vmatprep.subr.mxu0 0.0
    %2362 = vmatpush2.msra.mxu0 0.0
    %2363 = vmatprep.subr.mxu0 0.0
    %2364 = vmatpush2.msra.mxu0 0.0
    %2365 = vmatprep.subr.mxu0 0.0
    %2366 = vmatpush2.msra.mxu0 0.0
    %2367 = vmatprep.subr.mxu0 0.0
    %2368 = vmatpush2.msra.mxu0 0.0
    %2369 = vmatprep.subr.mxu0 0.0
    %2370 = vmatpush2.msra.mxu0 0.0
    %2371 = vmatprep.subr.mxu0 0.0
    %2372 = vmatpush2.msra.mxu0 0.0
    %2373 = vmatprep.subr.mxu0 0.0
    %2374 = vmatpush2.msra.mxu0 0.0
    %2375 = vmatprep.subr.mxu0 0.0
    %2376 = vmatpush2.msra.mxu0 0.0
    %2377 = vmatprep.subr.mxu0 0.0
    %2378 = vmatpush2.msra.mxu0 0.0
    %2379 = vmatprep.subr.mxu0 0.0
    %2380 = vmatpush2.msra.mxu0 0.0
    %2381 = vmatprep.subr.mxu0 0.0
    %2382 = vmatpush2.msra.mxu0 0.0
    %2383 = vmatprep.mubr.f32.mxu0 0.0
    %2384 = vmatmul.mubr.f32.gmra.mxu0 %v2317
    %v2385 = vpop.f32.mrf.mxu0
    %v2386 = vadd.f32 %v2315, %v2385
    %v2387 = vpop.f32.mrf.mxu0
    %2388 = vdwg.mxu0
    %s2389 = scalar_lea.vmem [#allocation8], 16
    %2390 = vst [vmem:[%s2389] sm:$0xff] %v2386
    %s2391 = sld [smem:[#allocation5 + $0x1]]
    %p2392 = scmp.eq.s32.totalorder %s2391, 1
    // Predicated region
    $region62: #{seq2seq_forward.1} parent=1 // pred_check
      %p2393 = pneg %p2392
    $region63: #{seq2seq_forward.1} parent=1 // pred_check_branch
      %2395 = sbr.rel (%p2393) target = $region65
    $region64: #{seq2seq_forward.1} parent=1 // pred_region
      %s2396 = scalar_lea.vmem %s2, 16
      %v2397 = vld [vmem:[%s2396] sm:$0xff]
      %2398 = vst.msk [vmem:[#allocation2] sm:$0xff] %vm56, %v2397
    $region65: #{seq2seq_forward.1} parent=1 // pred_fallthru
      _
    %s2399 = sld [smem:[#allocation5 + $0x1]]
    %p2400 = scmp.eq.s32.totalorder %s2399, 0
    // Predicated region
    $region66: #{seq2seq_forward.1} parent=1 // pred_check
      %p2401 = pneg %p2400
    $region67: #{seq2seq_forward.1} parent=1 // pred_check_branch
      %2403 = sbr.rel (%p2401) target = $region69
    $region68: #{seq2seq_forward.1} parent=1 // pred_region
      %v2404 = vlaneseq
      %v2405 = vand.u32 %v2404, 127
      %2406 = vmax.xlane.f32.xlu0 %v2386
      %v2407 = vpop.xlane.xlu0 %2406
      %vm2408 = vcmp.eq.f32.partialorder %v2386, %v2407
      %v2409 = vsel %vm2408, %v2405, 128
      %v2410 = vand.u32 %v2409, 65535
      %v2411 = vshra.s32 %v2409, 16
      %v2412 = vcvt.s32.f32 %v2410
      %v2413 = vcvt.s32.f32 %v2411
      %2414 = vmin.xlane.f32.xlu0 %v2413
      %v2415 = vpop.xlane.xlu0 %2414
      %vm2416 = vcmp.eq.f32.partialorder %v2413, %v2415
      %v2417 = vsel %vm2416, %v2412, inf
      %2418 = vmin.xlane.f32.xlu0 %v2417
      %v2419 = vpop.xlane.xlu0 %2418
      %v2420 = vcvt.f32.s32 %v2419
      %v2421 = vcvt.f32.s32 %v2415
      %v2422 = vshll.u32 %v2421, 16
      %v2423 = vadd.s32 %v2422, %v2420
      %vm2424 = vcmp.eq.s32.totalorder %v2405, %v2423
      %v2425 = vsel %vm2424, 1, 0
      %v2426 = vcvt.s32.f32 %v2425
      %v2427 = vld [vmem:[%s3] sm:$0xff]
      %v2428 = vld [vmem:[%s3 + $0x8] sm:$0xff]
      %v2429 = vld [vmem:[%s3 + $0x10] sm:$0xff]
      %v2430 = vld [vmem:[%s3 + $0x18] sm:$0xff]
      %v2431 = vld [vmem:[%s3 + $0x20] sm:$0xff]
      %v2432 = vld [vmem:[%s3 + $0x28] sm:$0xff]
      %v2433 = vld [vmem:[%s3 + $0x30] sm:$0xff]
      %v2434 = vld [vmem:[%s3 + $0x38] sm:$0xff]
      %v2435 = vld [vmem:[%s3 + $0x40] sm:$0xff]
      %v2436 = vld [vmem:[%s3 + $0x48] sm:$0xff]
      %v2437 = vld [vmem:[%s3 + $0x50] sm:$0xff]
      %v2438 = vld [vmem:[%s3 + $0x58] sm:$0xff]
      %v2439 = vld [vmem:[%s3 + $0x60] sm:$0xff]
      %v2440 = vld [vmem:[%s3 + $0x68] sm:$0xff]
      %v2441 = vld [vmem:[%s3 + $0x70] sm:$0xff]
      %v2442 = vld [vmem:[%s3 + $0x78] sm:$0xff]
      %2443 = vmatprep.subr.mxu0 0.0
      %2444 = vmatpush1.msra.mxu0 %v2442
      %2445 = vmatprep.subr.mxu0 0.0
      %2446 = vmatpush1.msra.mxu0 %v2441
      %2447 = vmatprep.subr.mxu0 0.0
      %2448 = vmatpush1.msra.mxu0 %v2440
      %2449 = vmatprep.subr.mxu0 0.0
      %2450 = vmatpush1.msra.mxu0 %v2439
      %2451 = vmatprep.subr.mxu0 0.0
      %2452 = vmatpush1.msra.mxu0 %v2438
      %2453 = vmatprep.subr.mxu0 0.0
      %2454 = vmatpush1.msra.mxu0 %v2437
      %2455 = vmatprep.subr.mxu0 0.0
      %2456 = vmatpush1.msra.mxu0 %v2436
      %2457 = vmatprep.subr.mxu0 0.0
      %2458 = vmatpush1.msra.mxu0 %v2435
      %2459 = vmatprep.subr.mxu0 0.0
      %2460 = vmatpush1.msra.mxu0 %v2434
      %2461 = vmatprep.subr.mxu0 0.0
      %2462 = vmatpush1.msra.mxu0 %v2433
      %2463 = vmatprep.subr.mxu0 0.0
      %2464 = vmatpush1.msra.mxu0 %v2432
      %2465 = vmatprep.subr.mxu0 0.0
      %2466 = vmatpush1.msra.mxu0 %v2431
      %2467 = vmatprep.subr.mxu0 0.0
      %2468 = vmatpush1.msra.mxu0 %v2430
      %2469 = vmatprep.subr.mxu0 0.0
      %2470 = vmatpush1.msra.mxu0 %v2429
      %2471 = vmatprep.subr.mxu0 0.0
      %2472 = vmatpush1.msra.mxu0 %v2428
      %2473 = vmatprep.subr.mxu0 0.0
      %2474 = vmatpush1.msra.mxu0 %v2427
      %2475 = vmatprep.subr.mxu0 0.0
      %2476 = vmatpush2.msra.mxu0 0.0
      %2477 = vmatprep.subr.mxu0 0.0
      %2478 = vmatpush2.msra.mxu0 0.0
      %2479 = vmatprep.subr.mxu0 0.0
      %2480 = vmatpush2.msra.mxu0 0.0
      %2481 = vmatprep.subr.mxu0 0.0
      %2482 = vmatpush2.msra.mxu0 0.0
      %2483 = vmatprep.subr.mxu0 0.0
      %2484 = vmatpush2.msra.mxu0 0.0
      %2485 = vmatprep.subr.mxu0 0.0
      %2486 = vmatpush2.msra.mxu0 0.0
      %2487 = vmatprep.subr.mxu0 0.0
      %2488 = vmatpush2.msra.mxu0 0.0
      %2489 = vmatprep.subr.mxu0 0.0
      %2490 = vmatpush2.msra.mxu0 0.0
      %2491 = vmatprep.subr.mxu0 0.0
      %2492 = vmatpush2.msra.mxu0 0.0
      %2493 = vmatprep.subr.mxu0 0.0
      %2494 = vmatpush2.msra.mxu0 0.0
      %2495 = vmatprep.subr.mxu0 0.0
      %2496 = vmatpush2.msra.mxu0 0.0
      %2497 = vmatprep.subr.mxu0 0.0
      %2498 = vmatpush2.msra.mxu0 0.0
      %2499 = vmatprep.subr.mxu0 0.0
      %2500 = vmatpush2.msra.mxu0 0.0
      %2501 = vmatprep.subr.mxu0 0.0
      %2502 = vmatpush2.msra.mxu0 0.0
      %2503 = vmatprep.subr.mxu0 0.0
      %2504 = vmatpush2.msra.mxu0 0.0
      %2505 = vmatprep.subr.mxu0 0.0
      %2506 = vmatpush2.msra.mxu0 0.0
      %2507 = vmatprep.mubr.f32.mxu0 0.0
      %2508 = vmatmul.mubr.f32.gmra.mxu0 %v2426
      %v2509 = vpop.f32.mrf.mxu0
      %v2510 = vadd.f32 0.0, %v2509
      %v2511 = vpop.f32.mrf.mxu0
      %2512 = vdwg.mxu0
      %2513 = vst.msk [vmem:[#allocation2] sm:$0xff] %vm56, %v2510
    $region69: #{seq2seq_forward.1} parent=1 // pred_fallthru
      _
    %v2514 = vld [vmem:[#allocation2] sm:$0xff]
    %v2515 = vld [vmem:[#allocation3] sm:$0xff]
    %v2516 = vld [vmem:[#allocation4] sm:$0xff]
    %v2517 = vld [vmem:[%s7] sm:$0xff]
    %v2518 = vld [vmem:[%s7 + $0x8] sm:$0xff]
    %v2519 = vld [vmem:[%s7 + $0x10] sm:$0xff]
    %v2520 = vld [vmem:[%s7 + $0x18] sm:$0xff]
    %v2521 = vld [vmem:[%s8] sm:$0xff]
    %v2522 = vld [vmem:[%s8 + $0x8] sm:$0xff]
    %v2523 = vld [vmem:[%s8 + $0x10] sm:$0xff]
    %v2524 = vld [vmem:[%s8 + $0x18] sm:$0xff]
    %v2525 = vld [vmem:[%s9] sm:$0x1]
    %v2527 = vsel %vm56, %v2515, 0
    %2529 = vmatprep.subr.mxu0 0.0
    %2530 = vmatpush1.msra.mxu0 0.0
    %2531 = vmatprep.subr.mxu0 0.0
    %2532 = vmatpush1.msra.mxu0 0.0
    %2533 = vmatprep.subr.mxu0 0.0
    %2534 = vmatpush1.msra.mxu0 0.0
    %2535 = vmatprep.subr.mxu0 0.0
    %2536 = vmatpush1.msra.mxu0 0.0
    %2537 = vmatprep.subr.mxu0 0.0
    %2538 = vmatpush1.msra.mxu0 0.0
    %2539 = vmatprep.subr.mxu0 0.0
    %2540 = vmatpush1.msra.mxu0 0.0
    %2541 = vmatprep.subr.mxu0 0.0
    %2542 = vmatpush1.msra.mxu0 0.0
    %2543 = vmatprep.subr.mxu0 0.0
    %2544 = vmatpush1.msra.mxu0 0.0
    %2545 = vmatprep.subr.mxu0 0.0
    %2546 = vmatpush1.msra.mxu0 0.0
    %2547 = vmatprep.subr.mxu0 0.0
    %2548 = vmatpush1.msra.mxu0 0.0
    %2549 = vmatprep.subr.mxu0 0.0
    %2550 = vmatpush1.msra.mxu0 0.0
    %2551 = vmatprep.subr.mxu0 0.0
    %2552 = vmatpush1.msra.mxu0 0.0
    %2553 = vmatprep.subr.mxu0 0.0
    %2554 = vmatpush1.msra.mxu0 %v2524
    %2555 = vmatprep.subr.mxu0 0.0
    %2556 = vmatpush1.msra.mxu0 %v2523
    %2557 = vmatprep.subr.mxu0 0.0
    %2558 = vmatpush1.msra.mxu0 %v2522
    %2559 = vmatprep.subr.mxu0 0.0
    %2560 = vmatpush1.msra.mxu0 %v2521
    %2561 = vmatprep.subr.mxu0 0.0
    %2562 = vmatpush2.msra.mxu0 0.0
    %2563 = vmatprep.subr.mxu0 0.0
    %2564 = vmatpush2.msra.mxu0 0.0
    %2565 = vmatprep.subr.mxu0 0.0
    %2566 = vmatpush2.msra.mxu0 0.0
    %2567 = vmatprep.subr.mxu0 0.0
    %2568 = vmatpush2.msra.mxu0 0.0
    %2569 = vmatprep.subr.mxu0 0.0
    %2570 = vmatpush2.msra.mxu0 0.0
    %2571 = vmatprep.subr.mxu0 0.0
    %2572 = vmatpush2.msra.mxu0 0.0
    %2573 = vmatprep.subr.mxu0 0.0
    %2574 = vmatpush2.msra.mxu0 0.0
    %2575 = vmatprep.subr.mxu0 0.0
    %2576 = vmatpush2.msra.mxu0 0.0
    %2577 = vmatprep.subr.mxu0 0.0
    %2578 = vmatpush2.msra.mxu0 0.0
    %2579 = vmatprep.subr.mxu0 0.0
    %2580 = vmatpush2.msra.mxu0 0.0
    %2581 = vmatprep.subr.mxu0 0.0
    %2582 = vmatpush2.msra.mxu0 0.0
    %2583 = vmatprep.subr.mxu0 0.0
    %2584 = vmatpush2.msra.mxu0 0.0
    %2585 = vmatprep.subr.mxu0 0.0
    %2586 = vmatpush2.msra.mxu0 0.0
    %2587 = vmatprep.subr.mxu0 0.0
    %2588 = vmatpush2.msra.mxu0 0.0
    %2589 = vmatprep.subr.mxu0 0.0
    %2590 = vmatpush2.msra.mxu0 0.0
    %2591 = vmatprep.subr.mxu0 0.0
    %2592 = vmatpush2.msra.mxu0 0.0
    %2593 = vmatprep.mubr.f32.mxu0 0.0
    %2594 = vmatmul.mubr.f32.gmra.mxu0 %v2527
    %v2595 = vpop.f32.mrf.mxu0
    %v2596 = vadd.f32 0.0, %v2595
    %v2597 = vpop.f32.mrf.mxu0
    %2598 = vdwg.mxu0
    %v2600 = vsel %vm56, %v2514, 0
    %2602 = vmatprep.subr.mxu0 0.0
    %2603 = vmatpush1.msra.mxu0 0.0
    %2604 = vmatprep.subr.mxu0 0.0
    %2605 = vmatpush1.msra.mxu0 0.0
    %2606 = vmatprep.subr.mxu0 0.0
    %2607 = vmatpush1.msra.mxu0 0.0
    %2608 = vmatprep.subr.mxu0 0.0
    %2609 = vmatpush1.msra.mxu0 0.0
    %2610 = vmatprep.subr.mxu0 0.0
    %2611 = vmatpush1.msra.mxu0 0.0
    %2612 = vmatprep.subr.mxu0 0.0
    %2613 = vmatpush1.msra.mxu0 0.0
    %2614 = vmatprep.subr.mxu0 0.0
    %2615 = vmatpush1.msra.mxu0 0.0
    %2616 = vmatprep.subr.mxu0 0.0
    %2617 = vmatpush1.msra.mxu0 0.0
    %2618 = vmatprep.subr.mxu0 0.0
    %2619 = vmatpush1.msra.mxu0 0.0
    %2620 = vmatprep.subr.mxu0 0.0
    %2621 = vmatpush1.msra.mxu0 0.0
    %2622 = vmatprep.subr.mxu0 0.0
    %2623 = vmatpush1.msra.mxu0 0.0
    %2624 = vmatprep.subr.mxu0 0.0
    %2625 = vmatpush1.msra.mxu0 0.0
    %2626 = vmatprep.subr.mxu0 0.0
    %2627 = vmatpush1.msra.mxu0 %v2520
    %2628 = vmatprep.subr.mxu0 0.0
    %2629 = vmatpush1.msra.mxu0 %v2519
    %2630 = vmatprep.subr.mxu0 0.0
    %2631 = vmatpush1.msra.mxu0 %v2518
    %2632 = vmatprep.subr.mxu0 0.0
    %2633 = vmatpush1.msra.mxu0 %v2517
    %2634 = vmatprep.subr.mxu0 0.0
    %2635 = vmatpush2.msra.mxu0 0.0
    %2636 = vmatprep.subr.mxu0 0.0
    %2637 = vmatpush2.msra.mxu0 0.0
    %2638 = vmatprep.subr.mxu0 0.0
    %2639 = vmatpush2.msra.mxu0 0.0
    %2640 = vmatprep.subr.mxu0 0.0
    %2641 = vmatpush2.msra.mxu0 0.0
    %2642 = vmatprep.subr.mxu0 0.0
    %2643 = vmatpush2.msra.mxu0 0.0
    %2644 = vmatprep.subr.mxu0 0.0
    %2645 = vmatpush2.msra.mxu0 0.0
    %2646 = vmatprep.subr.mxu0 0.0
    %2647 = vmatpush2.msra.mxu0 0.0
    %2648 = vmatprep.subr.mxu0 0.0
    %2649 = vmatpush2.msra.mxu0 0.0
    %2650 = vmatprep.subr.mxu0 0.0
    %2651 = vmatpush2.msra.mxu0 0.0
    %2652 = vmatprep.subr.mxu0 0.0
    %2653 = vmatpush2.msra.mxu0 0.0
    %2654 = vmatprep.subr.mxu0 0.0
    %2655 = vmatpush2.msra.mxu0 0.0
    %2656 = vmatprep.subr.mxu0 0.0
    %2657 = vmatpush2.msra.mxu0 0.0
    %2658 = vmatprep.subr.mxu0 0.0
    %2659 = vmatpush2.msra.mxu0 0.0
    %2660 = vmatprep.subr.mxu0 0.0
    %2661 = vmatpush2.msra.mxu0 0.0
    %2662 = vmatprep.subr.mxu0 0.0
    %2663 = vmatpush2.msra.mxu0 0.0
    %2664 = vmatprep.subr.mxu0 0.0
    %2665 = vmatpush2.msra.mxu0 0.0
    %2666 = vmatprep.mubr.f32.mxu0 0.0
    %2667 = vmatmul.mubr.f32.gmra.mxu0 %v2600
    %v2668 = vpop.f32.mrf.mxu0
    %v2669 = vadd.f32 %v2596, %v2668
    %v2670 = vpop.f32.mrf.mxu0
    %2671 = vdwg.mxu0
    %v2673 = vlaneseq
    %v2674 = vshrl.u32 %v2673, 7
    %v2675 = vsub.s32 0, %v2674
    %v2676 = vrot.slane %v2525, %v2675
    %v2678 = vadd.f32 %v2669, %v2676
    %v2679 = vxor.u32 %v2678, 2147483648
    %v2680 = vmul.f32 %v2679, 1.442695
    %v2681 = vpow.pop %v2680
    %v2682 = vadd.f32 %v2681, 1.0
    %v2683 = vrcp.pop %v2682
    %v2684 = vmul.f32 1.0, %v2683
    %v2685 = vtanh.pop %v2678
    %2687 = vrot.lane.b32.xlu0 %v2516, 32
    %v2688 = vpop.permute.xlu0 %2687
    %v2690 = vmul.f32 %v2684, %v2688
    %2692 = vrot.lane.b32.xlu0 %v2685, 32
    %v2693 = vpop.permute.xlu0 %2692
    %v2695 = vmul.f32 %v2684, %v2693
    %2697 = vrot.lane.b32.xlu0 %v2695, 32
    %v2698 = vpop.permute.xlu0 %2697
    %v2700 = vadd.f32 %v2690, %v2698
    %v2701 = vtanh.pop %v2700
    %2703 = vrot.lane.b32.xlu0 %v2701, 32
    %v2704 = vpop.permute.xlu0 %2703
    %v2706 = vmul.f32 %v2684, %v2704
    %2708 = vrot.lane.b32.xlu0 %v2706, 64
    %v2709 = vpop.permute.xlu0 %2708
    %2711 = vst.msk [vmem:[#allocation3] sm:$0xff] %vm56, %v2709
    %2713 = vrot.lane.b32.xlu0 %v2700, 96
    %v2714 = vpop.permute.xlu0 %2713
    %2716 = vst.msk [vmem:[#allocation4] sm:$0xff] %vm56, %v2714
    %v2717 = vld [vmem:[%s10] sm:$0xff]
    %v2718 = vld [vmem:[%s10 + $0x8] sm:$0xff]
    %v2719 = vld [vmem:[%s10 + $0x10] sm:$0xff]
    %v2720 = vld [vmem:[%s10 + $0x18] sm:$0xff]
    %v2721 = vld [vmem:[%s11] sm:$0x1]
    %v2723 = vlaneseq
    %v2724 = vshrl.u32 %v2723, 7
    %v2725 = vsub.s32 0, %v2724
    %v2726 = vrot.slane %v2721, %v2725
    %v2728 = vsel %vm56, %v2709, 0
    %2730 = vmatprep.subr.mxu0 0.0
    %2731 = vmatpush1.msra.mxu0 0.0
    %2732 = vmatprep.subr.mxu0 0.0
    %2733 = vmatpush1.msra.mxu0 0.0
    %2734 = vmatprep.subr.mxu0 0.0
    %2735 = vmatpush1.msra.mxu0 0.0
    %2736 = vmatprep.subr.mxu0 0.0
    %2737 = vmatpush1.msra.mxu0 0.0
    %2738 = vmatprep.subr.mxu0 0.0
    %2739 = vmatpush1.msra.mxu0 0.0
    %2740 = vmatprep.subr.mxu0 0.0
    %2741 = vmatpush1.msra.mxu0 0.0
    %2742 = vmatprep.subr.mxu0 0.0
    %2743 = vmatpush1.msra.mxu0 0.0
    %2744 = vmatprep.subr.mxu0 0.0
    %2745 = vmatpush1.msra.mxu0 0.0
    %2746 = vmatprep.subr.mxu0 0.0
    %2747 = vmatpush1.msra.mxu0 0.0
    %2748 = vmatprep.subr.mxu0 0.0
    %2749 = vmatpush1.msra.mxu0 0.0
    %2750 = vmatprep.subr.mxu0 0.0
    %2751 = vmatpush1.msra.mxu0 0.0
    %2752 = vmatprep.subr.mxu0 0.0
    %2753 = vmatpush1.msra.mxu0 0.0
    %2754 = vmatprep.subr.mxu0 0.0
    %2755 = vmatpush1.msra.mxu0 %v2720
    %2756 = vmatprep.subr.mxu0 0.0
    %2757 = vmatpush1.msra.mxu0 %v2719
    %2758 = vmatprep.subr.mxu0 0.0
    %2759 = vmatpush1.msra.mxu0 %v2718
    %2760 = vmatprep.subr.mxu0 0.0
    %2761 = vmatpush1.msra.mxu0 %v2717
    %2762 = vmatprep.subr.mxu0 0.0
    %2763 = vmatpush2.msra.mxu0 0.0
    %2764 = vmatprep.subr.mxu0 0.0
    %2765 = vmatpush2.msra.mxu0 0.0
    %2766 = vmatprep.subr.mxu0 0.0
    %2767 = vmatpush2.msra.mxu0 0.0
    %2768 = vmatprep.subr.mxu0 0.0
    %2769 = vmatpush2.msra.mxu0 0.0
    %2770 = vmatprep.subr.mxu0 0.0
    %2771 = vmatpush2.msra.mxu0 0.0
    %2772 = vmatprep.subr.mxu0 0.0
    %2773 = vmatpush2.msra.mxu0 0.0
    %2774 = vmatprep.subr.mxu0 0.0
    %2775 = vmatpush2.msra.mxu0 0.0
    %2776 = vmatprep.subr.mxu0 0.0
    %2777 = vmatpush2.msra.mxu0 0.0
    %2778 = vmatprep.subr.mxu0 0.0
    %2779 = vmatpush2.msra.mxu0 0.0
    %2780 = vmatprep.subr.mxu0 0.0
    %2781 = vmatpush2.msra.mxu0 0.0
    %2782 = vmatprep.subr.mxu0 0.0
    %2783 = vmatpush2.msra.mxu0 0.0
    %2784 = vmatprep.subr.mxu0 0.0
    %2785 = vmatpush2.msra.mxu0 0.0
    %2786 = vmatprep.subr.mxu0 0.0
    %2787 = vmatpush2.msra.mxu0 0.0
    %2788 = vmatprep.subr.mxu0 0.0
    %2789 = vmatpush2.msra.mxu0 0.0
    %2790 = vmatprep.subr.mxu0 0.0
    %2791 = vmatpush2.msra.mxu0 0.0
    %2792 = vmatprep.subr.mxu0 0.0
    %2793 = vmatpush2.msra.mxu0 0.0
    %2794 = vmatprep.mubr.f32.mxu0 0.0
    %2795 = vmatmul.mubr.f32.gmra.mxu0 %v2728
    %v2796 = vpop.f32.mrf.mxu0
    %v2797 = vadd.f32 %v2726, %v2796
    %v2798 = vpop.f32.mrf.mxu0
    %2799 = vdwg.mxu0
    %s2800 = scalar_lea.vmem [#allocation8], 24
    %2801 = vst [vmem:[%s2800] sm:$0xff] %v2797
    %s2802 = sld [smem:[#allocation5 + $0x2]]
    %p2803 = scmp.eq.s32.totalorder %s2802, 1
    // Predicated region
    $region70: #{seq2seq_forward.1} parent=1 // pred_check
      %p2804 = pneg %p2803
    $region71: #{seq2seq_forward.1} parent=1 // pred_check_branch
      %2806 = sbr.rel (%p2804) target = $region73
    $region72: #{seq2seq_forward.1} parent=1 // pred_region
      %s2807 = scalar_lea.vmem %s2, 24
      %v2808 = vld [vmem:[%s2807] sm:$0xff]
      %2809 = vst.msk [vmem:[#allocation2] sm:$0xff] %vm56, %v2808
    $region73: #{seq2seq_forward.1} parent=1 // pred_fallthru
      _
    %s2810 = sld [smem:[#allocation5 + $0x2]]
    %p2811 = scmp.eq.s32.totalorder %s2810, 0
    // Predicated region
    $region74: #{seq2seq_forward.1} parent=1 // pred_check
      %p2812 = pneg %p2811
    $region75: #{seq2seq_forward.1} parent=1 // pred_check_branch
      %2814 = sbr.rel (%p2812) target = $region77
    $region76: #{seq2seq_forward.1} parent=1 // pred_region
      %v2815 = vlaneseq
      %v2816 = vand.u32 %v2815, 127
      %2817 = vmax.xlane.f32.xlu0 %v2797
      %v2818 = vpop.xlane.xlu0 %2817
      %vm2819 = vcmp.eq.f32.partialorder %v2797, %v2818
      %v2820 = vsel %vm2819, %v2816, 128
      %v2821 = vand.u32 %v2820, 65535
      %v2822 = vshra.s32 %v2820, 16
      %v2823 = vcvt.s32.f32 %v2821
      %v2824 = vcvt.s32.f32 %v2822
      %2825 = vmin.xlane.f32.xlu0 %v2824
      %v2826 = vpop.xlane.xlu0 %2825
      %vm2827 = vcmp.eq.f32.partialorder %v2824, %v2826
      %v2828 = vsel %vm2827, %v2823, inf
      %2829 = vmin.xlane.f32.xlu0 %v2828
      %v2830 = vpop.xlane.xlu0 %2829
      %v2831 = vcvt.f32.s32 %v2830
      %v2832 = vcvt.f32.s32 %v2826
      %v2833 = vshll.u32 %v2832, 16
      %v2834 = vadd.s32 %v2833, %v2831
      %vm2835 = vcmp.eq.s32.totalorder %v2816, %v2834
      %v2836 = vsel %vm2835, 1, 0
      %v2837 = vcvt.s32.f32 %v2836
      %v2838 = vld [vmem:[%s3] sm:$0xff]
      %v2839 = vld [vmem:[%s3 + $0x8] sm:$0xff]
      %v2840 = vld [vmem:[%s3 + $0x10] sm:$0xff]
      %v2841 = vld [vmem:[%s3 + $0x18] sm:$0xff]
      %v2842 = vld [vmem:[%s3 + $0x20] sm:$0xff]
      %v2843 = vld [vmem:[%s3 + $0x28] sm:$0xff]
      %v2844 = vld [vmem:[%s3 + $0x30] sm:$0xff]
      %v2845 = vld [vmem:[%s3 + $0x38] sm:$0xff]
      %v2846 = vld [vmem:[%s3 + $0x40] sm:$0xff]
      %v2847 = vld [vmem:[%s3 + $0x48] sm:$0xff]
      %v2848 = vld [vmem:[%s3 + $0x50] sm:$0xff]
      %v2849 = vld [vmem:[%s3 + $0x58] sm:$0xff]
      %v2850 = vld [vmem:[%s3 + $0x60] sm:$0xff]
      %v2851 = vld [vmem:[%s3 + $0x68] sm:$0xff]
      %v2852 = vld [vmem:[%s3 + $0x70] sm:$0xff]
      %v2853 = vld [vmem:[%s3 + $0x78] sm:$0xff]
      %2854 = vmatprep.subr.mxu0 0.0
      %2855 = vmatpush1.msra.mxu0 %v2853
      %2856 = vmatprep.subr.mxu0 0.0
      %2857 = vmatpush1.msra.mxu0 %v2852
      %2858 = vmatprep.subr.mxu0 0.0
      %2859 = vmatpush1.msra.mxu0 %v2851
      %2860 = vmatprep.subr.mxu0 0.0
      %2861 = vmatpush1.msra.mxu0 %v2850
      %2862 = vmatprep.subr.mxu0 0.0
      %2863 = vmatpush1.msra.mxu0 %v2849
      %2864 = vmatprep.subr.mxu0 0.0
      %2865 = vmatpush1.msra.mxu0 %v2848
      %2866 = vmatprep.subr.mxu0 0.0
      %2867 = vmatpush1.msra.mxu0 %v2847
      %2868 = vmatprep.subr.mxu0 0.0
      %2869 = vmatpush1.msra.mxu0 %v2846
      %2870 = vmatprep.subr.mxu0 0.0
      %2871 = vmatpush1.msra.mxu0 %v2845
      %2872 = vmatprep.subr.mxu0 0.0
      %2873 = vmatpush1.msra.mxu0 %v2844
      %2874 = vmatprep.subr.mxu0 0.0
      %2875 = vmatpush1.msra.mxu0 %v2843
      %2876 = vmatprep.subr.mxu0 0.0
      %2877 = vmatpush1.msra.mxu0 %v2842
      %2878 = vmatprep.subr.mxu0 0.0
      %2879 = vmatpush1.msra.mxu0 %v2841
      %2880 = vmatprep.subr.mxu0 0.0
      %2881 = vmatpush1.msra.mxu0 %v2840
      %2882 = vmatprep.subr.mxu0 0.0
      %2883 = vmatpush1.msra.mxu0 %v2839
      %2884 = vmatprep.subr.mxu0 0.0
      %2885 = vmatpush1.msra.mxu0 %v2838
      %2886 = vmatprep.subr.mxu0 0.0
      %2887 = vmatpush2.msra.mxu0 0.0
      %2888 = vmatprep.subr.mxu0 0.0
      %2889 = vmatpush2.msra.mxu0 0.0
      %2890 = vmatprep.subr.mxu0 0.0
      %2891 = vmatpush2.msra.mxu0 0.0
      %2892 = vmatprep.subr.mxu0 0.0
      %2893 = vmatpush2.msra.mxu0 0.0
      %2894 = vmatprep.subr.mxu0 0.0
      %2895 = vmatpush2.msra.mxu0 0.0
      %2896 = vmatprep.subr.mxu0 0.0
      %2897 = vmatpush2.msra.mxu0 0.0
      %2898 = vmatprep.subr.mxu0 0.0
      %2899 = vmatpush2.msra.mxu0 0.0
      %2900 = vmatprep.subr.mxu0 0.0
      %2901 = vmatpush2.msra.mxu0 0.0
      %2902 = vmatprep.subr.mxu0 0.0
      %2903 = vmatpush2.msra.mxu0 0.0
      %2904 = vmatprep.subr.mxu0 0.0
      %2905 = vmatpush2.msra.mxu0 0.0
      %2906 = vmatprep.subr.mxu0 0.0
      %2907 = vmatpush2.msra.mxu0 0.0
      %2908 = vmatprep.subr.mxu0 0.0
      %2909 = vmatpush2.msra.mxu0 0.0
      %2910 = vmatprep.subr.mxu0 0.0
      %2911 = vmatpush2.msra.mxu0 0.0
      %2912 = vmatprep.subr.mxu0 0.0
      %2913 = vmatpush2.msra.mxu0 0.0
      %2914 = vmatprep.subr.mxu0 0.0
      %2915 = vmatpush2.msra.mxu0 0.0
      %2916 = vmatprep.subr.mxu0 0.0
      %2917 = vmatpush2.msra.mxu0 0.0
      %2918 = vmatprep.mubr.f32.mxu0 0.0
      %2919 = vmatmul.mubr.f32.gmra.mxu0 %v2837
      %v2920 = vpop.f32.mrf.mxu0
      %v2921 = vadd.f32 0.0, %v2920
      %v2922 = vpop.f32.mrf.mxu0
      %2923 = vdwg.mxu0
      %2924 = vst.msk [vmem:[#allocation2] sm:$0xff] %vm56, %v2921
    $region77: #{seq2seq_forward.1} parent=1 // pred_fallthru
      _
    %v2925 = vld [vmem:[#allocation2] sm:$0xff]
    %v2926 = vld [vmem:[#allocation3] sm:$0xff]
    %v2927 = vld [vmem:[#allocation4] sm:$0xff]
    %v2928 = vld [vmem:[%s7] sm:$0xff]
    %v2929 = vld [vmem:[%s7 + $0x8] sm:$0xff]
    %v2930 = vld [vmem:[%s7 + $0x10] sm:$0xff]
    %v2931 = vld [vmem:[%s7 + $0x18] sm:$0xff]
    %v2932 = vld [vmem:[%s8] sm:$0xff]
    %v2933 = vld [vmem:[%s8 + $0x8] sm:$0xff]
    %v2934 = vld [vmem:[%s8 + $0x10] sm:$0xff]
    %v2935 = vld [vmem:[%s8 + $0x18] sm:$0xff]
    %v2936 = vld [vmem:[%s9] sm:$0x1]
    %v2938 = vsel %vm56, %v2926, 0
    %2940 = vmatprep.subr.mxu0 0.0
    %2941 = vmatpush1.msra.mxu0 0.0
    %2942 = vmatprep.subr.mxu0 0.0
    %2943 = vmatpush1.msra.mxu0 0.0
    %2944 = vmatprep.subr.mxu0 0.0
    %2945 = vmatpush1.msra.mxu0 0.0
    %2946 = vmatprep.subr.mxu0 0.0
    %2947 = vmatpush1.msra.mxu0 0.0
    %2948 = vmatprep.subr.mxu0 0.0
    %2949 = vmatpush1.msra.mxu0 0.0
    %2950 = vmatprep.subr.mxu0 0.0
    %2951 = vmatpush1.msra.mxu0 0.0
    %2952 = vmatprep.subr.mxu0 0.0
    %2953 = vmatpush1.msra.mxu0 0.0
    %2954 = vmatprep.subr.mxu0 0.0
    %2955 = vmatpush1.msra.mxu0 0.0
    %2956 = vmatprep.subr.mxu0 0.0
    %2957 = vmatpush1.msra.mxu0 0.0
    %2958 = vmatprep.subr.mxu0 0.0
    %2959 = vmatpush1.msra.mxu0 0.0
    %2960 = vmatprep.subr.mxu0 0.0
    %2961 = vmatpush1.msra.mxu0 0.0
    %2962 = vmatprep.subr.mxu0 0.0
    %2963 = vmatpush1.msra.mxu0 0.0
    %2964 = vmatprep.subr.mxu0 0.0
    %2965 = vmatpush1.msra.mxu0 %v2935
    %2966 = vmatprep.subr.mxu0 0.0
    %2967 = vmatpush1.msra.mxu0 %v2934
    %2968 = vmatprep.subr.mxu0 0.0
    %2969 = vmatpush1.msra.mxu0 %v2933
    %2970 = vmatprep.subr.mxu0 0.0
    %2971 = vmatpush1.msra.mxu0 %v2932
    %2972 = vmatprep.subr.mxu0 0.0
    %2973 = vmatpush2.msra.mxu0 0.0
    %2974 = vmatprep.subr.mxu0 0.0
    %2975 = vmatpush2.msra.mxu0 0.0
    %2976 = vmatprep.subr.mxu0 0.0
    %2977 = vmatpush2.msra.mxu0 0.0
    %2978 = vmatprep.subr.mxu0 0.0
    %2979 = vmatpush2.msra.mxu0 0.0
    %2980 = vmatprep.subr.mxu0 0.0
    %2981 = vmatpush2.msra.mxu0 0.0
    %2982 = vmatprep.subr.mxu0 0.0
    %2983 = vmatpush2.msra.mxu0 0.0
    %2984 = vmatprep.subr.mxu0 0.0
    %2985 = vmatpush2.msra.mxu0 0.0
    %2986 = vmatprep.subr.mxu0 0.0
    %2987 = vmatpush2.msra.mxu0 0.0
    %2988 = vmatprep.subr.mxu0 0.0
    %2989 = vmatpush2.msra.mxu0 0.0
    %2990 = vmatprep.subr.mxu0 0.0
    %2991 = vmatpush2.msra.mxu0 0.0
    %2992 = vmatprep.subr.mxu0 0.0
    %2993 = vmatpush2.msra.mxu0 0.0
    %2994 = vmatprep.subr.mxu0 0.0
    %2995 = vmatpush2.msra.mxu0 0.0
    %2996 = vmatprep.subr.mxu0 0.0
    %2997 = vmatpush2.msra.mxu0 0.0
    %2998 = vmatprep.subr.mxu0 0.0
    %2999 = vmatpush2.msra.mxu0 0.0
    %3000 = vmatprep.subr.mxu0 0.0
    %3001 = vmatpush2.msra.mxu0 0.0
    %3002 = vmatprep.subr.mxu0 0.0
    %3003 = vmatpush2.msra.mxu0 0.0
    %3004 = vmatprep.mubr.f32.mxu0 0.0
    %3005 = vmatmul.mubr.f32.gmra.mxu0 %v2938
    %v3006 = vpop.f32.mrf.mxu0
    %v3007 = vadd.f32 0.0, %v3006
    %v3008 = vpop.f32.mrf.mxu0
    %3009 = vdwg.mxu0
    %v3011 = vsel %vm56, %v2925, 0
    %3013 = vmatprep.subr.mxu0 0.0
    %3014 = vmatpush1.msra.mxu0 0.0
    %3015 = vmatprep.subr.mxu0 0.0
    %3016 = vmatpush1.msra.mxu0 0.0
    %3017 = vmatprep.subr.mxu0 0.0
    %3018 = vmatpush1.msra.mxu0 0.0
    %3019 = vmatprep.subr.mxu0 0.0
    %3020 = vmatpush1.msra.mxu0 0.0
    %3021 = vmatprep.subr.mxu0 0.0
    %3022 = vmatpush1.msra.mxu0 0.0
    %3023 = vmatprep.subr.mxu0 0.0
    %3024 = vmatpush1.msra.mxu0 0.0
    %3025 = vmatprep.subr.mxu0 0.0
    %3026 = vmatpush1.msra.mxu0 0.0
    %3027 = vmatprep.subr.mxu0 0.0
    %3028 = vmatpush1.msra.mxu0 0.0
    %3029 = vmatprep.subr.mxu0 0.0
    %3030 = vmatpush1.msra.mxu0 0.0
    %3031 = vmatprep.subr.mxu0 0.0
    %3032 = vmatpush1.msra.mxu0 0.0
    %3033 = vmatprep.subr.mxu0 0.0
    %3034 = vmatpush1.msra.mxu0 0.0
    %3035 = vmatprep.subr.mxu0 0.0
    %3036 = vmatpush1.msra.mxu0 0.0
    %3037 = vmatprep.subr.mxu0 0.0
    %3038 = vmatpush1.msra.mxu0 %v2931
    %3039 = vmatprep.subr.mxu0 0.0
    %3040 = vmatpush1.msra.mxu0 %v2930
    %3041 = vmatprep.subr.mxu0 0.0
    %3042 = vmatpush1.msra.mxu0 %v2929
    %3043 = vmatprep.subr.mxu0 0.0
    %3044 = vmatpush1.msra.mxu0 %v2928
    %3045 = vmatprep.subr.mxu0 0.0
    %3046 = vmatpush2.msra.mxu0 0.0
    %3047 = vmatprep.subr.mxu0 0.0
    %3048 = vmatpush2.msra.mxu0 0.0
    %3049 = vmatprep.subr.mxu0 0.0
    %3050 = vmatpush2.msra.mxu0 0.0
    %3051 = vmatprep.subr.mxu0 0.0
    %3052 = vmatpush2.msra.mxu0 0.0
    %3053 = vmatprep.subr.mxu0 0.0
    %3054 = vmatpush2.msra.mxu0 0.0
    %3055 = vmatprep.subr.mxu0 0.0
    %3056 = vmatpush2.msra.mxu0 0.0
    %3057 = vmatprep.subr.mxu0 0.0
    %3058 = vmatpush2.msra.mxu0 0.0
    %3059 = vmatprep.subr.mxu0 0.0
    %3060 = vmatpush2.msra.mxu0 0.0
    %3061 = vmatprep.subr.mxu0 0.0
    %3062 = vmatpush2.msra.mxu0 0.0
    %3063 = vmatprep.subr.mxu0 0.0
    %3064 = vmatpush2.msra.mxu0 0.0
    %3065 = vmatprep.subr.mxu0 0.0
    %3066 = vmatpush2.msra.mxu0 0.0
    %3067 = vmatprep.subr.mxu0 0.0
    %3068 = vmatpush2.msra.mxu0 0.0
    %3069 = vmatprep.subr.mxu0 0.0
    %3070 = vmatpush2.msra.mxu0 0.0
    %3071 = vmatprep.subr.mxu0 0.0
    %3072 = vmatpush2.msra.mxu0 0.0
    %3073 = vmatprep.subr.mxu0 0.0
    %3074 = vmatpush2.msra.mxu0 0.0
    %3075 = vmatprep.subr.mxu0 0.0
    %3076 = vmatpush2.msra.mxu0 0.0
    %3077 = vmatprep.mubr.f32.mxu0 0.0
    %3078 = vmatmul.mubr.f32.gmra.mxu0 %v3011
    %v3079 = vpop.f32.mrf.mxu0
    %v3080 = vadd.f32 %v3007, %v3079
    %v3081 = vpop.f32.mrf.mxu0
    %3082 = vdwg.mxu0
    %v3084 = vlaneseq
    %v3085 = vshrl.u32 %v3084, 7
    %v3086 = vsub.s32 0, %v3085
    %v3087 = vrot.slane %v2936, %v3086
    %v3089 = vadd.f32 %v3080, %v3087
    %v3090 = vxor.u32 %v3089, 2147483648
    %v3091 = vmul.f32 %v3090, 1.442695
    %v3092 = vpow.pop %v3091
    %v3093 = vadd.f32 %v3092, 1.0
    %v3094 = vrcp.pop %v3093
    %v3095 = vmul.f32 1.0, %v3094
    %v3096 = vtanh.pop %v3089
    %3098 = vrot.lane.b32.xlu0 %v2927, 32
    %v3099 = vpop.permute.xlu0 %3098
    %v3101 = vmul.f32 %v3095, %v3099
    %3103 = vrot.lane.b32.xlu0 %v3096, 32
    %v3104 = vpop.permute.xlu0 %3103
    %v3106 = vmul.f32 %v3095, %v3104
    %3108 = vrot.lane.b32.xlu0 %v3106, 32
    %v3109 = vpop.permute.xlu0 %3108
    %v3111 = vadd.f32 %v3101, %v3109
    %v3112 = vtanh.pop %v3111
    %3114 = vrot.lane.b32.xlu0 %v3112, 32
    %v3115 = vpop.permute.xlu0 %3114
    %v3117 = vmul.f32 %v3095, %v3115
    %3119 = vrot.lane.b32.xlu0 %v3117, 64
    %v3120 = vpop.permute.xlu0 %3119
    %3122 = vst.msk [vmem:[#allocation3] sm:$0xff] %vm56, %v3120
    %3124 = vrot.lane.b32.xlu0 %v3111, 96
    %v3125 = vpop.permute.xlu0 %3124
    %3127 = vst.msk [vmem:[#allocation4] sm:$0xff] %vm56, %v3125
    %v3128 = vld [vmem:[%s10] sm:$0xff]
    %v3129 = vld [vmem:[%s10 + $0x8] sm:$0xff]
    %v3130 = vld [vmem:[%s10 + $0x10] sm:$0xff]
    %v3131 = vld [vmem:[%s10 + $0x18] sm:$0xff]
    %v3132 = vld [vmem:[%s11] sm:$0x1]
    %v3134 = vlaneseq
    %v3135 = vshrl.u32 %v3134, 7
    %v3136 = vsub.s32 0, %v3135
    %v3137 = vrot.slane %v3132, %v3136
    %v3139 = vsel %vm56, %v3120, 0
    %3141 = vmatprep.subr.mxu0 0.0
    %3142 = vmatpush1.msra.mxu0 0.0
    %3143 = vmatprep.subr.mxu0 0.0
    %3144 = vmatpush1.msra.mxu0 0.0
    %3145 = vmatprep.subr.mxu0 0.0
    %3146 = vmatpush1.msra.mxu0 0.0
    %3147 = vmatprep.subr.mxu0 0.0
    %3148 = vmatpush1.msra.mxu0 0.0
    %3149 = vmatprep.subr.mxu0 0.0
    %3150 = vmatpush1.msra.mxu0 0.0
    %3151 = vmatprep.subr.mxu0 0.0
    %3152 = vmatpush1.msra.mxu0 0.0
    %3153 = vmatprep.subr.mxu0 0.0
    %3154 = vmatpush1.msra.mxu0 0.0
    %3155 = vmatprep.subr.mxu0 0.0
    %3156 = vmatpush1.msra.mxu0 0.0
    %3157 = vmatprep.subr.mxu0 0.0
    %3158 = vmatpush1.msra.mxu0 0.0
    %3159 = vmatprep.subr.mxu0 0.0
    %3160 = vmatpush1.msra.mxu0 0.0
    %3161 = vmatprep.subr.mxu0 0.0
    %3162 = vmatpush1.msra.mxu0 0.0
    %3163 = vmatprep.subr.mxu0 0.0
    %3164 = vmatpush1.msra.mxu0 0.0
    %3165 = vmatprep.subr.mxu0 0.0
    %3166 = vmatpush1.msra.mxu0 %v3131
    %3167 = vmatprep.subr.mxu0 0.0
    %3168 = vmatpush1.msra.mxu0 %v3130
    %3169 = vmatprep.subr.mxu0 0.0
    %3170 = vmatpush1.msra.mxu0 %v3129
    %3171 = vmatprep.subr.mxu0 0.0
    %3172 = vmatpush1.msra.mxu0 %v3128
    %3173 = vmatprep.subr.mxu0 0.0
    %3174 = vmatpush2.msra.mxu0 0.0
    %3175 = vmatprep.subr.mxu0 0.0
    %3176 = vmatpush2.msra.mxu0 0.0
    %3177 = vmatprep.subr.mxu0 0.0
    %3178 = vmatpush2.msra.mxu0 0.0
    %3179 = vmatprep.subr.mxu0 0.0
    %3180 = vmatpush2.msra.mxu0 0.0
    %3181 = vmatprep.subr.mxu0 0.0
    %3182 = vmatpush2.msra.mxu0 0.0
    %3183 = vmatprep.subr.mxu0 0.0
    %3184 = vmatpush2.msra.mxu0 0.0
    %3185 = vmatprep.subr.mxu0 0.0
    %3186 = vmatpush2.msra.mxu0 0.0
    %3187 = vmatprep.subr.mxu0 0.0
    %3188 = vmatpush2.msra.mxu0 0.0
    %3189 = vmatprep.subr.mxu0 0.0
    %3190 = vmatpush2.msra.mxu0 0.0
    %3191 = vmatprep.subr.mxu0 0.0
    %3192 = vmatpush2.msra.mxu0 0.0
    %3193 = vmatprep.subr.mxu0 0.0
    %3194 = vmatpush2.msra.mxu0 0.0
    %3195 = vmatprep.subr.mxu0 0.0
    %3196 = vmatpush2.msra.mxu0 0.0
    %3197 = vmatprep.subr.mxu0 0.0
    %3198 = vmatpush2.msra.mxu0 0.0
    %3199 = vmatprep.subr.mxu0 0.0
    %3200 = vmatpush2.msra.mxu0 0.0
    %3201 = vmatprep.subr.mxu0 0.0
    %3202 = vmatpush2.msra.mxu0 0.0
    %3203 = vmatprep.subr.mxu0 0.0
    %3204 = vmatpush2.msra.mxu0 0.0
    %3205 = vmatprep.mubr.f32.mxu0 0.0
    %3206 = vmatmul.mubr.f32.gmra.mxu0 %v3139
    %v3207 = vpop.f32.mrf.mxu0
    %v3208 = vadd.f32 %v3137, %v3207
    %v3209 = vpop.f32.mrf.mxu0
    %3210 = vdwg.mxu0
    %s3211 = scalar_lea.vmem [#allocation8], 32
    %3212 = vst [vmem:[%s3211] sm:$0xff] %v3208
    %s3213 = sld [smem:[#allocation5 + $0x3]]
    %p3214 = scmp.eq.s32.totalorder %s3213, 1
    // Predicated region
    $region78: #{seq2seq_forward.1} parent=1 // pred_check
      %p3215 = pneg %p3214
    $region79: #{seq2seq_forward.1} parent=1 // pred_check_branch
      %3217 = sbr.rel (%p3215) target = $region81
    $region80: #{seq2seq_forward.1} parent=1 // pred_region
      %s3218 = scalar_lea.vmem %s2, 32
      %v3219 = vld [vmem:[%s3218] sm:$0xff]
      %3220 = vst.msk [vmem:[#allocation2] sm:$0xff] %vm56, %v3219
    $region81: #{seq2seq_forward.1} parent=1 // pred_fallthru
      _
    %s3221 = sld [smem:[#allocation5 + $0x3]]
    %p3222 = scmp.eq.s32.totalorder %s3221, 0
    // Predicated region
    $region82: #{seq2seq_forward.1} parent=1 // pred_check
      %p3223 = pneg %p3222
    $region83: #{seq2seq_forward.1} parent=1 // pred_check_branch
      %3225 = sbr.rel (%p3223) target = $region85
    $region84: #{seq2seq_forward.1} parent=1 // pred_region
      %v3226 = vlaneseq
      %v3227 = vand.u32 %v3226, 127
      %3228 = vmax.xlane.f32.xlu0 %v3208
      %v3229 = vpop.xlane.xlu0 %3228
      %vm3230 = vcmp.eq.f32.partialorder %v3208, %v3229
      %v3231 = vsel %vm3230, %v3227, 128
      %v3232 = vand.u32 %v3231, 65535
      %v3233 = vshra.s32 %v3231, 16
      %v3234 = vcvt.s32.f32 %v3232
      %v3235 = vcvt.s32.f32 %v3233
      %3236 = vmin.xlane.f32.xlu0 %v3235
      %v3237 = vpop.xlane.xlu0 %3236
      %vm3238 = vcmp.eq.f32.partialorder %v3235, %v3237
      %v3239 = vsel %vm3238, %v3234, inf
      %3240 = vmin.xlane.f32.xlu0 %v3239
      %v3241 = vpop.xlane.xlu0 %3240
      %v3242 = vcvt.f32.s32 %v3241
      %v3243 = vcvt.f32.s32 %v3237
      %v3244 = vshll.u32 %v3243, 16
      %v3245 = vadd.s32 %v3244, %v3242
      %vm3246 = vcmp.eq.s32.totalorder %v3227, %v3245
      %v3247 = vsel %vm3246, 1, 0
      %v3248 = vcvt.s32.f32 %v3247
      %v3249 = vld [vmem:[%s3] sm:$0xff]
      %v3250 = vld [vmem:[%s3 + $0x8] sm:$0xff]
      %v3251 = vld [vmem:[%s3 + $0x10] sm:$0xff]
      %v3252 = vld [vmem:[%s3 + $0x18] sm:$0xff]
      %v3253 = vld [vmem:[%s3 + $0x20] sm:$0xff]
      %v3254 = vld [vmem:[%s3 + $0x28] sm:$0xff]
      %v3255 = vld [vmem:[%s3 + $0x30] sm:$0xff]
      %v3256 = vld [vmem:[%s3 + $0x38] sm:$0xff]
      %v3257 = vld [vmem:[%s3 + $0x40] sm:$0xff]
      %v3258 = vld [vmem:[%s3 + $0x48] sm:$0xff]
      %v3259 = vld [vmem:[%s3 + $0x50] sm:$0xff]
      %v3260 = vld [vmem:[%s3 + $0x58] sm:$0xff]
      %v3261 = vld [vmem:[%s3 + $0x60] sm:$0xff]
      %v3262 = vld [vmem:[%s3 + $0x68] sm:$0xff]
      %v3263 = vld [vmem:[%s3 + $0x70] sm:$0xff]
      %v3264 = vld [vmem:[%s3 + $0x78] sm:$0xff]
      %3265 = vmatprep.subr.mxu0 0.0
      %3266 = vmatpush1.msra.mxu0 %v3264
      %3267 = vmatprep.subr.mxu0 0.0
      %3268 = vmatpush1.msra.mxu0 %v3263
      %3269 = vmatprep.subr.mxu0 0.0
      %3270 = vmatpush1.msra.mxu0 %v3262
      %3271 = vmatprep.subr.mxu0 0.0
      %3272 = vmatpush1.msra.mxu0 %v3261
      %3273 = vmatprep.subr.mxu0 0.0
      %3274 = vmatpush1.msra.mxu0 %v3260
      %3275 = vmatprep.subr.mxu0 0.0
      %3276 = vmatpush1.msra.mxu0 %v3259
      %3277 = vmatprep.subr.mxu0 0.0
      %3278 = vmatpush1.msra.mxu0 %v3258
      %3279 = vmatprep.subr.mxu0 0.0
      %3280 = vmatpush1.msra.mxu0 %v3257
      %3281 = vmatprep.subr.mxu0 0.0
      %3282 = vmatpush1.msra.mxu0 %v3256
      %3283 = vmatprep.subr.mxu0 0.0
      %3284 = vmatpush1.msra.mxu0 %v3255
      %3285 = vmatprep.subr.mxu0 0.0
      %3286 = vmatpush1.msra.mxu0 %v3254
      %3287 = vmatprep.subr.mxu0 0.0
      %3288 = vmatpush1.msra.mxu0 %v3253
      %3289 = vmatprep.subr.mxu0 0.0
      %3290 = vmatpush1.msra.mxu0 %v3252
      %3291 = vmatprep.subr.mxu0 0.0
      %3292 = vmatpush1.msra.mxu0 %v3251
      %3293 = vmatprep.subr.mxu0 0.0
      %3294 = vmatpush1.msra.mxu0 %v3250
      %3295 = vmatprep.subr.mxu0 0.0
      %3296 = vmatpush1.msra.mxu0 %v3249
      %3297 = vmatprep.subr.mxu0 0.0
      %3298 = vmatpush2.msra.mxu0 0.0
      %3299 = vmatprep.subr.mxu0 0.0
      %3300 = vmatpush2.msra.mxu0 0.0
      %3301 = vmatprep.subr.mxu0 0.0
      %3302 = vmatpush2.msra.mxu0 0.0
      %3303 = vmatprep.subr.mxu0 0.0
      %3304 = vmatpush2.msra.mxu0 0.0
      %3305 = vmatprep.subr.mxu0 0.0
      %3306 = vmatpush2.msra.mxu0 0.0
      %3307 = vmatprep.subr.mxu0 0.0
      %3308 = vmatpush2.msra.mxu0 0.0
      %3309 = vmatprep.subr.mxu0 0.0
      %3310 = vmatpush2.msra.mxu0 0.0
      %3311 = vmatprep.subr.mxu0 0.0
      %3312 = vmatpush2.msra.mxu0 0.0
      %3313 = vmatprep.subr.mxu0 0.0
      %3314 = vmatpush2.msra.mxu0 0.0
      %3315 = vmatprep.subr.mxu0 0.0
      %3316 = vmatpush2.msra.mxu0 0.0
      %3317 = vmatprep.subr.mxu0 0.0
      %3318 = vmatpush2.msra.mxu0 0.0
      %3319 = vmatprep.subr.mxu0 0.0
      %3320 = vmatpush2.msra.mxu0 0.0
      %3321 = vmatprep.subr.mxu0 0.0
      %3322 = vmatpush2.msra.mxu0 0.0
      %3323 = vmatprep.subr.mxu0 0.0
      %3324 = vmatpush2.msra.mxu0 0.0
      %3325 = vmatprep.subr.mxu0 0.0
      %3326 = vmatpush2.msra.mxu0 0.0
      %3327 = vmatprep.subr.mxu0 0.0
      %3328 = vmatpush2.msra.mxu0 0.0
      %3329 = vmatprep.mubr.f32.mxu0 0.0
      %3330 = vmatmul.mubr.f32.gmra.mxu0 %v3248
      %v3331 = vpop.f32.mrf.mxu0
      %v3332 = vadd.f32 0.0, %v3331
      %v3333 = vpop.f32.mrf.mxu0
      %3334 = vdwg.mxu0
      %3335 = vst.msk [vmem:[#allocation2] sm:$0xff] %vm56, %v3332
    $region85: #{seq2seq_forward.1} parent=1 // pred_fallthru
      _
    %v3336 = vld [vmem:[#allocation2] sm:$0xff]
    %v3337 = vld [vmem:[#allocation3] sm:$0xff]
    %v3338 = vld [vmem:[#allocation4] sm:$0xff]
    %v3339 = vld [vmem:[%s7] sm:$0xff]
    %v3340 = vld [vmem:[%s7 + $0x8] sm:$0xff]
    %v3341 = vld [vmem:[%s7 + $0x10] sm:$0xff]
    %v3342 = vld [vmem:[%s7 + $0x18] sm:$0xff]
    %v3343 = vld [vmem:[%s8] sm:$0xff]
    %v3344 = vld [vmem:[%s8 + $0x8] sm:$0xff]
    %v3345 = vld [vmem:[%s8 + $0x10] sm:$0xff]
    %v3346 = vld [vmem:[%s8 + $0x18] sm:$0xff]
    %v3347 = vld [vmem:[%s9] sm:$0x1]
    %v3349 = vsel %vm56, %v3337, 0
    %3351 = vmatprep.subr.mxu0 0.0
    %3352 = vmatpush1.msra.mxu0 0.0
    %3353 = vmatprep.subr.mxu0 0.0
    %3354 = vmatpush1.msra.mxu0 0.0
    %3355 = vmatprep.subr.mxu0 0.0
    %3356 = vmatpush1.msra.mxu0 0.0
    %3357 = vmatprep.subr.mxu0 0.0
    %3358 = vmatpush1.msra.mxu0 0.0
    %3359 = vmatprep.subr.mxu0 0.0
    %3360 = vmatpush1.msra.mxu0 0.0
    %3361 = vmatprep.subr.mxu0 0.0
    %3362 = vmatpush1.msra.mxu0 0.0
    %3363 = vmatprep.subr.mxu0 0.0
    %3364 = vmatpush1.msra.mxu0 0.0
    %3365 = vmatprep.subr.mxu0 0.0
    %3366 = vmatpush1.msra.mxu0 0.0
    %3367 = vmatprep.subr.mxu0 0.0
    %3368 = vmatpush1.msra.mxu0 0.0
    %3369 = vmatprep.subr.mxu0 0.0
    %3370 = vmatpush1.msra.mxu0 0.0
    %3371 = vmatprep.subr.mxu0 0.0
    %3372 = vmatpush1.msra.mxu0 0.0
    %3373 = vmatprep.subr.mxu0 0.0
    %3374 = vmatpush1.msra.mxu0 0.0
    %3375 = vmatprep.subr.mxu0 0.0
    %3376 = vmatpush1.msra.mxu0 %v3346
    %3377 = vmatprep.subr.mxu0 0.0
    %3378 = vmatpush1.msra.mxu0 %v3345
    %3379 = vmatprep.subr.mxu0 0.0
    %3380 = vmatpush1.msra.mxu0 %v3344
    %3381 = vmatprep.subr.mxu0 0.0
    %3382 = vmatpush1.msra.mxu0 %v3343
    %3383 = vmatprep.subr.mxu0 0.0
    %3384 = vmatpush2.msra.mxu0 0.0
    %3385 = vmatprep.subr.mxu0 0.0
    %3386 = vmatpush2.msra.mxu0 0.0
    %3387 = vmatprep.subr.mxu0 0.0
    %3388 = vmatpush2.msra.mxu0 0.0
    %3389 = vmatprep.subr.mxu0 0.0
    %3390 = vmatpush2.msra.mxu0 0.0
    %3391 = vmatprep.subr.mxu0 0.0
    %3392 = vmatpush2.msra.mxu0 0.0
    %3393 = vmatprep.subr.mxu0 0.0
    %3394 = vmatpush2.msra.mxu0 0.0
    %3395 = vmatprep.subr.mxu0 0.0
    %3396 = vmatpush2.msra.mxu0 0.0
    %3397 = vmatprep.subr.mxu0 0.0
    %3398 = vmatpush2.msra.mxu0 0.0
    %3399 = vmatprep.subr.mxu0 0.0
    %3400 = vmatpush2.msra.mxu0 0.0
    %3401 = vmatprep.subr.mxu0 0.0
    %3402 = vmatpush2.msra.mxu0 0.0
    %3403 = vmatprep.subr.mxu0 0.0
    %3404 = vmatpush2.msra.mxu0 0.0
    %3405 = vmatprep.subr.mxu0 0.0
    %3406 = vmatpush2.msra.mxu0 0.0
    %3407 = vmatprep.subr.mxu0 0.0
    %3408 = vmatpush2.msra.mxu0 0.0
    %3409 = vmatprep.subr.mxu0 0.0
    %3410 = vmatpush2.msra.mxu0 0.0
    %3411 = vmatprep.subr.mxu0 0.0
    %3412 = vmatpush2.msra.mxu0 0.0
    %3413 = vmatprep.subr.mxu0 0.0
    %3414 = vmatpush2.msra.mxu0 0.0
    %3415 = vmatprep.mubr.f32.mxu0 0.0
    %3416 = vmatmul.mubr.f32.gmra.mxu0 %v3349
    %v3417 = vpop.f32.mrf.mxu0
    %v3418 = vadd.f32 0.0, %v3417
    %v3419 = vpop.f32.mrf.mxu0
    %3420 = vdwg.mxu0
    %v3422 = vsel %vm56, %v3336, 0
    %3424 = vmatprep.subr.mxu0 0.0
    %3425 = vmatpush1.msra.mxu0 0.0
    %3426 = vmatprep.subr.mxu0 0.0
    %3427 = vmatpush1.msra.mxu0 0.0
    %3428 = vmatprep.subr.mxu0 0.0
    %3429 = vmatpush1.msra.mxu0 0.0
    %3430 = vmatprep.subr.mxu0 0.0
    %3431 = vmatpush1.msra.mxu0 0.0
    %3432 = vmatprep.subr.mxu0 0.0
    %3433 = vmatpush1.msra.mxu0 0.0
    %3434 = vmatprep.subr.mxu0 0.0
    %3435 = vmatpush1.msra.mxu0 0.0
    %3436 = vmatprep.subr.mxu0 0.0
    %3437 = vmatpush1.msra.mxu0 0.0
    %3438 = vmatprep.subr.mxu0 0.0
    %3439 = vmatpush1.msra.mxu0 0.0
    %3440 = vmatprep.subr.mxu0 0.0
    %3441 = vmatpush1.msra.mxu0 0.0
    %3442 = vmatprep.subr.mxu0 0.0
    %3443 = vmatpush1.msra.mxu0 0.0
    %3444 = vmatprep.subr.mxu0 0.0
    %3445 = vmatpush1.msra.mxu0 0.0
    %3446 = vmatprep.subr.mxu0 0.0
    %3447 = vmatpush1.msra.mxu0 0.0
    %3448 = vmatprep.subr.mxu0 0.0
    %3449 = vmatpush1.msra.mxu0 %v3342
    %3450 = vmatprep.subr.mxu0 0.0
    %3451 = vmatpush1.msra.mxu0 %v3341
    %3452 = vmatprep.subr.mxu0 0.0
    %3453 = vmatpush1.msra.mxu0 %v3340
    %3454 = vmatprep.subr.mxu0 0.0
    %3455 = vmatpush1.msra.mxu0 %v3339
    %3456 = vmatprep.subr.mxu0 0.0
    %3457 = vmatpush2.msra.mxu0 0.0
    %3458 = vmatprep.subr.mxu0 0.0
    %3459 = vmatpush2.msra.mxu0 0.0
    %3460 = vmatprep.subr.mxu0 0.0
    %3461 = vmatpush2.msra.mxu0 0.0
    %3462 = vmatprep.subr.mxu0 0.0
    %3463 = vmatpush2.msra.mxu0 0.0
    %3464 = vmatprep.subr.mxu0 0.0
    %3465 = vmatpush2.msra.mxu0 0.0
    %3466 = vmatprep.subr.mxu0 0.0
    %3467 = vmatpush2.msra.mxu0 0.0
    %3468 = vmatprep.subr.mxu0 0.0
    %3469 = vmatpush2.msra.mxu0 0.0
    %3470 = vmatprep.subr.mxu0 0.0
    %3471 = vmatpush2.msra.mxu0 0.0
    %3472 = vmatprep.subr.mxu0 0.0
    %3473 = vmatpush2.msra.mxu0 0.0
    %3474 = vmatprep.subr.mxu0 0.0
    %3475 = vmatpush2.msra.mxu0 0.0
    %3476 = vmatprep.subr.mxu0 0.0
    %3477 = vmatpush2.msra.mxu0 0.0
    %3478 = vmatprep.subr.mxu0 0.0
    %3479 = vmatpush2.msra.mxu0 0.0
    %3480 = vmatprep.subr.mxu0 0.0
    %3481 = vmatpush2.msra.mxu0 0.0
    %3482 = vmatprep.subr.mxu0 0.0
    %3483 = vmatpush2.msra.mxu0 0.0
    %3484 = vmatprep.subr.mxu0 0.0
    %3485 = vmatpush2.msra.mxu0 0.0
    %3486 = vmatprep.subr.mxu0 0.0
    %3487 = vmatpush2.msra.mxu0 0.0
    %3488 = vmatprep.mubr.f32.mxu0 0.0
    %3489 = vmatmul.mubr.f32.gmra.mxu0 %v3422
    %v3490 = vpop.f32.mrf.mxu0
    %v3491 = vadd.f32 %v3418, %v3490
    %v3492 = vpop.f32.mrf.mxu0
    %3493 = vdwg.mxu0
    %v3495 = vlaneseq
    %v3496 = vshrl.u32 %v3495, 7
    %v3497 = vsub.s32 0, %v3496
    %v3498 = vrot.slane %v3347, %v3497
    %v3500 = vadd.f32 %v3491, %v3498
    %v3501 = vxor.u32 %v3500, 2147483648
    %v3502 = vmul.f32 %v3501, 1.442695
    %v3503 = vpow.pop %v3502
    %v3504 = vadd.f32 %v3503, 1.0
    %v3505 = vrcp.pop %v3504
    %v3506 = vmul.f32 1.0, %v3505
    %v3507 = vtanh.pop %v3500
    %3509 = vrot.lane.b32.xlu0 %v3338, 32
    %v3510 = vpop.permute.xlu0 %3509
    %v3512 = vmul.f32 %v3506, %v3510
    %3514 = vrot.lane.b32.xlu0 %v3507, 32
    %v3515 = vpop.permute.xlu0 %3514
    %v3517 = vmul.f32 %v3506, %v3515
    %3519 = vrot.lane.b32.xlu0 %v3517, 32
    %v3520 = vpop.permute.xlu0 %3519
    %v3522 = vadd.f32 %v3512, %v3520
    %v3523 = vtanh.pop %v3522
    %3525 = vrot.lane.b32.xlu0 %v3523, 32
    %v3526 = vpop.permute.xlu0 %3525
    %v3528 = vmul.f32 %v3506, %v3526
    %3530 = vrot.lane.b32.xlu0 %v3528, 64
    %v3531 = vpop.permute.xlu0 %3530
    %3533 = vst.msk [vmem:[#allocation3] sm:$0xff] %vm56, %v3531
    %3535 = vrot.lane.b32.xlu0 %v3522, 96
    %v3536 = vpop.permute.xlu0 %3535
    %3538 = vst.msk [vmem:[#allocation4] sm:$0xff] %vm56, %v3536
    %v3539 = vld [vmem:[%s10] sm:$0xff]
    %v3540 = vld [vmem:[%s10 + $0x8] sm:$0xff]
    %v3541 = vld [vmem:[%s10 + $0x10] sm:$0xff]
    %v3542 = vld [vmem:[%s10 + $0x18] sm:$0xff]
    %v3543 = vld [vmem:[%s11] sm:$0x1]
    %v3545 = vlaneseq
    %v3546 = vshrl.u32 %v3545, 7
    %v3547 = vsub.s32 0, %v3546
    %v3548 = vrot.slane %v3543, %v3547
    %v3550 = vsel %vm56, %v3531, 0
    %3552 = vmatprep.subr.mxu0 0.0
    %3553 = vmatpush1.msra.mxu0 0.0
    %3554 = vmatprep.subr.mxu0 0.0
    %3555 = vmatpush1.msra.mxu0 0.0
    %3556 = vmatprep.subr.mxu0 0.0
    %3557 = vmatpush1.msra.mxu0 0.0
    %3558 = vmatprep.subr.mxu0 0.0
    %3559 = vmatpush1.msra.mxu0 0.0
    %3560 = vmatprep.subr.mxu0 0.0
    %3561 = vmatpush1.msra.mxu0 0.0
    %3562 = vmatprep.subr.mxu0 0.0
    %3563 = vmatpush1.msra.mxu0 0.0
    %3564 = vmatprep.subr.mxu0 0.0
    %3565 = vmatpush1.msra.mxu0 0.0
    %3566 = vmatprep.subr.mxu0 0.0
    %3567 = vmatpush1.msra.mxu0 0.0
    %3568 = vmatprep.subr.mxu0 0.0
    %3569 = vmatpush1.msra.mxu0 0.0
    %3570 = vmatprep.subr.mxu0 0.0
    %3571 = vmatpush1.msra.mxu0 0.0
    %3572 = vmatprep.subr.mxu0 0.0
    %3573 = vmatpush1.msra.mxu0 0.0
    %3574 = vmatprep.subr.mxu0 0.0
    %3575 = vmatpush1.msra.mxu0 0.0
    %3576 = vmatprep.subr.mxu0 0.0
    %3577 = vmatpush1.msra.mxu0 %v3542
    %3578 = vmatprep.subr.mxu0 0.0
    %3579 = vmatpush1.msra.mxu0 %v3541
    %3580 = vmatprep.subr.mxu0 0.0
    %3581 = vmatpush1.msra.mxu0 %v3540
    %3582 = vmatprep.subr.mxu0 0.0
    %3583 = vmatpush1.msra.mxu0 %v3539
    %3584 = vmatprep.subr.mxu0 0.0
    %3585 = vmatpush2.msra.mxu0 0.0
    %3586 = vmatprep.subr.mxu0 0.0
    %3587 = vmatpush2.msra.mxu0 0.0
    %3588 = vmatprep.subr.mxu0 0.0
    %3589 = vmatpush2.msra.mxu0 0.0
    %3590 = vmatprep.subr.mxu0 0.0
    %3591 = vmatpush2.msra.mxu0 0.0
    %3592 = vmatprep.subr.mxu0 0.0
    %3593 = vmatpush2.msra.mxu0 0.0
    %3594 = vmatprep.subr.mxu0 0.0
    %3595 = vmatpush2.msra.mxu0 0.0
    %3596 = vmatprep.subr.mxu0 0.0
    %3597 = vmatpush2.msra.mxu0 0.0
    %3598 = vmatprep.subr.mxu0 0.0
    %3599 = vmatpush2.msra.mxu0 0.0
    %3600 = vmatprep.subr.mxu0 0.0
    %3601 = vmatpush2.msra.mxu0 0.0
    %3602 = vmatprep.subr.mxu0 0.0
    %3603 = vmatpush2.msra.mxu0 0.0
    %3604 = vmatprep.subr.mxu0 0.0
    %3605 = vmatpush2.msra.mxu0 0.0
    %3606 = vmatprep.subr.mxu0 0.0
    %3607 = vmatpush2.msra.mxu0 0.0
    %3608 = vmatprep.subr.mxu0 0.0
    %3609 = vmatpush2.msra.mxu0 0.0
    %3610 = vmatprep.subr.mxu0 0.0
    %3611 = vmatpush2.msra.mxu0 0.0
    %3612 = vmatprep.subr.mxu0 0.0
    %3613 = vmatpush2.msra.mxu0 0.0
    %3614 = vmatprep.subr.mxu0 0.0
    %3615 = vmatpush2.msra.mxu0 0.0
    %3616 = vmatprep.mubr.f32.mxu0 0.0
    %3617 = vmatmul.mubr.f32.gmra.mxu0 %v3550
    %v3618 = vpop.f32.mrf.mxu0
    %v3619 = vadd.f32 %v3548, %v3618
    %v3620 = vpop.f32.mrf.mxu0
    %3621 = vdwg.mxu0
    %s3622 = scalar_lea.vmem [#allocation8], 40
    %3623 = vst [vmem:[%s3622] sm:$0xff] %v3619
    %s3624 = sld [smem:[#allocation5 + $0x4]]
    %p3625 = scmp.eq.s32.totalorder %s3624, 1
    // Predicated region
    $region86: #{seq2seq_forward.1} parent=1 // pred_check
      %p3626 = pneg %p3625
    $region87: #{seq2seq_forward.1} parent=1 // pred_check_branch
      %3628 = sbr.rel (%p3626) target = $region89
    $region88: #{seq2seq_forward.1} parent=1 // pred_region
      %s3629 = scalar_lea.vmem %s2, 40
      %v3630 = vld [vmem:[%s3629] sm:$0xff]
      %3631 = vst.msk [vmem:[#allocation2] sm:$0xff] %vm56, %v3630
    $region89: #{seq2seq_forward.1} parent=1 // pred_fallthru
      _
    %s3632 = sld [smem:[#allocation5 + $0x4]]
    %p3633 = scmp.eq.s32.totalorder %s3632, 0
    // Predicated region
    $region90: #{seq2seq_forward.1} parent=1 // pred_check
      %p3634 = pneg %p3633
    $region91: #{seq2seq_forward.1} parent=1 // pred_check_branch
      %3636 = sbr.rel (%p3634) target = $region93
    $region92: #{seq2seq_forward.1} parent=1 // pred_region
      %v3637 = vlaneseq
      %v3638 = vand.u32 %v3637, 127
      %3639 = vmax.xlane.f32.xlu0 %v3619
      %v3640 = vpop.xlane.xlu0 %3639
      %vm3641 = vcmp.eq.f32.partialorder %v3619, %v3640
      %v3642 = vsel %vm3641, %v3638, 128
      %v3643 = vand.u32 %v3642, 65535
      %v3644 = vshra.s32 %v3642, 16
      %v3645 = vcvt.s32.f32 %v3643
      %v3646 = vcvt.s32.f32 %v3644
      %3647 = vmin.xlane.f32.xlu0 %v3646
      %v3648 = vpop.xlane.xlu0 %3647
      %vm3649 = vcmp.eq.f32.partialorder %v3646, %v3648
      %v3650 = vsel %vm3649, %v3645, inf
      %3651 = vmin.xlane.f32.xlu0 %v3650
      %v3652 = vpop.xlane.xlu0 %3651
      %v3653 = vcvt.f32.s32 %v3652
      %v3654 = vcvt.f32.s32 %v3648
      %v3655 = vshll.u32 %v3654, 16
      %v3656 = vadd.s32 %v3655, %v3653
      %vm3657 = vcmp.eq.s32.totalorder %v3638, %v3656
      %v3658 = vsel %vm3657, 1, 0
      %v3659 = vcvt.s32.f32 %v3658
      %v3660 = vld [vmem:[%s3] sm:$0xff]
      %v3661 = vld [vmem:[%s3 + $0x8] sm:$0xff]
      %v3662 = vld [vmem:[%s3 + $0x10] sm:$0xff]
      %v3663 = vld [vmem:[%s3 + $0x18] sm:$0xff]
      %v3664 = vld [vmem:[%s3 + $0x20] sm:$0xff]
      %v3665 = vld [vmem:[%s3 + $0x28] sm:$0xff]
      %v3666 = vld [vmem:[%s3 + $0x30] sm:$0xff]
      %v3667 = vld [vmem:[%s3 + $0x38] sm:$0xff]
      %v3668 = vld [vmem:[%s3 + $0x40] sm:$0xff]
      %v3669 = vld [vmem:[%s3 + $0x48] sm:$0xff]
      %v3670 = vld [vmem:[%s3 + $0x50] sm:$0xff]
      %v3671 = vld [vmem:[%s3 + $0x58] sm:$0xff]
      %v3672 = vld [vmem:[%s3 + $0x60] sm:$0xff]
      %v3673 = vld [vmem:[%s3 + $0x68] sm:$0xff]
      %v3674 = vld [vmem:[%s3 + $0x70] sm:$0xff]
      %v3675 = vld [vmem:[%s3 + $0x78] sm:$0xff]
      %3676 = vmatprep.subr.mxu0 0.0
      %3677 = vmatpush1.msra.mxu0 %v3675
      %3678 = vmatprep.subr.mxu0 0.0
      %3679 = vmatpush1.msra.mxu0 %v3674
      %3680 = vmatprep.subr.mxu0 0.0
      %3681 = vmatpush1.msra.mxu0 %v3673
      %3682 = vmatprep.subr.mxu0 0.0
      %3683 = vmatpush1.msra.mxu0 %v3672
      %3684 = vmatprep.subr.mxu0 0.0
      %3685 = vmatpush1.msra.mxu0 %v3671
      %3686 = vmatprep.subr.mxu0 0.0
      %3687 = vmatpush1.msra.mxu0 %v3670
      %3688 = vmatprep.subr.mxu0 0.0
      %3689 = vmatpush1.msra.mxu0 %v3669
      %3690 = vmatprep.subr.mxu0 0.0
      %3691 = vmatpush1.msra.mxu0 %v3668
      %3692 = vmatprep.subr.mxu0 0.0
      %3693 = vmatpush1.msra.mxu0 %v3667
      %3694 = vmatprep.subr.mxu0 0.0
      %3695 = vmatpush1.msra.mxu0 %v3666
      %3696 = vmatprep.subr.mxu0 0.0
      %3697 = vmatpush1.msra.mxu0 %v3665
      %3698 = vmatprep.subr.mxu0 0.0
      %3699 = vmatpush1.msra.mxu0 %v3664
      %3700 = vmatprep.subr.mxu0 0.0
      %3701 = vmatpush1.msra.mxu0 %v3663
      %3702 = vmatprep.subr.mxu0 0.0
      %3703 = vmatpush1.msra.mxu0 %v3662
      %3704 = vmatprep.subr.mxu0 0.0
      %3705 = vmatpush1.msra.mxu0 %v3661
      %3706 = vmatprep.subr.mxu0 0.0
      %3707 = vmatpush1.msra.mxu0 %v3660
      %3708 = vmatprep.subr.mxu0 0.0
      %3709 = vmatpush2.msra.mxu0 0.0
      %3710 = vmatprep.subr.mxu0 0.0
      %3711 = vmatpush2.msra.mxu0 0.0
      %3712 = vmatprep.subr.mxu0 0.0
      %3713 = vmatpush2.msra.mxu0 0.0
      %3714 = vmatprep.subr.mxu0 0.0
      %3715 = vmatpush2.msra.mxu0 0.0
      %3716 = vmatprep.subr.mxu0 0.0
      %3717 = vmatpush2.msra.mxu0 0.0
      %3718 = vmatprep.subr.mxu0 0.0
      %3719 = vmatpush2.msra.mxu0 0.0
      %3720 = vmatprep.subr.mxu0 0.0
      %3721 = vmatpush2.msra.mxu0 0.0
      %3722 = vmatprep.subr.mxu0 0.0
      %3723 = vmatpush2.msra.mxu0 0.0
      %3724 = vmatprep.subr.mxu0 0.0
      %3725 = vmatpush2.msra.mxu0 0.0
      %3726 = vmatprep.subr.mxu0 0.0
      %3727 = vmatpush2.msra.mxu0 0.0
      %3728 = vmatprep.subr.mxu0 0.0
      %3729 = vmatpush2.msra.mxu0 0.0
      %3730 = vmatprep.subr.mxu0 0.0
      %3731 = vmatpush2.msra.mxu0 0.0
      %3732 = vmatprep.subr.mxu0 0.0
      %3733 = vmatpush2.msra.mxu0 0.0
      %3734 = vmatprep.subr.mxu0 0.0
      %3735 = vmatpush2.msra.mxu0 0.0
      %3736 = vmatprep.subr.mxu0 0.0
      %3737 = vmatpush2.msra.mxu0 0.0
      %3738 = vmatprep.subr.mxu0 0.0
      %3739 = vmatpush2.msra.mxu0 0.0
      %3740 = vmatprep.mubr.f32.mxu0 0.0
      %3741 = vmatmul.mubr.f32.gmra.mxu0 %v3659
      %v3742 = vpop.f32.mrf.mxu0
      %v3743 = vadd.f32 0.0, %v3742
      %v3744 = vpop.f32.mrf.mxu0
      %3745 = vdwg.mxu0
      %3746 = vst.msk [vmem:[#allocation2] sm:$0xff] %vm56, %v3743
    $region93: #{seq2seq_forward.1} parent=1 // pred_fallthru
      _
    %v3747 = vld [vmem:[#allocation2] sm:$0xff]
    %v3748 = vld [vmem:[#allocation3] sm:$0xff]
    %v3749 = vld [vmem:[#allocation4] sm:$0xff]
    %v3750 = vld [vmem:[%s7] sm:$0xff]
    %v3751 = vld [vmem:[%s7 + $0x8] sm:$0xff]
    %v3752 = vld [vmem:[%s7 + $0x10] sm:$0xff]
    %v3753 = vld [vmem:[%s7 + $0x18] sm:$0xff]
    %v3754 = vld [vmem:[%s8] sm:$0xff]
    %v3755 = vld [vmem:[%s8 + $0x8] sm:$0xff]
    %v3756 = vld [vmem:[%s8 + $0x10] sm:$0xff]
    %v3757 = vld [vmem:[%s8 + $0x18] sm:$0xff]
    %v3758 = vld [vmem:[%s9] sm:$0x1]
    %v3760 = vsel %vm56, %v3748, 0
    %3762 = vmatprep.subr.mxu0 0.0
    %3763 = vmatpush1.msra.mxu0 0.0
    %3764 = vmatprep.subr.mxu0 0.0
    %3765 = vmatpush1.msra.mxu0 0.0
    %3766 = vmatprep.subr.mxu0 0.0
    %3767 = vmatpush1.msra.mxu0 0.0
    %3768 = vmatprep.subr.mxu0 0.0
    %3769 = vmatpush1.msra.mxu0 0.0
    %3770 = vmatprep.subr.mxu0 0.0
    %3771 = vmatpush1.msra.mxu0 0.0
    %3772 = vmatprep.subr.mxu0 0.0
    %3773 = vmatpush1.msra.mxu0 0.0
    %3774 = vmatprep.subr.mxu0 0.0
    %3775 = vmatpush1.msra.mxu0 0.0
    %3776 = vmatprep.subr.mxu0 0.0
    %3777 = vmatpush1.msra.mxu0 0.0
    %3778 = vmatprep.subr.mxu0 0.0
    %3779 = vmatpush1.msra.mxu0 0.0
    %3780 = vmatprep.subr.mxu0 0.0
    %3781 = vmatpush1.msra.mxu0 0.0
    %3782 = vmatprep.subr.mxu0 0.0
    %3783 = vmatpush1.msra.mxu0 0.0
    %3784 = vmatprep.subr.mxu0 0.0
    %3785 = vmatpush1.msra.mxu0 0.0
    %3786 = vmatprep.subr.mxu0 0.0
    %3787 = vmatpush1.msra.mxu0 %v3757
    %3788 = vmatprep.subr.mxu0 0.0
    %3789 = vmatpush1.msra.mxu0 %v3756
    %3790 = vmatprep.subr.mxu0 0.0
    %3791 = vmatpush1.msra.mxu0 %v3755
    %3792 = vmatprep.subr.mxu0 0.0
    %3793 = vmatpush1.msra.mxu0 %v3754
    %3794 = vmatprep.subr.mxu0 0.0
    %3795 = vmatpush2.msra.mxu0 0.0
    %3796 = vmatprep.subr.mxu0 0.0
    %3797 = vmatpush2.msra.mxu0 0.0
    %3798 = vmatprep.subr.mxu0 0.0
    %3799 = vmatpush2.msra.mxu0 0.0
    %3800 = vmatprep.subr.mxu0 0.0
    %3801 = vmatpush2.msra.mxu0 0.0
    %3802 = vmatprep.subr.mxu0 0.0
    %3803 = vmatpush2.msra.mxu0 0.0
    %3804 = vmatprep.subr.mxu0 0.0
    %3805 = vmatpush2.msra.mxu0 0.0
    %3806 = vmatprep.subr.mxu0 0.0
    %3807 = vmatpush2.msra.mxu0 0.0
    %3808 = vmatprep.subr.mxu0 0.0
    %3809 = vmatpush2.msra.mxu0 0.0
    %3810 = vmatprep.subr.mxu0 0.0
    %3811 = vmatpush2.msra.mxu0 0.0
    %3812 = vmatprep.subr.mxu0 0.0
    %3813 = vmatpush2.msra.mxu0 0.0
    %3814 = vmatprep.subr.mxu0 0.0
    %3815 = vmatpush2.msra.mxu0 0.0
    %3816 = vmatprep.subr.mxu0 0.0
    %3817 = vmatpush2.msra.mxu0 0.0
    %3818 = vmatprep.subr.mxu0 0.0
    %3819 = vmatpush2.msra.mxu0 0.0
    %3820 = vmatprep.subr.mxu0 0.0
    %3821 = vmatpush2.msra.mxu0 0.0
    %3822 = vmatprep.subr.mxu0 0.0
    %3823 = vmatpush2.msra.mxu0 0.0
    %3824 = vmatprep.subr.mxu0 0.0
    %3825 = vmatpush2.msra.mxu0 0.0
    %3826 = vmatprep.mubr.f32.mxu0 0.0
    %3827 = vmatmul.mubr.f32.gmra.mxu0 %v3760
    %v3828 = vpop.f32.mrf.mxu0
    %v3829 = vadd.f32 0.0, %v3828
    %v3830 = vpop.f32.mrf.mxu0
    %3831 = vdwg.mxu0
    %v3833 = vsel %vm56, %v3747, 0
    %3835 = vmatprep.subr.mxu0 0.0
    %3836 = vmatpush1.msra.mxu0 0.0
    %3837 = vmatprep.subr.mxu0 0.0
    %3838 = vmatpush1.msra.mxu0 0.0
    %3839 = vmatprep.subr.mxu0 0.0
    %3840 = vmatpush1.msra.mxu0 0.0
    %3841 = vmatprep.subr.mxu0 0.0
    %3842 = vmatpush1.msra.mxu0 0.0
    %3843 = vmatprep.subr.mxu0 0.0
    %3844 = vmatpush1.msra.mxu0 0.0
    %3845 = vmatprep.subr.mxu0 0.0
    %3846 = vmatpush1.msra.mxu0 0.0
    %3847 = vmatprep.subr.mxu0 0.0
    %3848 = vmatpush1.msra.mxu0 0.0
    %3849 = vmatprep.subr.mxu0 0.0
    %3850 = vmatpush1.msra.mxu0 0.0
    %3851 = vmatprep.subr.mxu0 0.0
    %3852 = vmatpush1.msra.mxu0 0.0
    %3853 = vmatprep.subr.mxu0 0.0
    %3854 = vmatpush1.msra.mxu0 0.0
    %3855 = vmatprep.subr.mxu0 0.0
    %3856 = vmatpush1.msra.mxu0 0.0
    %3857 = vmatprep.subr.mxu0 0.0
    %3858 = vmatpush1.msra.mxu0 0.0
    %3859 = vmatprep.subr.mxu0 0.0
    %3860 = vmatpush1.msra.mxu0 %v3753
    %3861 = vmatprep.subr.mxu0 0.0
    %3862 = vmatpush1.msra.mxu0 %v3752
    %3863 = vmatprep.subr.mxu0 0.0
    %3864 = vmatpush1.msra.mxu0 %v3751
    %3865 = vmatprep.subr.mxu0 0.0
    %3866 = vmatpush1.msra.mxu0 %v3750
    %3867 = vmatprep.subr.mxu0 0.0
    %3868 = vmatpush2.msra.mxu0 0.0
    %3869 = vmatprep.subr.mxu0 0.0
    %3870 = vmatpush2.msra.mxu0 0.0
    %3871 = vmatprep.subr.mxu0 0.0
    %3872 = vmatpush2.msra.mxu0 0.0
    %3873 = vmatprep.subr.mxu0 0.0
    %3874 = vmatpush2.msra.mxu0 0.0
    %3875 = vmatprep.subr.mxu0 0.0
    %3876 = vmatpush2.msra.mxu0 0.0
    %3877 = vmatprep.subr.mxu0 0.0
    %3878 = vmatpush2.msra.mxu0 0.0
    %3879 = vmatprep.subr.mxu0 0.0
    %3880 = vmatpush2.msra.mxu0 0.0
    %3881 = vmatprep.subr.mxu0 0.0
    %3882 = vmatpush2.msra.mxu0 0.0
    %3883 = vmatprep.subr.mxu0 0.0
    %3884 = vmatpush2.msra.mxu0 0.0
    %3885 = vmatprep.subr.mxu0 0.0
    %3886 = vmatpush2.msra.mxu0 0.0
    %3887 = vmatprep.subr.mxu0 0.0
    %3888 = vmatpush2.msra.mxu0 0.0
    %3889 = vmatprep.subr.mxu0 0.0
    %3890 = vmatpush2.msra.mxu0 0.0
    %3891 = vmatprep.subr.mxu0 0.0
    %3892 = vmatpush2.msra.mxu0 0.0
    %3893 = vmatprep.subr.mxu0 0.0
    %3894 = vmatpush2.msra.mxu0 0.0
    %3895 = vmatprep.subr.mxu0 0.0
    %3896 = vmatpush2.msra.mxu0 0.0
    %3897 = vmatprep.subr.mxu0 0.0
    %3898 = vmatpush2.msra.mxu0 0.0
    %3899 = vmatprep.mubr.f32.mxu0 0.0
    %3900 = vmatmul.mubr.f32.gmra.mxu0 %v3833
    %v3901 = vpop.f32.mrf.mxu0
    %v3902 = vadd.f32 %v3829, %v3901
    %v3903 = vpop.f32.mrf.mxu0
    %3904 = vdwg.mxu0
    %v3906 = vlaneseq
    %v3907 = vshrl.u32 %v3906, 7
    %v3908 = vsub.s32 0, %v3907
    %v3909 = vrot.slane %v3758, %v3908
    %v3911 = vadd.f32 %v3902, %v3909
    %v3912 = vxor.u32 %v3911, 2147483648
    %v3913 = vmul.f32 %v3912, 1.442695
    %v3914 = vpow.pop %v3913
    %v3915 = vadd.f32 %v3914, 1.0
    %v3916 = vrcp.pop %v3915
    %v3917 = vmul.f32 1.0, %v3916
    %v3918 = vtanh.pop %v3911
    %3920 = vrot.lane.b32.xlu0 %v3749, 32
    %v3921 = vpop.permute.xlu0 %3920
    %v3923 = vmul.f32 %v3917, %v3921
    %3925 = vrot.lane.b32.xlu0 %v3918, 32
    %v3926 = vpop.permute.xlu0 %3925
    %v3928 = vmul.f32 %v3917, %v3926
    %3930 = vrot.lane.b32.xlu0 %v3928, 32
    %v3931 = vpop.permute.xlu0 %3930
    %v3933 = vadd.f32 %v3923, %v3931
    %v3934 = vtanh.pop %v3933
    %3936 = vrot.lane.b32.xlu0 %v3934, 32
    %v3937 = vpop.permute.xlu0 %3936
    %v3939 = vmul.f32 %v3917, %v3937
    %3941 = vrot.lane.b32.xlu0 %v3939, 64
    %v3942 = vpop.permute.xlu0 %3941
    %3944 = vst.msk [vmem:[#allocation3] sm:$0xff] %vm56, %v3942
    %3946 = vrot.lane.b32.xlu0 %v3933, 96
    %v3947 = vpop.permute.xlu0 %3946
    %3949 = vst.msk [vmem:[#allocation4] sm:$0xff] %vm56, %v3947
    %v3950 = vld [vmem:[%s10] sm:$0xff]
    %v3951 = vld [vmem:[%s10 + $0x8] sm:$0xff]
    %v3952 = vld [vmem:[%s10 + $0x10] sm:$0xff]
    %v3953 = vld [vmem:[%s10 + $0x18] sm:$0xff]
    %v3954 = vld [vmem:[%s11] sm:$0x1]
    %v3956 = vlaneseq
    %v3957 = vshrl.u32 %v3956, 7
    %v3958 = vsub.s32 0, %v3957
    %v3959 = vrot.slane %v3954, %v3958
    %v3961 = vsel %vm56, %v3942, 0
    %3963 = vmatprep.subr.mxu0 0.0
    %3964 = vmatpush1.msra.mxu0 0.0
    %3965 = vmatprep.subr.mxu0 0.0
    %3966 = vmatpush1.msra.mxu0 0.0
    %3967 = vmatprep.subr.mxu0 0.0
    %3968 = vmatpush1.msra.mxu0 0.0
    %3969 = vmatprep.subr.mxu0 0.0
    %3970 = vmatpush1.msra.mxu0 0.0
    %3971 = vmatprep.subr.mxu0 0.0
    %3972 = vmatpush1.msra.mxu0 0.0
    %3973 = vmatprep.subr.mxu0 0.0
    %3974 = vmatpush1.msra.mxu0 0.0
    %3975 = vmatprep.subr.mxu0 0.0
    %3976 = vmatpush1.msra.mxu0 0.0
    %3977 = vmatprep.subr.mxu0 0.0
    %3978 = vmatpush1.msra.mxu0 0.0
    %3979 = vmatprep.subr.mxu0 0.0
    %3980 = vmatpush1.msra.mxu0 0.0
    %3981 = vmatprep.subr.mxu0 0.0
    %3982 = vmatpush1.msra.mxu0 0.0
    %3983 = vmatprep.subr.mxu0 0.0
    %3984 = vmatpush1.msra.mxu0 0.0
    %3985 = vmatprep.subr.mxu0 0.0
    %3986 = vmatpush1.msra.mxu0 0.0
    %3987 = vmatprep.subr.mxu0 0.0
    %3988 = vmatpush1.msra.mxu0 %v3953
    %3989 = vmatprep.subr.mxu0 0.0
    %3990 = vmatpush1.msra.mxu0 %v3952
    %3991 = vmatprep.subr.mxu0 0.0
    %3992 = vmatpush1.msra.mxu0 %v3951
    %3993 = vmatprep.subr.mxu0 0.0
    %3994 = vmatpush1.msra.mxu0 %v3950
    %3995 = vmatprep.subr.mxu0 0.0
    %3996 = vmatpush2.msra.mxu0 0.0
    %3997 = vmatprep.subr.mxu0 0.0
    %3998 = vmatpush2.msra.mxu0 0.0
    %3999 = vmatprep.subr.mxu0 0.0
    %4000 = vmatpush2.msra.mxu0 0.0
    %4001 = vmatprep.subr.mxu0 0.0
    %4002 = vmatpush2.msra.mxu0 0.0
    %4003 = vmatprep.subr.mxu0 0.0
    %4004 = vmatpush2.msra.mxu0 0.0
    %4005 = vmatprep.subr.mxu0 0.0
    %4006 = vmatpush2.msra.mxu0 0.0
    %4007 = vmatprep.subr.mxu0 0.0
    %4008 = vmatpush2.msra.mxu0 0.0
    %4009 = vmatprep.subr.mxu0 0.0
    %4010 = vmatpush2.msra.mxu0 0.0
    %4011 = vmatprep.subr.mxu0 0.0
    %4012 = vmatpush2.msra.mxu0 0.0
    %4013 = vmatprep.subr.mxu0 0.0
    %4014 = vmatpush2.msra.mxu0 0.0
    %4015 = vmatprep.subr.mxu0 0.0
    %4016 = vmatpush2.msra.mxu0 0.0
    %4017 = vmatprep.subr.mxu0 0.0
    %4018 = vmatpush2.msra.mxu0 0.0
    %4019 = vmatprep.subr.mxu0 0.0
    %4020 = vmatpush2.msra.mxu0 0.0
    %4021 = vmatprep.subr.mxu0 0.0
    %4022 = vmatpush2.msra.mxu0 0.0
    %4023 = vmatprep.subr.mxu0 0.0
    %4024 = vmatpush2.msra.mxu0 0.0
    %4025 = vmatprep.subr.mxu0 0.0
    %4026 = vmatpush2.msra.mxu0 0.0
    %4027 = vmatprep.mubr.f32.mxu0 0.0
    %4028 = vmatmul.mubr.f32.gmra.mxu0 %v3961
    %v4029 = vpop.f32.mrf.mxu0
    %v4030 = vadd.f32 %v3959, %v4029
    %v4031 = vpop.f32.mrf.mxu0
    %4032 = vdwg.mxu0
    %s4033 = scalar_lea.vmem [#allocation8], 48
    %4034 = vst [vmem:[%s4033] sm:$0xff] %v4030
    %s4035 = sld [smem:[#allocation5 + $0x5]]
    %p4036 = scmp.eq.s32.totalorder %s4035, 1
    // Predicated region
    $region94: #{seq2seq_forward.1} parent=1 // pred_check
      %p4037 = pneg %p4036
    $region95: #{seq2seq_forward.1} parent=1 // pred_check_branch
      %4039 = sbr.rel (%p4037) target = $region97
    $region96: #{seq2seq_forward.1} parent=1 // pred_region
      %s4040 = scalar_lea.vmem %s2, 48
      %v4041 = vld [vmem:[%s4040] sm:$0xff]
      %4042 = vst.msk [vmem:[#allocation2] sm:$0xff] %vm56, %v4041
    $region97: #{seq2seq_forward.1} parent=1 // pred_fallthru
      _
    %s4043 = sld [smem:[#allocation5 + $0x5]]
    %p4044 = scmp.eq.s32.totalorder %s4043, 0
    // Predicated region
    $region98: #{seq2seq_forward.1} parent=1 // pred_check
      %p4045 = pneg %p4044
    $region99: #{seq2seq_forward.1} parent=1 // pred_check_branch
      %4047 = sbr.rel (%p4045) target = $region101
    $region100: #{seq2seq_forward.1} parent=1 // pred_region
      %v4048 = vlaneseq
      %v4049 = vand.u32 %v4048, 127
      %4050 = vmax.xlane.f32.xlu0 %v4030
      %v4051 = vpop.xlane.xlu0 %4050
      %vm4052 = vcmp.eq.f32.partialorder %v4030, %v4051
      %v4053 = vsel %vm4052, %v4049, 128
      %v4054 = vand.u32 %v4053, 65535
      %v4055 = vshra.s32 %v4053, 16
      %v4056 = vcvt.s32.f32 %v4054
      %v4057 = vcvt.s32.f32 %v4055
      %4058 = vmin.xlane.f32.xlu0 %v4057
      %v4059 = vpop.xlane.xlu0 %4058
      %vm4060 = vcmp.eq.f32.partialorder %v4057, %v4059
      %v4061 = vsel %vm4060, %v4056, inf
      %4062 = vmin.xlane.f32.xlu0 %v4061
      %v4063 = vpop.xlane.xlu0 %4062
      %v4064 = vcvt.f32.s32 %v4063
      %v4065 = vcvt.f32.s32 %v4059
      %v4066 = vshll.u32 %v4065, 16
      %v4067 = vadd.s32 %v4066, %v4064
      %vm4068 = vcmp.eq.s32.totalorder %v4049, %v4067
      %v4069 = vsel %vm4068, 1, 0
      %v4070 = vcvt.s32.f32 %v4069
      %v4071 = vld [vmem:[%s3] sm:$0xff]
      %v4072 = vld [vmem:[%s3 + $0x8] sm:$0xff]
      %v4073 = vld [vmem:[%s3 + $0x10] sm:$0xff]
      %v4074 = vld [vmem:[%s3 + $0x18] sm:$0xff]
      %v4075 = vld [vmem:[%s3 + $0x20] sm:$0xff]
      %v4076 = vld [vmem:[%s3 + $0x28] sm:$0xff]
      %v4077 = vld [vmem:[%s3 + $0x30] sm:$0xff]
      %v4078 = vld [vmem:[%s3 + $0x38] sm:$0xff]
      %v4079 = vld [vmem:[%s3 + $0x40] sm:$0xff]
      %v4080 = vld [vmem:[%s3 + $0x48] sm:$0xff]
      %v4081 = vld [vmem:[%s3 + $0x50] sm:$0xff]
      %v4082 = vld [vmem:[%s3 + $0x58] sm:$0xff]
      %v4083 = vld [vmem:[%s3 + $0x60] sm:$0xff]
      %v4084 = vld [vmem:[%s3 + $0x68] sm:$0xff]
      %v4085 = vld [vmem:[%s3 + $0x70] sm:$0xff]
      %v4086 = vld [vmem:[%s3 + $0x78] sm:$0xff]
      %4087 = vmatprep.subr.mxu0 0.0
      %4088 = vmatpush1.msra.mxu0 %v4086
      %4089 = vmatprep.subr.mxu0 0.0
      %4090 = vmatpush1.msra.mxu0 %v4085
      %4091 = vmatprep.subr.mxu0 0.0
      %4092 = vmatpush1.msra.mxu0 %v4084
      %4093 = vmatprep.subr.mxu0 0.0
      %4094 = vmatpush1.msra.mxu0 %v4083
      %4095 = vmatprep.subr.mxu0 0.0
      %4096 = vmatpush1.msra.mxu0 %v4082
      %4097 = vmatprep.subr.mxu0 0.0
      %4098 = vmatpush1.msra.mxu0 %v4081
      %4099 = vmatprep.subr.mxu0 0.0
      %4100 = vmatpush1.msra.mxu0 %v4080
      %4101 = vmatprep.subr.mxu0 0.0
      %4102 = vmatpush1.msra.mxu0 %v4079
      %4103 = vmatprep.subr.mxu0 0.0
      %4104 = vmatpush1.msra.mxu0 %v4078
      %4105 = vmatprep.subr.mxu0 0.0
      %4106 = vmatpush1.msra.mxu0 %v4077
      %4107 = vmatprep.subr.mxu0 0.0
      %4108 = vmatpush1.msra.mxu0 %v4076
      %4109 = vmatprep.subr.mxu0 0.0
      %4110 = vmatpush1.msra.mxu0 %v4075
      %4111 = vmatprep.subr.mxu0 0.0
      %4112 = vmatpush1.msra.mxu0 %v4074
      %4113 = vmatprep.subr.mxu0 0.0
      %4114 = vmatpush1.msra.mxu0 %v4073
      %4115 = vmatprep.subr.mxu0 0.0
      %4116 = vmatpush1.msra.mxu0 %v4072
      %4117 = vmatprep.subr.mxu0 0.0
      %4118 = vmatpush1.msra.mxu0 %v4071
      %4119 = vmatprep.subr.mxu0 0.0
      %4120 = vmatpush2.msra.mxu0 0.0
      %4121 = vmatprep.subr.mxu0 0.0
      %4122 = vmatpush2.msra.mxu0 0.0
      %4123 = vmatprep.subr.mxu0 0.0
      %4124 = vmatpush2.msra.mxu0 0.0
      %4125 = vmatprep.subr.mxu0 0.0
      %4126 = vmatpush2.msra.mxu0 0.0
      %4127 = vmatprep.subr.mxu0 0.0
      %4128 = vmatpush2.msra.mxu0 0.0
      %4129 = vmatprep.subr.mxu0 0.0
      %4130 = vmatpush2.msra.mxu0 0.0
      %4131 = vmatprep.subr.mxu0 0.0
      %4132 = vmatpush2.msra.mxu0 0.0
      %4133 = vmatprep.subr.mxu0 0.0
      %4134 = vmatpush2.msra.mxu0 0.0
      %4135 = vmatprep.subr.mxu0 0.0
      %4136 = vmatpush2.msra.mxu0 0.0
      %4137 = vmatprep.subr.mxu0 0.0
      %4138 = vmatpush2.msra.mxu0 0.0
      %4139 = vmatprep.subr.mxu0 0.0
      %4140 = vmatpush2.msra.mxu0 0.0
      %4141 = vmatprep.subr.mxu0 0.0
      %4142 = vmatpush2.msra.mxu0 0.0
      %4143 = vmatprep.subr.mxu0 0.0
      %4144 = vmatpush2.msra.mxu0 0.0
      %4145 = vmatprep.subr.mxu0 0.0
      %4146 = vmatpush2.msra.mxu0 0.0
      %4147 = vmatprep.subr.mxu0 0.0
      %4148 = vmatpush2.msra.mxu0 0.0
      %4149 = vmatprep.subr.mxu0 0.0
      %4150 = vmatpush2.msra.mxu0 0.0
      %4151 = vmatprep.mubr.f32.mxu0 0.0
      %4152 = vmatmul.mubr.f32.gmra.mxu0 %v4070
      %v4153 = vpop.f32.mrf.mxu0
      %v4154 = vadd.f32 0.0, %v4153
      %v4155 = vpop.f32.mrf.mxu0
      %4156 = vdwg.mxu0
      %4157 = vst.msk [vmem:[#allocation2] sm:$0xff] %vm56, %v4154
    $region101: #{seq2seq_forward.1} parent=1 // pred_fallthru
      _
    %v4158 = vld [vmem:[#allocation2] sm:$0xff]
    %v4159 = vld [vmem:[#allocation3] sm:$0xff]
    %v4160 = vld [vmem:[#allocation4] sm:$0xff]
    %v4161 = vld [vmem:[%s7] sm:$0xff]
    %v4162 = vld [vmem:[%s7 + $0x8] sm:$0xff]
    %v4163 = vld [vmem:[%s7 + $0x10] sm:$0xff]
    %v4164 = vld [vmem:[%s7 + $0x18] sm:$0xff]
    %v4165 = vld [vmem:[%s8] sm:$0xff]
    %v4166 = vld [vmem:[%s8 + $0x8] sm:$0xff]
    %v4167 = vld [vmem:[%s8 + $0x10] sm:$0xff]
    %v4168 = vld [vmem:[%s8 + $0x18] sm:$0xff]
    %v4169 = vld [vmem:[%s9] sm:$0x1]
    %v4171 = vsel %vm56, %v4159, 0
    %4173 = vmatprep.subr.mxu0 0.0
    %4174 = vmatpush1.msra.mxu0 0.0
    %4175 = vmatprep.subr.mxu0 0.0
    %4176 = vmatpush1.msra.mxu0 0.0
    %4177 = vmatprep.subr.mxu0 0.0
    %4178 = vmatpush1.msra.mxu0 0.0
    %4179 = vmatprep.subr.mxu0 0.0
    %4180 = vmatpush1.msra.mxu0 0.0
    %4181 = vmatprep.subr.mxu0 0.0
    %4182 = vmatpush1.msra.mxu0 0.0
    %4183 = vmatprep.subr.mxu0 0.0
    %4184 = vmatpush1.msra.mxu0 0.0
    %4185 = vmatprep.subr.mxu0 0.0
    %4186 = vmatpush1.msra.mxu0 0.0
    %4187 = vmatprep.subr.mxu0 0.0
    %4188 = vmatpush1.msra.mxu0 0.0
    %4189 = vmatprep.subr.mxu0 0.0
    %4190 = vmatpush1.msra.mxu0 0.0
    %4191 = vmatprep.subr.mxu0 0.0
    %4192 = vmatpush1.msra.mxu0 0.0
    %4193 = vmatprep.subr.mxu0 0.0
    %4194 = vmatpush1.msra.mxu0 0.0
    %4195 = vmatprep.subr.mxu0 0.0
    %4196 = vmatpush1.msra.mxu0 0.0
    %4197 = vmatprep.subr.mxu0 0.0
    %4198 = vmatpush1.msra.mxu0 %v4168
    %4199 = vmatprep.subr.mxu0 0.0
    %4200 = vmatpush1.msra.mxu0 %v4167
    %4201 = vmatprep.subr.mxu0 0.0
    %4202 = vmatpush1.msra.mxu0 %v4166
    %4203 = vmatprep.subr.mxu0 0.0
    %4204 = vmatpush1.msra.mxu0 %v4165
    %4205 = vmatprep.subr.mxu0 0.0
    %4206 = vmatpush2.msra.mxu0 0.0
    %4207 = vmatprep.subr.mxu0 0.0
    %4208 = vmatpush2.msra.mxu0 0.0
    %4209 = vmatprep.subr.mxu0 0.0
    %4210 = vmatpush2.msra.mxu0 0.0
    %4211 = vmatprep.subr.mxu0 0.0
    %4212 = vmatpush2.msra.mxu0 0.0
    %4213 = vmatprep.subr.mxu0 0.0
    %4214 = vmatpush2.msra.mxu0 0.0
    %4215 = vmatprep.subr.mxu0 0.0
    %4216 = vmatpush2.msra.mxu0 0.0
    %4217 = vmatprep.subr.mxu0 0.0
    %4218 = vmatpush2.msra.mxu0 0.0
    %4219 = vmatprep.subr.mxu0 0.0
    %4220 = vmatpush2.msra.mxu0 0.0
    %4221 = vmatprep.subr.mxu0 0.0
    %4222 = vmatpush2.msra.mxu0 0.0
    %4223 = vmatprep.subr.mxu0 0.0
    %4224 = vmatpush2.msra.mxu0 0.0
    %4225 = vmatprep.subr.mxu0 0.0
    %4226 = vmatpush2.msra.mxu0 0.0
    %4227 = vmatprep.subr.mxu0 0.0
    %4228 = vmatpush2.msra.mxu0 0.0
    %4229 = vmatprep.subr.mxu0 0.0
    %4230 = vmatpush2.msra.mxu0 0.0
    %4231 = vmatprep.subr.mxu0 0.0
    %4232 = vmatpush2.msra.mxu0 0.0
    %4233 = vmatprep.subr.mxu0 0.0
    %4234 = vmatpush2.msra.mxu0 0.0
    %4235 = vmatprep.subr.mxu0 0.0
    %4236 = vmatpush2.msra.mxu0 0.0
    %4237 = vmatprep.mubr.f32.mxu0 0.0
    %4238 = vmatmul.mubr.f32.gmra.mxu0 %v4171
    %v4239 = vpop.f32.mrf.mxu0
    %v4240 = vadd.f32 0.0, %v4239
    %v4241 = vpop.f32.mrf.mxu0
    %4242 = vdwg.mxu0
    %v4244 = vsel %vm56, %v4158, 0
    %4246 = vmatprep.subr.mxu0 0.0
    %4247 = vmatpush1.msra.mxu0 0.0
    %4248 = vmatprep.subr.mxu0 0.0
    %4249 = vmatpush1.msra.mxu0 0.0
    %4250 = vmatprep.subr.mxu0 0.0
    %4251 = vmatpush1.msra.mxu0 0.0
    %4252 = vmatprep.subr.mxu0 0.0
    %4253 = vmatpush1.msra.mxu0 0.0
    %4254 = vmatprep.subr.mxu0 0.0
    %4255 = vmatpush1.msra.mxu0 0.0
    %4256 = vmatprep.subr.mxu0 0.0
    %4257 = vmatpush1.msra.mxu0 0.0
    %4258 = vmatprep.subr.mxu0 0.0
    %4259 = vmatpush1.msra.mxu0 0.0
    %4260 = vmatprep.subr.mxu0 0.0
    %4261 = vmatpush1.msra.mxu0 0.0
    %4262 = vmatprep.subr.mxu0 0.0
    %4263 = vmatpush1.msra.mxu0 0.0
    %4264 = vmatprep.subr.mxu0 0.0
    %4265 = vmatpush1.msra.mxu0 0.0
    %4266 = vmatprep.subr.mxu0 0.0
    %4267 = vmatpush1.msra.mxu0 0.0
    %4268 = vmatprep.subr.mxu0 0.0
    %4269 = vmatpush1.msra.mxu0 0.0
    %4270 = vmatprep.subr.mxu0 0.0
    %4271 = vmatpush1.msra.mxu0 %v4164
    %4272 = vmatprep.subr.mxu0 0.0
    %4273 = vmatpush1.msra.mxu0 %v4163
    %4274 = vmatprep.subr.mxu0 0.0
    %4275 = vmatpush1.msra.mxu0 %v4162
    %4276 = vmatprep.subr.mxu0 0.0
    %4277 = vmatpush1.msra.mxu0 %v4161
    %4278 = vmatprep.subr.mxu0 0.0
    %4279 = vmatpush2.msra.mxu0 0.0
    %4280 = vmatprep.subr.mxu0 0.0
    %4281 = vmatpush2.msra.mxu0 0.0
    %4282 = vmatprep.subr.mxu0 0.0
    %4283 = vmatpush2.msra.mxu0 0.0
    %4284 = vmatprep.subr.mxu0 0.0
    %4285 = vmatpush2.msra.mxu0 0.0
    %4286 = vmatprep.subr.mxu0 0.0
    %4287 = vmatpush2.msra.mxu0 0.0
    %4288 = vmatprep.subr.mxu0 0.0
    %4289 = vmatpush2.msra.mxu0 0.0
    %4290 = vmatprep.subr.mxu0 0.0
    %4291 = vmatpush2.msra.mxu0 0.0
    %4292 = vmatprep.subr.mxu0 0.0
    %4293 = vmatpush2.msra.mxu0 0.0
    %4294 = vmatprep.subr.mxu0 0.0
    %4295 = vmatpush2.msra.mxu0 0.0
    %4296 = vmatprep.subr.mxu0 0.0
    %4297 = vmatpush2.msra.mxu0 0.0
    %4298 = vmatprep.subr.mxu0 0.0
    %4299 = vmatpush2.msra.mxu0 0.0
    %4300 = vmatprep.subr.mxu0 0.0
    %4301 = vmatpush2.msra.mxu0 0.0
    %4302 = vmatprep.subr.mxu0 0.0
    %4303 = vmatpush2.msra.mxu0 0.0
    %4304 = vmatprep.subr.mxu0 0.0
    %4305 = vmatpush2.msra.mxu0 0.0
    %4306 = vmatprep.subr.mxu0 0.0
    %4307 = vmatpush2.msra.mxu0 0.0
    %4308 = vmatprep.subr.mxu0 0.0
    %4309 = vmatpush2.msra.mxu0 0.0
    %4310 = vmatprep.mubr.f32.mxu0 0.0
    %4311 = vmatmul.mubr.f32.gmra.mxu0 %v4244
    %v4312 = vpop.f32.mrf.mxu0
    %v4313 = vadd.f32 %v4240, %v4312
    %v4314 = vpop.f32.mrf.mxu0
    %4315 = vdwg.mxu0
    %v4317 = vlaneseq
    %v4318 = vshrl.u32 %v4317, 7
    %v4319 = vsub.s32 0, %v4318
    %v4320 = vrot.slane %v4169, %v4319
    %v4322 = vadd.f32 %v4313, %v4320
    %v4323 = vxor.u32 %v4322, 2147483648
    %v4324 = vmul.f32 %v4323, 1.442695
    %v4325 = vpow.pop %v4324
    %v4326 = vadd.f32 %v4325, 1.0
    %v4327 = vrcp.pop %v4326
    %v4328 = vmul.f32 1.0, %v4327
    %v4329 = vtanh.pop %v4322
    %4331 = vrot.lane.b32.xlu0 %v4160, 32
    %v4332 = vpop.permute.xlu0 %4331
    %v4334 = vmul.f32 %v4328, %v4332
    %4336 = vrot.lane.b32.xlu0 %v4329, 32
    %v4337 = vpop.permute.xlu0 %4336
    %v4339 = vmul.f32 %v4328, %v4337
    %4341 = vrot.lane.b32.xlu0 %v4339, 32
    %v4342 = vpop.permute.xlu0 %4341
    %v4344 = vadd.f32 %v4334, %v4342
    %v4345 = vtanh.pop %v4344
    %4347 = vrot.lane.b32.xlu0 %v4345, 32
    %v4348 = vpop.permute.xlu0 %4347
    %v4350 = vmul.f32 %v4328, %v4348
    %4352 = vrot.lane.b32.xlu0 %v4350, 64
    %v4353 = vpop.permute.xlu0 %4352
    %4355 = vst.msk [vmem:[#allocation3] sm:$0xff] %vm56, %v4353
    %4357 = vrot.lane.b32.xlu0 %v4344, 96
    %v4358 = vpop.permute.xlu0 %4357
    %4360 = vst.msk [vmem:[#allocation4] sm:$0xff] %vm56, %v4358
    %v4361 = vld [vmem:[%s10] sm:$0xff]
    %v4362 = vld [vmem:[%s10 + $0x8] sm:$0xff]
    %v4363 = vld [vmem:[%s10 + $0x10] sm:$0xff]
    %v4364 = vld [vmem:[%s10 + $0x18] sm:$0xff]
    %v4365 = vld [vmem:[%s11] sm:$0x1]
    %v4367 = vlaneseq
    %v4368 = vshrl.u32 %v4367, 7
    %v4369 = vsub.s32 0, %v4368
    %v4370 = vrot.slane %v4365, %v4369
    %v4372 = vsel %vm56, %v4353, 0
    %4374 = vmatprep.subr.mxu0 0.0
    %4375 = vmatpush1.msra.mxu0 0.0
    %4376 = vmatprep.subr.mxu0 0.0
    %4377 = vmatpush1.msra.mxu0 0.0
    %4378 = vmatprep.subr.mxu0 0.0
    %4379 = vmatpush1.msra.mxu0 0.0
    %4380 = vmatprep.subr.mxu0 0.0
    %4381 = vmatpush1.msra.mxu0 0.0
    %4382 = vmatprep.subr.mxu0 0.0
    %4383 = vmatpush1.msra.mxu0 0.0
    %4384 = vmatprep.subr.mxu0 0.0
    %4385 = vmatpush1.msra.mxu0 0.0
    %4386 = vmatprep.subr.mxu0 0.0
    %4387 = vmatpush1.msra.mxu0 0.0
    %4388 = vmatprep.subr.mxu0 0.0
    %4389 = vmatpush1.msra.mxu0 0.0
    %4390 = vmatprep.subr.mxu0 0.0
    %4391 = vmatpush1.msra.mxu0 0.0
    %4392 = vmatprep.subr.mxu0 0.0
    %4393 = vmatpush1.msra.mxu0 0.0
    %4394 = vmatprep.subr.mxu0 0.0
    %4395 = vmatpush1.msra.mxu0 0.0
    %4396 = vmatprep.subr.mxu0 0.0
    %4397 = vmatpush1.msra.mxu0 0.0
    %4398 = vmatprep.subr.mxu0 0.0
    %4399 = vmatpush1.msra.mxu0 %v4364
    %4400 = vmatprep.subr.mxu0 0.0
    %4401 = vmatpush1.msra.mxu0 %v4363
    %4402 = vmatprep.subr.mxu0 0.0
    %4403 = vmatpush1.msra.mxu0 %v4362
    %4404 = vmatprep.subr.mxu0 0.0
    %4405 = vmatpush1.msra.mxu0 %v4361
    %4406 = vmatprep.subr.mxu0 0.0
    %4407 = vmatpush2.msra.mxu0 0.0
    %4408 = vmatprep.subr.mxu0 0.0
    %4409 = vmatpush2.msra.mxu0 0.0
    %4410 = vmatprep.subr.mxu0 0.0
    %4411 = vmatpush2.msra.mxu0 0.0
    %4412 = vmatprep.subr.mxu0 0.0
    %4413 = vmatpush2.msra.mxu0 0.0
    %4414 = vmatprep.subr.mxu0 0.0
    %4415 = vmatpush2.msra.mxu0 0.0
    %4416 = vmatprep.subr.mxu0 0.0
    %4417 = vmatpush2.msra.mxu0 0.0
    %4418 = vmatprep.subr.mxu0 0.0
    %4419 = vmatpush2.msra.mxu0 0.0
    %4420 = vmatprep.subr.mxu0 0.0
    %4421 = vmatpush2.msra.mxu0 0.0
    %4422 = vmatprep.subr.mxu0 0.0
    %4423 = vmatpush2.msra.mxu0 0.0
    %4424 = vmatprep.subr.mxu0 0.0
    %4425 = vmatpush2.msra.mxu0 0.0
    %4426 = vmatprep.subr.mxu0 0.0
    %4427 = vmatpush2.msra.mxu0 0.0
    %4428 = vmatprep.subr.mxu0 0.0
    %4429 = vmatpush2.msra.mxu0 0.0
    %4430 = vmatprep.subr.mxu0 0.0
    %4431 = vmatpush2.msra.mxu0 0.0
    %4432 = vmatprep.subr.mxu0 0.0
    %4433 = vmatpush2.msra.mxu0 0.0
    %4434 = vmatprep.subr.mxu0 0.0
    %4435 = vmatpush2.msra.mxu0 0.0
    %4436 = vmatprep.subr.mxu0 0.0
    %4437 = vmatpush2.msra.mxu0 0.0
    %4438 = vmatprep.mubr.f32.mxu0 0.0
    %4439 = vmatmul.mubr.f32.gmra.mxu0 %v4372
    %v4440 = vpop.f32.mrf.mxu0
    %v4441 = vadd.f32 %v4370, %v4440
    %v4442 = vpop.f32.mrf.mxu0
    %4443 = vdwg.mxu0
    %s4444 = scalar_lea.vmem [#allocation8], 56
    %4445 = vst [vmem:[%s4444] sm:$0xff] %v4441
    %s4446 = sld [smem:[#allocation5 + $0x6]]
    %p4447 = scmp.eq.s32.totalorder %s4446, 1
    // Predicated region
    $region102: #{seq2seq_forward.1} parent=1 // pred_check
      %p4448 = pneg %p4447
    $region103: #{seq2seq_forward.1} parent=1 // pred_check_branch
      %4450 = sbr.rel (%p4448) target = $region105
    $region104: #{seq2seq_forward.1} parent=1 // pred_region
      %s4451 = scalar_lea.vmem %s2, 56
      %v4452 = vld [vmem:[%s4451] sm:$0xff]
      %4453 = vst.msk [vmem:[#allocation2] sm:$0xff] %vm56, %v4452
    $region105: #{seq2seq_forward.1} parent=1 // pred_fallthru
      _
    %s4454 = sld [smem:[#allocation5 + $0x6]]
    %p4455 = scmp.eq.s32.totalorder %s4454, 0
    // Predicated region
    $region106: #{seq2seq_forward.1} parent=1 // pred_check
      %p4456 = pneg %p4455
    $region107: #{seq2seq_forward.1} parent=1 // pred_check_branch
      %4458 = sbr.rel (%p4456) target = $region109
    $region108: #{seq2seq_forward.1} parent=1 // pred_region
      %v4459 = vlaneseq
      %v4460 = vand.u32 %v4459, 127
      %4461 = vmax.xlane.f32.xlu0 %v4441
      %v4462 = vpop.xlane.xlu0 %4461
      %vm4463 = vcmp.eq.f32.partialorder %v4441, %v4462
      %v4464 = vsel %vm4463, %v4460, 128
      %v4465 = vand.u32 %v4464, 65535
      %v4466 = vshra.s32 %v4464, 16
      %v4467 = vcvt.s32.f32 %v4465
      %v4468 = vcvt.s32.f32 %v4466
      %4469 = vmin.xlane.f32.xlu0 %v4468
      %v4470 = vpop.xlane.xlu0 %4469
      %vm4471 = vcmp.eq.f32.partialorder %v4468, %v4470
      %v4472 = vsel %vm4471, %v4467, inf
      %4473 = vmin.xlane.f32.xlu0 %v4472
      %v4474 = vpop.xlane.xlu0 %4473
      %v4475 = vcvt.f32.s32 %v4474
      %v4476 = vcvt.f32.s32 %v4470
      %v4477 = vshll.u32 %v4476, 16
      %v4478 = vadd.s32 %v4477, %v4475
      %vm4479 = vcmp.eq.s32.totalorder %v4460, %v4478
      %v4480 = vsel %vm4479, 1, 0
      %v4481 = vcvt.s32.f32 %v4480
      %v4482 = vld [vmem:[%s3] sm:$0xff]
      %v4483 = vld [vmem:[%s3 + $0x8] sm:$0xff]
      %v4484 = vld [vmem:[%s3 + $0x10] sm:$0xff]
      %v4485 = vld [vmem:[%s3 + $0x18] sm:$0xff]
      %v4486 = vld [vmem:[%s3 + $0x20] sm:$0xff]
      %v4487 = vld [vmem:[%s3 + $0x28] sm:$0xff]
      %v4488 = vld [vmem:[%s3 + $0x30] sm:$0xff]
      %v4489 = vld [vmem:[%s3 + $0x38] sm:$0xff]
      %v4490 = vld [vmem:[%s3 + $0x40] sm:$0xff]
      %v4491 = vld [vmem:[%s3 + $0x48] sm:$0xff]
      %v4492 = vld [vmem:[%s3 + $0x50] sm:$0xff]
      %v4493 = vld [vmem:[%s3 + $0x58] sm:$0xff]
      %v4494 = vld [vmem:[%s3 + $0x60] sm:$0xff]
      %v4495 = vld [vmem:[%s3 + $0x68] sm:$0xff]
      %v4496 = vld [vmem:[%s3 + $0x70] sm:$0xff]
      %v4497 = vld [vmem:[%s3 + $0x78] sm:$0xff]
      %4498 = vmatprep.subr.mxu0 0.0
      %4499 = vmatpush1.msra.mxu0 %v4497
      %4500 = vmatprep.subr.mxu0 0.0
      %4501 = vmatpush1.msra.mxu0 %v4496
      %4502 = vmatprep.subr.mxu0 0.0
      %4503 = vmatpush1.msra.mxu0 %v4495
      %4504 = vmatprep.subr.mxu0 0.0
      %4505 = vmatpush1.msra.mxu0 %v4494
      %4506 = vmatprep.subr.mxu0 0.0
      %4507 = vmatpush1.msra.mxu0 %v4493
      %4508 = vmatprep.subr.mxu0 0.0
      %4509 = vmatpush1.msra.mxu0 %v4492
      %4510 = vmatprep.subr.mxu0 0.0
      %4511 = vmatpush1.msra.mxu0 %v4491
      %4512 = vmatprep.subr.mxu0 0.0
      %4513 = vmatpush1.msra.mxu0 %v4490
      %4514 = vmatprep.subr.mxu0 0.0
      %4515 = vmatpush1.msra.mxu0 %v4489
      %4516 = vmatprep.subr.mxu0 0.0
      %4517 = vmatpush1.msra.mxu0 %v4488
      %4518 = vmatprep.subr.mxu0 0.0
      %4519 = vmatpush1.msra.mxu0 %v4487
      %4520 = vmatprep.subr.mxu0 0.0
      %4521 = vmatpush1.msra.mxu0 %v4486
      %4522 = vmatprep.subr.mxu0 0.0
      %4523 = vmatpush1.msra.mxu0 %v4485
      %4524 = vmatprep.subr.mxu0 0.0
      %4525 = vmatpush1.msra.mxu0 %v4484
      %4526 = vmatprep.subr.mxu0 0.0
      %4527 = vmatpush1.msra.mxu0 %v4483
      %4528 = vmatprep.subr.mxu0 0.0
      %4529 = vmatpush1.msra.mxu0 %v4482
      %4530 = vmatprep.subr.mxu0 0.0
      %4531 = vmatpush2.msra.mxu0 0.0
      %4532 = vmatprep.subr.mxu0 0.0
      %4533 = vmatpush2.msra.mxu0 0.0
      %4534 = vmatprep.subr.mxu0 0.0
      %4535 = vmatpush2.msra.mxu0 0.0
      %4536 = vmatprep.subr.mxu0 0.0
      %4537 = vmatpush2.msra.mxu0 0.0
      %4538 = vmatprep.subr.mxu0 0.0
      %4539 = vmatpush2.msra.mxu0 0.0
      %4540 = vmatprep.subr.mxu0 0.0
      %4541 = vmatpush2.msra.mxu0 0.0
      %4542 = vmatprep.subr.mxu0 0.0
      %4543 = vmatpush2.msra.mxu0 0.0
      %4544 = vmatprep.subr.mxu0 0.0
      %4545 = vmatpush2.msra.mxu0 0.0
      %4546 = vmatprep.subr.mxu0 0.0
      %4547 = vmatpush2.msra.mxu0 0.0
      %4548 = vmatprep.subr.mxu0 0.0
      %4549 = vmatpush2.msra.mxu0 0.0
      %4550 = vmatprep.subr.mxu0 0.0
      %4551 = vmatpush2.msra.mxu0 0.0
      %4552 = vmatprep.subr.mxu0 0.0
      %4553 = vmatpush2.msra.mxu0 0.0
      %4554 = vmatprep.subr.mxu0 0.0
      %4555 = vmatpush2.msra.mxu0 0.0
      %4556 = vmatprep.subr.mxu0 0.0
      %4557 = vmatpush2.msra.mxu0 0.0
      %4558 = vmatprep.subr.mxu0 0.0
      %4559 = vmatpush2.msra.mxu0 0.0
      %4560 = vmatprep.subr.mxu0 0.0
      %4561 = vmatpush2.msra.mxu0 0.0
      %4562 = vmatprep.mubr.f32.mxu0 0.0
      %4563 = vmatmul.mubr.f32.gmra.mxu0 %v4481
      %v4564 = vpop.f32.mrf.mxu0
      %v4565 = vadd.f32 0.0, %v4564
      %v4566 = vpop.f32.mrf.mxu0
      %4567 = vdwg.mxu0
      %4568 = vst.msk [vmem:[#allocation2] sm:$0xff] %vm56, %v4565
    $region109: #{seq2seq_forward.1} parent=1 // pred_fallthru
      _
    // Predicated region
    $region110: #{seq2seq_forward.1} parent=1 // pred_check
      _
    $region111: #{seq2seq_forward.1} parent=1 // pred_check_branch
      %4570 = sbr.rel (0) target = $region113
    $region112: #{seq2seq_forward.1} parent=1 // pred_region
      %s4572 = ssub.s32 1024, 1024
      %4573 = vsyncadd [#allocation6], %s4572
      %s4574 = sshll.u32 [#allocation8], 4
      %s4575 = int_to_ptr.vmem [resolvable:$true] %s4574
      %4580 = dma.vmem_to_hbm [thread:$0]  %s4575, 1024, %s12, [#allocation6], 128, 128, 8
    $region113: #{seq2seq_forward.1} parent=1 // pred_fallthru
      _
    // Predicated region
    $region114: #{seq2seq_forward.1} parent=1 // pred_check
      _
    $region115: #{seq2seq_forward.1} parent=1 // pred_check_branch
      %4582 = sbr.rel (0) target = $region117
    $region116: #{seq2seq_forward.1} parent=1 // pred_region
      %4583 = dma.done [#allocation6], 1024
    $region117: #{seq2seq_forward.1} parent=1 // pred_fallthru
      _
    %4584 = vsyncpa [#allocation6], 1
    %4585 = vsyncpa [#allocation7], 1

</llo_original>
